<compile_context>
chip_gen: v6e
topology: v6e:2x2x1
jax: 0.10.0
libtpu: 0.0.40
codegen_flags: <defaults>
</compile_context>

<pallas_src>
import functools

import jax
import jax.numpy as jnp
from jax.experimental import pallas as pl
from jax.experimental.pallas import tpu as pltpu


_VMEM_LIMIT = 32 * 1024 * 1024   # conservative budget: fits v7x (64 MiB phys) too


# ---------------------------------------------------------------------------
# Kernel A: fused first-layer conv3x3 (embed + temp), lazy in-kernel im2col.
# ---------------------------------------------------------------------------
def _make_conv1_kernel(H, W, Cin, Cout):
    def kernel(xpad_ref, w_ref, out_ref):
        xp = xpad_ref[0]                                      # (H+2, W+2, Cin) bf16
        taps = [xp[di:di + H, dj:dj + W, :]
                for di in range(3) for dj in range(3)]
        a = jnp.concatenate(taps, axis=-1)                    # (H, W, 9*Cin)
        a = a.reshape(H * W, 9 * Cin)                         # W % 8 == 0 -> cheap cast
        acc = jnp.dot(a, w_ref[...], preferred_element_type=jnp.float32)
        out_ref[0] = acc                                      # (H*W, Cout) f32
    return kernel


def conv1_fused(x_pad_nhwc, w_flat, H, W):
    # TODO(synk): add spatial (row-tile + halo DMA) grid axis for very large images.
    N, _, _, Cin = x_pad_nhwc.shape
    Cout = w_flat.shape[-1]
    return pl.pallas_call(
        _make_conv1_kernel(H, W, Cin, Cout),
        out_shape=jax.ShapeDtypeStruct((N, H * W, Cout), jnp.float32),
        grid=(N,),
        in_specs=[
            pl.BlockSpec((1, H + 2, W + 2, Cin), lambda b: (b, 0, 0, 0)),
            pl.BlockSpec((9 * Cin, Cout), lambda b: (0, 0)),
        ],
        out_specs=pl.BlockSpec((1, H * W, Cout), lambda b: (b, 0, 0)),
        compiler_params=pltpu.CompilerParams(
            dimension_semantics=("parallel",),
            vmem_limit_bytes=_VMEM_LIMIT),
    )(x_pad_nhwc, w_flat)


# ---------------------------------------------------------------------------
# Kernel B: fused BN-apply + ReLU + second conv3x3 (embed De ch + temp 1 ch).
# ---------------------------------------------------------------------------
def _make_conv2_kernel(H, W, C2, Cout):
    def kernel(hpad_ref, mask_ref, scale_ref, shift_ref, w_ref, bias_ref, out_ref):
        hp = hpad_ref[0]                                      # (H+2, W+2, C2) f32
        # BN affine + ReLU fused; border mask re-zeroes the spatial padding.
        hp = jnp.maximum(hp * scale_ref[...] + shift_ref[...], 0.0) * mask_ref[...]
        hp = hp.astype(jnp.bfloat16)
        taps = [hp[di:di + H, dj:dj + W, :]
                for di in range(3) for dj in range(3)]
        a = jnp.concatenate(taps, axis=-1).reshape(H * W, 9 * C2)
        acc = jnp.dot(a, w_ref[...], preferred_element_type=jnp.float32)
        out_ref[0] = acc + bias_ref[...]                      # (H*W, Cout) f32
    return kernel


def conv2_fused(h_pad, border_mask, scale, shift, w_flat, bias, H, W):
    N, _, _, C2 = h_pad.shape
    Cout = w_flat.shape[-1]
    return pl.pallas_call(
        _make_conv2_kernel(H, W, C2, Cout),
        out_shape=jax.ShapeDtypeStruct((N, H * W, Cout), jnp.float32),
        grid=(N,),
        in_specs=[
            pl.BlockSpec((1, H + 2, W + 2, C2), lambda b: (b, 0, 0, 0)),
            pl.BlockSpec((H + 2, W + 2, 1), lambda b: (0, 0, 0)),
            pl.BlockSpec((1, C2), lambda b: (0, 0)),
            pl.BlockSpec((1, C2), lambda b: (0, 0)),
            pl.BlockSpec((9 * C2, Cout), lambda b: (0, 0)),
            pl.BlockSpec((1, Cout), lambda b: (0, 0)),
        ],
        out_specs=pl.BlockSpec((1, H * W, Cout), lambda b: (b, 0, 0)),
        compiler_params=pltpu.CompilerParams(
            dimension_semantics=("parallel",),
            vmem_limit_bytes=_VMEM_LIMIT),
    )(h_pad, border_mask, scale, shift, w_flat, bias)


# ---------------------------------------------------------------------------
# Kernel C: N3 aggregation (distances + continuous-kNN relaxation + aggregation)
# ---------------------------------------------------------------------------
def _make_n3_kernel(k_neighbors, Lq):
    def kernel(xe_ref, yeT_ref, yp_ref, lt_ref, out_ref):
        q = pl.program_id(1)
        xe = xe_ref[0]                                        # (Lq, Dpe) bf16
        yeT = yeT_ref[0]                                      # (Dpe, L) bf16
        yp = yp_ref[0]                                        # (L, Dy)  bf16
        lt = lt_ref[0]                                        # (Lq, 1)  f32
        L = yeT.shape[1]

        # pairwise squared distances (query-norm term is row-constant -> cancels
        # inside the row softmax, so it is dropped).  Key norms via XLU reduce.
        cross = jnp.dot(xe, yeT, preferred_element_type=jnp.float32)    # (Lq, L)
        yeT_f = yeT.astype(jnp.float32)
        yy_row = jnp.sum(yeT_f * yeT_f, axis=0, keepdims=True)          # (1, L)
        dist = yy_row - 2.0 * cross

        inv_temp = jnp.exp(-lt)                                          # (Lq, 1)
        logits = -dist * inv_temp

        # exclude_self=True: a patch never matches itself (global query index).
        row_g = q * Lq + jax.lax.broadcasted_iota(jnp.int32, (Lq, L), 0)
        col = jax.lax.broadcasted_iota(jnp.int32, (Lq, L), 1)
        logits = jnp.where(row_g == col, jnp.float32(-1e30), logits)

        # continuous deterministic relaxation of k-nearest-neighbour selection.
        # keep the unnormalised exp weights resident; update multiplicatively
        # (single exp pass instead of k max/exp/log passes).
        m = jnp.max(logits, axis=1, keepdims=True)
        e = jnp.exp(logits - m)                                          # (Lq, L)
        outs = []
        for _ in range(k_neighbors):
            s = jnp.sum(e, axis=1, keepdims=True)
            w = e * pl.reciprocal(s, approx=True)                        # row softmax
            outs.append(jnp.dot(w.astype(yp.dtype), yp,
                                preferred_element_type=jnp.float32))     # (Lq, Dy)
            e = e * (1.0 - w + 1e-6)
        # single lane-dense writeback (Lq, k*Dy)
        out_ref[0] = jnp.concatenate(outs, axis=1)
    return kernel


def _pick_query_tile(L, max_tile=512):
    if L <= max_tile:
        return L
    for t in range(max_tile, 7, -8):
        if L % t == 0:
            return t
    return L


# ---------------------------------------------------------------------------
# Patch extraction / fold (XLA glue — strided gather/scatter, no clean Pallas form)
# ---------------------------------------------------------------------------
def im2patch_nhwc(img, p):
    # img (N,H,W,C) -> (N, L, C*p*p); feature order (c, pi, pj), patch order (gi,gj)
    N, H, W, C = img.shape
    gh, gw = H // p, W // p
    t = img.reshape(N, gh, p, gw, p, C).transpose(0, 1, 3, 5, 2, 4)
    return t.reshape(N, gh * gw, C * p * p)


def im2patch_nhwc_T(img, p):
    # img (N,H,W,C) -> (N, C*p*p, L); same feature/patch ordering, transposed
    N, H, W, C = img.shape
    gh, gw = H // p, W // p
    t = img.reshape(N, gh, p, gw, p, C).transpose(0, 5, 2, 4, 1, 3)
    return t.reshape(N, C * p * p, gh * gw)


def patch2im_nchw(pat, C, p, gh, gw):
    # pat (M, L, C*p*p) -> (M, C, H, W); inverse of im2patch_nhwc
    M = pat.shape[0]
    t = pat.reshape(M, gh, gw, C, p, p).transpose(0, 3, 1, 4, 2, 5)
    return t.reshape(M, C, gh * p, gw * p)


# ---------------------------------------------------------------------------
# N3 aggregation wrapper
# ---------------------------------------------------------------------------
def n3_aggregate(x_nchw, x_nhwc, xe_img, lt_img, k, patchsize):
    # TODO(synk): nl_match_window spatial restriction and overlapping-stride
    # (overlap-add) fold are not implemented; full-image matching with
    # exclude_self and stride == patchsize are used instead.
    N, C, H, W = x_nchw.shape
    p = patchsize
    gh, gw = H // p, W // p
    L = gh * gw
    De = xe_img.shape[-1]
    Dpe = De * p * p
    Dy = C * p * p

    xe_p = im2patch_nhwc(xe_img, p).astype(jnp.bfloat16)       # (N, L, Dpe)
    xe_pT = im2patch_nhwc_T(xe_img, p).astype(jnp.bfloat16)    # (N, Dpe, L)
    y_p = im2patch_nhwc(x_nhwc, p).astype(jnp.bfloat16)        # (N, L, Dy)
    lt_p = jnp.mean(im2patch_nhwc(lt_img, p), axis=-1, keepdims=True)   # (N, L, 1)

    Lq = _pick_query_tile(L)
    assert L % Lq == 0 and (Lq == L or Lq % 8 == 0)

    agg = pl.pallas_call(
        _make_n3_kernel(k, Lq),
        out_shape=jax.ShapeDtypeStruct((N, L, k * Dy), jnp.float32),
        grid=(N, L // Lq),
        in_specs=[
            pl.BlockSpec((1, Lq, Dpe), lambda b, q: (b, q, 0)),
            pl.BlockSpec((1, Dpe, L), lambda b, q: (b, 0, 0)),
            pl.BlockSpec((1, L, Dy), lambda b, q: (b, 0, 0)),
            pl.BlockSpec((1, Lq, 1), lambda b, q: (b, q, 0)),
        ],
        out_specs=pl.BlockSpec((1, Lq, k * Dy), lambda b, q: (b, q, 0)),
        compiler_params=pltpu.CompilerParams(
            dimension_semantics=("parallel", "parallel"),
            vmem_limit_bytes=_VMEM_LIMIT),
    )(xe_p, xe_pT, y_p, lt_p)                                  # (N, L, k*Dy)

    agg = agg.reshape(N, L, k, Dy).transpose(0, 2, 1, 3).reshape(N * k, L, Dy)
    neigh = patch2im_nchw(agg, C, p, gh, gw).reshape(N, k * C, H, W)
    return jnp.concatenate([x_nchw, neigh], axis=1)            # (N, (k+1)*C, H, W)


# ---------------------------------------------------------------------------
# Full N3Block forward
# ---------------------------------------------------------------------------
def n3block_forward(x, params, k, patchsize, stride):
    assert stride == patchsize
    N, C, H, W = x.shape
    assert H % patchsize == 0 and W % patchsize == 0
    assert W % 8 == 0            # in-kernel im2col shape-cast requirement

    F = params["e_w1"].shape[0]
    De = params["e_w2"].shape[0]
    C2 = 2 * F

    # ---- layer 1: fused embed/temp conv3x3 (bias-free; BN follows) ----
    x_nhwc = jnp.transpose(x, (0, 2, 3, 1))
    x_pad = jnp.pad(x_nhwc, ((0, 0), (1, 1), (1, 1), (0, 0))).astype(jnp.bfloat16)
    w1 = jnp.concatenate([params["e_w1"], params["t_w1"]], axis=0)       # (2F,C,3,3)
    w1f = jnp.transpose(w1, (2, 3, 1, 0)).reshape(9 * C, C2).astype(jnp.bfloat16)
    h_raw = conv1_fused(x_pad, w1f, H, W)                                # (N,H*W,2F)

    # ---- BatchNorm (training mode: batch statistics) -> affine scale/shift ----
    gamma = jnp.concatenate([params["e_g1"], params["t_g1"]])
    beta = jnp.concatenate([params["e_b1"], params["t_b1"]])
    mean = jnp.mean(h_raw, axis=(0, 1))
    var = jnp.var(h_raw, axis=(0, 1))
    scale = gamma / jnp.sqrt(var + 1e-5)
    shift = beta - mean * scale

    # ---- layer 2: fused BN-apply + ReLU + conv3x3 (embed De ch + temp 1 ch) ----
    h_pad = jnp.pad(h_raw.reshape(N, H, W, C2), ((0, 0), (1, 1), (1, 1), (0, 0)))
    border = jnp.pad(jnp.ones((H, W, 1), jnp.float32), ((1, 1), (1, 1), (0, 0)))
    we = jnp.transpose(params["e_w2"], (2, 3, 1, 0))                     # (3,3,F,De)
    wt = jnp.transpose(params["t_w2"], (2, 3, 1, 0))                     # (3,3,F,1)
    w2 = jnp.concatenate([
        jnp.concatenate([we, jnp.zeros((3, 3, F, 1), we.dtype)], axis=-1),
        jnp.concatenate([jnp.zeros((3, 3, F, De), wt.dtype), wt], axis=-1)], axis=2)
    w2f = w2.reshape(9 * C2, De + 1).astype(jnp.bfloat16)
    bias2 = jnp.concatenate([params["e_b2"], params["t_b2"]]).reshape(1, De + 1)
    slab = conv2_fused(h_pad, border,
                       scale.reshape(1, C2).astype(jnp.float32),
                       shift.reshape(1, C2).astype(jnp.float32),
                       w2f, bias2.astype(jnp.float32), H, W)             # (N,H*W,De+1)

    xe_img = slab[..., :De].reshape(N, H, W, De)      # x_embedded (== y_embedded)
    lt_img = slab[..., De:].reshape(N, H, W, 1)       # log temperature

    return n3_aggregate(x, x_nhwc, xe_img, lt_img, k, patchsize)


# ---------------------------------------------------------------------------
# Parameter init (matches the module's conv->BN->ReLU->conv structure)
# ---------------------------------------------------------------------------
def init_params(key, c_in, feats, embed_out):
    ks = jax.random.split(key, 8)
    b_min = 0.025
    g1 = jnp.maximum(jnp.abs(jax.random.normal(ks[4], (feats,)) *
                             jnp.sqrt(2.0 / (9.0 * feats))), b_min)
    g2 = jnp.maximum(jnp.abs(jax.random.normal(ks[5], (feats,)) *
                             jnp.sqrt(2.0 / (9.0 * feats))), b_min)
    return {
        "e_w1": 0.1 * jax.random.normal(ks[0], (feats, c_in, 3, 3), jnp.float32),
        "e_g1": g1.astype(jnp.float32),
        "e_b1": jnp.zeros((feats,), jnp.float32),
        "e_w2": 0.1 * jax.random.normal(ks[1], (embed_out, feats, 3, 3), jnp.float32),
        "e_b2": jnp.zeros((embed_out,), jnp.float32),
        "t_w1": 0.1 * jax.random.normal(ks[2], (feats, c_in, 3, 3), jnp.float32),
        "t_g1": g2.astype(jnp.float32),
        "t_b1": jnp.zeros((feats,), jnp.float32),
        "t_w2": 0.1 * jax.random.normal(ks[3], (1, feats, 3, 3), jnp.float32),
        "t_b2": jnp.zeros((1,), jnp.float32),
    }


if __name__ == "__main__":
    N, C, H, W = 2, 4, 16, 16
    k = 4
    patchsize = 4
    stride = 4
    feats = 8
    embed_out = 8

    key = jax.random.PRNGKey(0)
    kx, kp = jax.random.split(key)
    x = jax.random.normal(kx, (N, C, H, W), jnp.float32)
    params = init_params(kp, C, feats, embed_out)

    fwd = jax.jit(functools.partial(n3block_forward, k=k,
                                    patchsize=patchsize, stride=stride))
    y = fwd(x, params)
    jax.block_until_ready(y)

    expected = (N, (k + 1) * C, H, W)
    assert y.shape == expected, (y.shape, expected)
    assert bool(jnp.all(jnp.isfinite(y)))
    print("KERNEL_OK")
</pallas_src>

<mosaic_0001>
module attributes {stable_mosaic.version = 11 : i64} {
  func.func @kernel(%arg0: i32, %arg1: memref<1x18x18x4xbf16, #tpu.memory_space<vmem>>, %arg2: memref<36x16xbf16, #tpu.memory_space<vmem>>, %arg3: memref<1x256x16xf32, #tpu.memory_space<vmem>>) attributes {dimension_semantics = [#tpu.dimension_semantics<parallel>], iteration_bounds = array<i64: 2>, scalar_prefetch = 0 : i64, scratch_operands = 0 : i64, tpu.core_type = #tpu.core_type<tc>, window_params = [{transform_indices = @transform_0, window_bounds = array<i64: 1, 18, 18, 4>}, {pipeline_mode = #tpu.pipeline_mode<synchronous>, transform_indices = @transform_1, window_bounds = array<i64: 36, 16>}, {transform_indices = @transform_2, window_bounds = array<i64: 1, 256, 16>}]} {
    %c0 = arith.constant 0 : index
    %c0_0 = arith.constant 0 : index
    %c0_1 = arith.constant 0 : index
    %c0_2 = arith.constant 0 : index
    %0 = vector.load %arg1[%c0, %c0_0, %c0_1, %c0_2] : memref<1x18x18x4xbf16, #tpu.memory_space<vmem>>, vector<1x18x18x4xbf16>
    %1 = vector.shape_cast %0 : vector<1x18x18x4xbf16> to vector<18x18x4xbf16>
    %2 = vector.extract_strided_slice %1 {offsets = [0, 0, 0], sizes = [16, 16, 4], strides = [1, 1, 1]} : vector<18x18x4xbf16> to vector<16x16x4xbf16>
    %3 = vector.extract_strided_slice %1 {offsets = [0, 1, 0], sizes = [16, 16, 4], strides = [1, 1, 1]} : vector<18x18x4xbf16> to vector<16x16x4xbf16>
    %4 = vector.extract_strided_slice %1 {offsets = [0, 2, 0], sizes = [16, 16, 4], strides = [1, 1, 1]} : vector<18x18x4xbf16> to vector<16x16x4xbf16>
    %5 = vector.extract_strided_slice %1 {offsets = [1, 0, 0], sizes = [16, 16, 4], strides = [1, 1, 1]} : vector<18x18x4xbf16> to vector<16x16x4xbf16>
    %6 = vector.extract_strided_slice %1 {offsets = [1, 1, 0], sizes = [16, 16, 4], strides = [1, 1, 1]} : vector<18x18x4xbf16> to vector<16x16x4xbf16>
    %7 = vector.extract_strided_slice %1 {offsets = [1, 2, 0], sizes = [16, 16, 4], strides = [1, 1, 1]} : vector<18x18x4xbf16> to vector<16x16x4xbf16>
    %8 = vector.extract_strided_slice %1 {offsets = [2, 0, 0], sizes = [16, 16, 4], strides = [1, 1, 1]} : vector<18x18x4xbf16> to vector<16x16x4xbf16>
    %9 = vector.extract_strided_slice %1 {offsets = [2, 1, 0], sizes = [16, 16, 4], strides = [1, 1, 1]} : vector<18x18x4xbf16> to vector<16x16x4xbf16>
    %10 = vector.extract_strided_slice %1 {offsets = [2, 2, 0], sizes = [16, 16, 4], strides = [1, 1, 1]} : vector<18x18x4xbf16> to vector<16x16x4xbf16>
    %11 = tpu.concatenate %2, %3, %4, %5, %6, %7, %8, %9, %10 in 2 : vector<16x16x4xbf16>, vector<16x16x4xbf16>, vector<16x16x4xbf16>, vector<16x16x4xbf16>, vector<16x16x4xbf16>, vector<16x16x4xbf16>, vector<16x16x4xbf16>, vector<16x16x4xbf16>, vector<16x16x4xbf16> -> vector<16x16x36xbf16>
    %12 = vector.shape_cast %11 : vector<16x16x36xbf16> to vector<256x36xbf16>
    %c0_3 = arith.constant 0 : index
    %c0_4 = arith.constant 0 : index
    %13 = vector.load %arg2[%c0_3, %c0_4] : memref<36x16xbf16, #tpu.memory_space<vmem>>, vector<36x16xbf16>
    %cst = arith.constant dense<0.000000e+00> : vector<256x16xf32>
    %14 = tpu.matmul %12, %13, %cst {dimension_numbers = #tpu.dot_dimension_numbers<[1], [0], [0], [1], [0, 0, 1, 1], [], []>} : vector<256x36xbf16>, vector<36x16xbf16>, vector<256x16xf32> -> vector<256x16xf32>
    %c0_5 = arith.constant 0 : index
    %c0_6 = arith.constant 0 : index
    %c0_7 = arith.constant 0 : index
    %15 = vector.load %arg3[%c0_5, %c0_6, %c0_7] : memref<1x256x16xf32, #tpu.memory_space<vmem>>, vector<1x256x16xf32>
    %16 = vector.shape_cast %15 : vector<1x256x16xf32> to vector<256x16xf32>
    %17 = vector.shape_cast %14 : vector<256x16xf32> to vector<1x256x16xf32>
    tpu.vector_store %arg3[%c0_5, %c0_6, %c0_7], %17 {strides = array<i32>} : memref<1x256x16xf32, #tpu.memory_space<vmem>>, vector<1x256x16xf32>,
    return
  }
  func.func @transform_0(%arg0: i32) -> (i32, i32, i32, i32) {
    %c0_i32 = arith.constant 0 : i32
    %c0_i32_0 = arith.constant 0 : i32
    %c0_i32_1 = arith.constant 0 : i32
    %c0_i32_2 = arith.constant 0 : i32
    return %arg0, %c0_i32, %c0_i32_0, %c0_i32_1 : i32, i32, i32, i32
  }
  func.func @transform_1(%arg0: i32) -> (i32, i32) {
    %c0_i32 = arith.constant 0 : i32
    %c0_i32_0 = arith.constant 0 : i32
    %c0_i32_1 = arith.constant 0 : i32
    return %c0_i32, %c0_i32_0 : i32, i32
  }
  func.func @transform_2(%arg0: i32) -> (i32, i32, i32) {
    %c0_i32 = arith.constant 0 : i32
    %c0_i32_0 = arith.constant 0 : i32
    %c0_i32_1 = arith.constant 0 : i32
    return %arg0, %c0_i32, %c0_i32_0 : i32, i32, i32
  }
}

module attributes {stable_mosaic.version = 11 : i64} {
  func.func @kernel(%arg0: i32, %arg1: memref<1x18x18x16xf32, #tpu.memory_space<vmem>>, %arg2: memref<18x18x1xf32, #tpu.memory_space<vmem>>, %arg3: memref<1x16xf32, #tpu.memory_space<vmem>>, %arg4: memref<1x16xf32, #tpu.memory_space<vmem>>, %arg5: memref<144x9xbf16, #tpu.memory_space<vmem>>, %arg6: memref<1x9xf32, #tpu.memory_space<vmem>>, %arg7: memref<1x256x9xf32, #tpu.memory_space<vmem>>) attributes {dimension_semantics = [#tpu.dimension_semantics<parallel>], iteration_bounds = array<i64: 2>, scalar_prefetch = 0 : i64, scratch_operands = 0 : i64, tpu.core_type = #tpu.core_type<tc>, window_params = [{transform_indices = @transform_0, window_bounds = array<i64: 1, 18, 18, 16>}, {pipeline_mode = #tpu.pipeline_mode<synchronous>, transform_indices = @transform_1, window_bounds = array<i64: 18, 18, 1>}, {pipeline_mode = #tpu.pipeline_mode<synchronous>, transform_indices = @transform_2, window_bounds = array<i64: 1, 16>}, {pipeline_mode = #tpu.pipeline_mode<synchronous>, transform_indices = @transform_3, window_bounds = array<i64: 1, 16>}, {pipeline_mode = #tpu.pipeline_mode<synchronous>, transform_indices = @transform_4, window_bounds = array<i64: 144, 9>}, {pipeline_mode = #tpu.pipeline_mode<synchronous>, transform_indices = @transform_5, window_bounds = array<i64: 1, 9>}, {transform_indices = @transform_6, window_bounds = array<i64: 1, 256, 9>}]} {
    %c0 = arith.constant 0 : index
    %c0_0 = arith.constant 0 : index
    %c0_1 = arith.constant 0 : index
    %c0_2 = arith.constant 0 : index
    %0 = vector.load %arg1[%c0, %c0_0, %c0_1, %c0_2] : memref<1x18x18x16xf32, #tpu.memory_space<vmem>>, vector<1x18x18x16xf32>
    %1 = vector.shape_cast %0 : vector<1x18x18x16xf32> to vector<18x18x16xf32>
    %c0_3 = arith.constant 0 : index
    %c0_4 = arith.constant 0 : index
    %2 = vector.load %arg3[%c0_3, %c0_4] : memref<1x16xf32, #tpu.memory_space<vmem>>, vector<1x16xf32>
    %3 = vector.shape_cast %2 : vector<1x16xf32> to vector<1x1x16xf32>
    %4 = vector.broadcast %3 : vector<1x1x16xf32> to vector<18x18x16xf32>
    %5 = arith.mulf %1, %4 : vector<18x18x16xf32>
    %c0_5 = arith.constant 0 : index
    %c0_6 = arith.constant 0 : index
    %6 = vector.load %arg4[%c0_5, %c0_6] : memref<1x16xf32, #tpu.memory_space<vmem>>, vector<1x16xf32>
    %7 = vector.shape_cast %6 : vector<1x16xf32> to vector<1x1x16xf32>
    %8 = vector.broadcast %7 : vector<1x1x16xf32> to vector<18x18x16xf32>
    %9 = arith.addf %5, %8 : vector<18x18x16xf32>
    %cst = arith.constant 0.000000e+00 : f32
    %10 = vector.broadcast %cst : f32 to vector<18x18x16xf32>
    %11 = arith.maximumf %9, %10 : vector<18x18x16xf32>
    %c0_7 = arith.constant 0 : index
    %c0_8 = arith.constant 0 : index
    %c0_9 = arith.constant 0 : index
    %12 = vector.load %arg2[%c0_7, %c0_8, %c0_9] : memref<18x18x1xf32, #tpu.memory_space<vmem>>, vector<18x18x1xf32>
    %13 = vector.broadcast %12 : vector<18x18x1xf32> to vector<18x18x16xf32>
    %14 = arith.mulf %11, %13 : vector<18x18x16xf32>
    %15 = arith.truncf %14 : vector<18x18x16xf32> to vector<18x18x16xbf16>
    %16 = vector.extract_strided_slice %15 {offsets = [0, 0, 0], sizes = [16, 16, 16], strides = [1, 1, 1]} : vector<18x18x16xbf16> to vector<16x16x16xbf16>
    %17 = vector.extract_strided_slice %15 {offsets = [0, 1, 0], sizes = [16, 16, 16], strides = [1, 1, 1]} : vector<18x18x16xbf16> to vector<16x16x16xbf16>
    %18 = vector.extract_strided_slice %15 {offsets = [0, 2, 0], sizes = [16, 16, 16], strides = [1, 1, 1]} : vector<18x18x16xbf16> to vector<16x16x16xbf16>
    %19 = vector.extract_strided_slice %15 {offsets = [1, 0, 0], sizes = [16, 16, 16], strides = [1, 1, 1]} : vector<18x18x16xbf16> to vector<16x16x16xbf16>
    %20 = vector.extract_strided_slice %15 {offsets = [1, 1, 0], sizes = [16, 16, 16], strides = [1, 1, 1]} : vector<18x18x16xbf16> to vector<16x16x16xbf16>
    %21 = vector.extract_strided_slice %15 {offsets = [1, 2, 0], sizes = [16, 16, 16], strides = [1, 1, 1]} : vector<18x18x16xbf16> to vector<16x16x16xbf16>
    %22 = vector.extract_strided_slice %15 {offsets = [2, 0, 0], sizes = [16, 16, 16], strides = [1, 1, 1]} : vector<18x18x16xbf16> to vector<16x16x16xbf16>
    %23 = vector.extract_strided_slice %15 {offsets = [2, 1, 0], sizes = [16, 16, 16], strides = [1, 1, 1]} : vector<18x18x16xbf16> to vector<16x16x16xbf16>
    %24 = vector.extract_strided_slice %15 {offsets = [2, 2, 0], sizes = [16, 16, 16], strides = [1, 1, 1]} : vector<18x18x16xbf16> to vector<16x16x16xbf16>
    %25 = tpu.concatenate %16, %17, %18, %19, %20, %21, %22, %23, %24 in 2 : vector<16x16x16xbf16>, vector<16x16x16xbf16>, vector<16x16x16xbf16>, vector<16x16x16xbf16>, vector<16x16x16xbf16>, vector<16x16x16xbf16>, vector<16x16x16xbf16>, vector<16x16x16xbf16>, vector<16x16x16xbf16> -> vector<16x16x144xbf16>
    %26 = vector.shape_cast %25 : vector<16x16x144xbf16> to vector<256x144xbf16>
    %c0_10 = arith.constant 0 : index
    %c0_11 = arith.constant 0 : index
    %27 = vector.load %arg5[%c0_10, %c0_11] : memref<144x9xbf16, #tpu.memory_space<vmem>>, vector<144x9xbf16>
    %cst_12 = arith.constant dense<0.000000e+00> : vector<256x9xf32>
    %28 = tpu.matmul %26, %27, %cst_12 {dimension_numbers = #tpu.dot_dimension_numbers<[1], [0], [0], [1], [0, 0, 1, 1], [], []>} : vector<256x144xbf16>, vector<144x9xbf16>, vector<256x9xf32> -> vector<256x9xf32>
    %c0_13 = arith.constant 0 : index
    %c0_14 = arith.constant 0 : index
    %29 = vector.load %arg6[%c0_13, %c0_14] : memref<1x9xf32, #tpu.memory_space<vmem>>, vector<1x9xf32>
    %30 = vector.broadcast %29 : vector<1x9xf32> to vector<256x9xf32>
    %31 = arith.addf %28, %30 : vector<256x9xf32>
    %c0_15 = arith.constant 0 : index
    %c0_16 = arith.constant 0 : index
    %c0_17 = arith.constant 0 : index
    %32 = vector.load %arg7[%c0_15, %c0_16, %c0_17] : memref<1x256x9xf32, #tpu.memory_space<vmem>>, vector<1x256x9xf32>
    %33 = vector.shape_cast %32 : vector<1x256x9xf32> to vector<256x9xf32>
    %34 = vector.shape_cast %31 : vector<256x9xf32> to vector<1x256x9xf32>
    tpu.vector_store %arg7[%c0_15, %c0_16, %c0_17], %34 {strides = array<i32>} : memref<1x256x9xf32, #tpu.memory_space<vmem>>, vector<1x256x9xf32>,
    return
  }
  func.func @transform_0(%arg0: i32) -> (i32, i32, i32, i32) {
    %c0_i32 = arith.constant 0 : i32
    %c0_i32_0 = arith.constant 0 : i32
    %c0_i32_1 = arith.constant 0 : i32
    %c0_i32_2 = arith.constant 0 : i32
    return %arg0, %c0_i32, %c0_i32_0, %c0_i32_1 : i32, i32, i32, i32
  }
  func.func @transform_1(%arg0: i32) -> (i32, i32, i32) {
    %c0_i32 = arith.constant 0 : i32
    %c0_i32_0 = arith.constant 0 : i32
    %c0_i32_1 = arith.constant 0 : i32
    %c0_i32_2 = arith.constant 0 : i32
    return %c0_i32, %c0_i32_0, %c0_i32_1 : i32, i32, i32
  }
  func.func @transform_2(%arg0: i32) -> (i32, i32) {
    %c0_i32 = arith.constant 0 : i32
    %c0_i32_0 = arith.constant 0 : i32
    %c0_i32_1 = arith.constant 0 : i32
    return %c0_i32, %c0_i32_0 : i32, i32
  }
  func.func @transform_3(%arg0: i32) -> (i32, i32) {
    %c0_i32 = arith.constant 0 : i32
    %c0_i32_0 = arith.constant 0 : i32
    %c0_i32_1 = arith.constant 0 : i32
    return %c0_i32, %c0_i32_0 : i32, i32
  }
  func.func @transform_4(%arg0: i32) -> (i32, i32) {
    %c0_i32 = arith.constant 0 : i32
    %c0_i32_0 = arith.constant 0 : i32
    %c0_i32_1 = arith.constant 0 : i32
    return %c0_i32, %c0_i32_0 : i32, i32
  }
  func.func @transform_5(%arg0: i32) -> (i32, i32) {
    %c0_i32 = arith.constant 0 : i32
    %c0_i32_0 = arith.constant 0 : i32
    %c0_i32_1 = arith.constant 0 : i32
    return %c0_i32, %c0_i32_0 : i32, i32
  }
  func.func @transform_6(%arg0: i32) -> (i32, i32, i32) {
    %c0_i32 = arith.constant 0 : i32
    %c0_i32_0 = arith.constant 0 : i32
    %c0_i32_1 = arith.constant 0 : i32
    return %arg0, %c0_i32, %c0_i32_0 : i32, i32, i32
  }
}

module attributes {stable_mosaic.version = 11 : i64} {
  func.func @kernel(%arg0: i32, %arg1: i32, %arg2: memref<1x16x128xbf16, #tpu.memory_space<vmem>>, %arg3: memref<1x128x16xbf16, #tpu.memory_space<vmem>>, %arg4: memref<1x16x64xbf16, #tpu.memory_space<vmem>>, %arg5: memref<1x16x1xf32, #tpu.memory_space<vmem>>, %arg6: memref<1x16x256xf32, #tpu.memory_space<vmem>>) attributes {dimension_semantics = [#tpu.dimension_semantics<parallel>, #tpu.dimension_semantics<parallel>], iteration_bounds = array<i64: 2, 1>, scalar_prefetch = 0 : i64, scratch_operands = 0 : i64, tpu.core_type = #tpu.core_type<tc>, window_params = [{transform_indices = @transform_0, window_bounds = array<i64: 1, 16, 128>}, {transform_indices = @transform_1, window_bounds = array<i64: 1, 128, 16>}, {transform_indices = @transform_2, window_bounds = array<i64: 1, 16, 64>}, {transform_indices = @transform_3, window_bounds = array<i64: 1, 16, 1>}, {transform_indices = @transform_4, window_bounds = array<i64: 1, 16, 256>}]} {
    %c0 = arith.constant 0 : index
    %c0_0 = arith.constant 0 : index
    %c0_1 = arith.constant 0 : index
    %0 = vector.load %arg2[%c0, %c0_0, %c0_1] : memref<1x16x128xbf16, #tpu.memory_space<vmem>>, vector<1x16x128xbf16>
    %1 = vector.shape_cast %0 : vector<1x16x128xbf16> to vector<16x128xbf16>
    %c0_2 = arith.constant 0 : index
    %c0_3 = arith.constant 0 : index
    %c0_4 = arith.constant 0 : index
    %2 = vector.load %arg3[%c0_2, %c0_3, %c0_4] : memref<1x128x16xbf16, #tpu.memory_space<vmem>>, vector<1x128x16xbf16>
    %3 = vector.shape_cast %2 : vector<1x128x16xbf16> to vector<128x16xbf16>
    %c0_5 = arith.constant 0 : index
    %c0_6 = arith.constant 0 : index
    %c0_7 = arith.constant 0 : index
    %4 = vector.load %arg4[%c0_5, %c0_6, %c0_7] : memref<1x16x64xbf16, #tpu.memory_space<vmem>>, vector<1x16x64xbf16>
    %5 = vector.shape_cast %4 : vector<1x16x64xbf16> to vector<16x64xbf16>
    %c0_8 = arith.constant 0 : index
    %c0_9 = arith.constant 0 : index
    %c0_10 = arith.constant 0 : index
    %6 = vector.load %arg5[%c0_8, %c0_9, %c0_10] : memref<1x16x1xf32, #tpu.memory_space<vmem>>, vector<1x16x1xf32>
    %7 = vector.shape_cast %6 : vector<1x16x1xf32> to vector<16x1xf32>
    %cst = arith.constant dense<0.000000e+00> : vector<16x16xf32>
    %8 = tpu.matmul %1, %3, %cst {dimension_numbers = #tpu.dot_dimension_numbers<[1], [0], [0], [1], [0, 0, 1, 1], [], []>} : vector<16x128xbf16>, vector<128x16xbf16>, vector<16x16xf32> -> vector<16x16xf32>
    %9 = arith.extf %3 : vector<128x16xbf16> to vector<128x16xf32>
    %10 = arith.mulf %9, %9 : vector<128x16xf32>
    %cst_11 = arith.constant dense<0.000000e+00> : vector<16xf32>
    %11 = vector.multi_reduction <add>, %10, %cst_11 [0] : vector<128x16xf32> to vector<16xf32>
    %12 = vector.shape_cast %11 : vector<16xf32> to vector<1x16xf32>
    %cst_12 = arith.constant 2.000000e+00 : f32
    %13 = vector.broadcast %cst_12 : f32 to vector<16x16xf32>
    %14 = arith.mulf %13, %8 : vector<16x16xf32>
    %15 = vector.broadcast %12 : vector<1x16xf32> to vector<16x16xf32>
    %16 = arith.subf %15, %14 : vector<16x16xf32>
    %cst_13 = arith.constant 0.000000e+00 : f32
    %17 = vector.broadcast %cst_13 : f32 to vector<16x1xf32>
    %18 = arith.subf %17, %7 : vector<16x1xf32>
    %19 = math.exp %18 : vector<16x1xf32>
    %cst_14 = arith.constant 0.000000e+00 : f32
    %20 = vector.broadcast %cst_14 : f32 to vector<16x16xf32>
    %21 = arith.subf %20, %16 : vector<16x16xf32>
    %22 = vector.broadcast %19 : vector<16x1xf32> to vector<16x16xf32>
    %23 = arith.mulf %21, %22 : vector<16x16xf32>
    %c16_i32 = arith.constant 16 : i32
    %24 = arith.muli %arg1, %c16_i32 : i32
    %25 = tpu.iota {dimensions = array<i32: 0>} : vector<16x16xi32>
    %26 = vector.broadcast %24 : i32 to vector<16x16xi32>
    %27 = arith.addi %26, %25 : vector<16x16xi32>
    %28 = tpu.iota {dimensions = array<i32: 1>} : vector<16x16xi32>
    %29 = arith.cmpi eq, %27, %28 : vector<16x16xi32>
    %cst_15 = arith.constant -1.000000e+30 : f32
    %30 = vector.broadcast %cst_15 : f32 to vector<16x16xf32>
    %31 = arith.select %29, %30, %23 : vector<16x16xi1>, vector<16x16xf32>
    %cst_16 = arith.constant dense<0xFF800000> : vector<16xf32>
    %32 = vector.multi_reduction <maximumf>, %31, %cst_16 [1] : vector<16x16xf32> to vector<16xf32>
    %33 = vector.shape_cast %32 : vector<16xf32> to vector<16x1xf32>
    %34 = vector.broadcast %33 : vector<16x1xf32> to vector<16x16xf32>
    %35 = arith.subf %31, %34 : vector<16x16xf32>
    %36 = math.exp %35 : vector<16x16xf32>
    %cst_17 = arith.constant dense<0.000000e+00> : vector<16xf32>
    %37 = vector.multi_reduction <add>, %36, %cst_17 [1] : vector<16x16xf32> to vector<16xf32>
    %38 = vector.shape_cast %37 : vector<16xf32> to vector<16x1xf32>
    %39 = tpu.reciprocal %38 {approx = true} : vector<16x1xf32> -> vector<16x1xf32>
    %40 = vector.broadcast %39 : vector<16x1xf32> to vector<16x16xf32>
    %41 = arith.mulf %36, %40 : vector<16x16xf32>
    %42 = arith.truncf %41 : vector<16x16xf32> to vector<16x16xbf16>
    %cst_18 = arith.constant dense<0.000000e+00> : vector<16x64xf32>
    %43 = tpu.matmul %42, %5, %cst_18 {dimension_numbers = #tpu.dot_dimension_numbers<[1], [0], [0], [1], [0, 0, 1, 1], [], []>} : vector<16x16xbf16>, vector<16x64xbf16>, vector<16x64xf32> -> vector<16x64xf32>
    %cst_19 = arith.constant 1.000000e+00 : f32
    %44 = vector.broadcast %cst_19 : f32 to vector<16x16xf32>
    %45 = arith.subf %44, %41 : vector<16x16xf32>
    %cst_20 = arith.constant 9.99999997E-7 : f32
    %46 = vector.broadcast %cst_20 : f32 to vector<16x16xf32>
    %47 = arith.addf %45, %46 : vector<16x16xf32>
    %48 = arith.mulf %36, %47 : vector<16x16xf32>
    %cst_21 = arith.constant dense<0.000000e+00> : vector<16xf32>
    %49 = vector.multi_reduction <add>, %48, %cst_21 [1] : vector<16x16xf32> to vector<16xf32>
    %50 = vector.shape_cast %49 : vector<16xf32> to vector<16x1xf32>
    %51 = tpu.reciprocal %50 {approx = true} : vector<16x1xf32> -> vector<16x1xf32>
    %52 = vector.broadcast %51 : vector<16x1xf32> to vector<16x16xf32>
    %53 = arith.mulf %48, %52 : vector<16x16xf32>
    %54 = arith.truncf %53 : vector<16x16xf32> to vector<16x16xbf16>
    %cst_22 = arith.constant dense<0.000000e+00> : vector<16x64xf32>
    %55 = tpu.matmul %54, %5, %cst_22 {dimension_numbers = #tpu.dot_dimension_numbers<[1], [0], [0], [1], [0, 0, 1, 1], [], []>} : vector<16x16xbf16>, vector<16x64xbf16>, vector<16x64xf32> -> vector<16x64xf32>
    %cst_23 = arith.constant 1.000000e+00 : f32
    %56 = vector.broadcast %cst_23 : f32 to vector<16x16xf32>
    %57 = arith.subf %56, %53 : vector<16x16xf32>
    %cst_24 = arith.constant 9.99999997E-7 : f32
    %58 = vector.broadcast %cst_24 : f32 to vector<16x16xf32>
    %59 = arith.addf %57, %58 : vector<16x16xf32>
    %60 = arith.mulf %48, %59 : vector<16x16xf32>
    %cst_25 = arith.constant dense<0.000000e+00> : vector<16xf32>
    %61 = vector.multi_reduction <add>, %60, %cst_25 [1] : vector<16x16xf32> to vector<16xf32>
    %62 = vector.shape_cast %61 : vector<16xf32> to vector<16x1xf32>
    %63 = tpu.reciprocal %62 {approx = true} : vector<16x1xf32> -> vector<16x1xf32>
    %64 = vector.broadcast %63 : vector<16x1xf32> to vector<16x16xf32>
    %65 = arith.mulf %60, %64 : vector<16x16xf32>
    %66 = arith.truncf %65 : vector<16x16xf32> to vector<16x16xbf16>
    %cst_26 = arith.constant dense<0.000000e+00> : vector<16x64xf32>
    %67 = tpu.matmul %66, %5, %cst_26 {dimension_numbers = #tpu.dot_dimension_numbers<[1], [0], [0], [1], [0, 0, 1, 1], [], []>} : vector<16x16xbf16>, vector<16x64xbf16>, vector<16x64xf32> -> vector<16x64xf32>
    %cst_27 = arith.constant 1.000000e+00 : f32
    %68 = vector.broadcast %cst_27 : f32 to vector<16x16xf32>
    %69 = arith.subf %68, %65 : vector<16x16xf32>
    %cst_28 = arith.constant 9.99999997E-7 : f32
    %70 = vector.broadcast %cst_28 : f32 to vector<16x16xf32>
    %71 = arith.addf %69, %70 : vector<16x16xf32>
    %72 = arith.mulf %60, %71 : vector<16x16xf32>
    %cst_29 = arith.constant dense<0.000000e+00> : vector<16xf32>
    %73 = vector.multi_reduction <add>, %72, %cst_29 [1] : vector<16x16xf32> to vector<16xf32>
    %74 = vector.shape_cast %73 : vector<16xf32> to vector<16x1xf32>
    %75 = tpu.reciprocal %74 {approx = true} : vector<16x1xf32> -> vector<16x1xf32>
    %76 = vector.broadcast %75 : vector<16x1xf32> to vector<16x16xf32>
    %77 = arith.mulf %72, %76 : vector<16x16xf32>
    %78 = arith.truncf %77 : vector<16x16xf32> to vector<16x16xbf16>
    %cst_30 = arith.constant dense<0.000000e+00> : vector<16x64xf32>
    %79 = tpu.matmul %78, %5, %cst_30 {dimension_numbers = #tpu.dot_dimension_numbers<[1], [0], [0], [1], [0, 0, 1, 1], [], []>} : vector<16x16xbf16>, vector<16x64xbf16>, vector<16x64xf32> -> vector<16x64xf32>
    %80 = tpu.concatenate %43, %55, %67, %79 in 1 : vector<16x64xf32>, vector<16x64xf32>, vector<16x64xf32>, vector<16x64xf32> -> vector<16x256xf32>
    %c0_31 = arith.constant 0 : index
    %c0_32 = arith.constant 0 : index
    %c0_33 = arith.constant 0 : index
    %81 = vector.load %arg6[%c0_31, %c0_32, %c0_33] : memref<1x16x256xf32, #tpu.memory_space<vmem>>, vector<1x16x256xf32>
    %82 = vector.shape_cast %81 : vector<1x16x256xf32> to vector<16x256xf32>
    %83 = vector.shape_cast %80 : vector<16x256xf32> to vector<1x16x256xf32>
    tpu.vector_store %arg6[%c0_31, %c0_32, %c0_33], %83 {strides = array<i32>} : memref<1x16x256xf32, #tpu.memory_space<vmem>>, vector<1x16x256xf32>,
    return
  }
  func.func @transform_0(%arg0: i32, %arg1: i32) -> (i32, i32, i32) {
    %c0_i32 = arith.constant 0 : i32
    %c0_i32_0 = arith.constant 0 : i32
    return %arg0, %arg1, %c0_i32 : i32, i32, i32
  }
  func.func @transform_1(%arg0: i32, %arg1: i32) -> (i32, i32, i32) {
    %c0_i32 = arith.constant 0 : i32
    %c0_i32_0 = arith.constant 0 : i32
    %c0_i32_1 = arith.constant 0 : i32
    return %arg0, %c0_i32, %c0_i32_0 : i32, i32, i32
  }
  func.func @transform_2(%arg0: i32, %arg1: i32) -> (i32, i32, i32) {
    %c0_i32 = arith.constant 0 : i32
    %c0_i32_0 = arith.constant 0 : i32
    %c0_i32_1 = arith.constant 0 : i32
    return %arg0, %c0_i32, %c0_i32_0 : i32, i32, i32
  }
  func.func @transform_3(%arg0: i32, %arg1: i32) -> (i32, i32, i32) {
    %c0_i32 = arith.constant 0 : i32
    %c0_i32_0 = arith.constant 0 : i32
    return %arg0, %arg1, %c0_i32 : i32, i32, i32
  }
  func.func @transform_4(%arg0: i32, %arg1: i32) -> (i32, i32, i32) {
    %c0_i32 = arith.constant 0 : i32
    %c0_i32_0 = arith.constant 0 : i32
    return %arg0, %arg1, %c0_i32 : i32, i32, i32
  }
}

</mosaic_0001>

<llo_original>
// kernel: n3block_forward.3
$region0: #{n3block_forward.3}
  #allocation0 [shape = 'u32[]', space=smem, size = 0x4, offset = 0x4, fixed_abs, tag = 'smem constant byte address 0x4 - core index']
  #allocation1 [shape = 'u32[144,128]{1,0:T(1,128)}', space=vmem, size = 0x12000, scoped, tag = 'internal scratch']
  %s0 = inlined_call_operand.vmem [shape: bf16[2,18,18,4], index: 0, kind: input, shape index: {}]
  %s1 = inlined_call_operand.vmem [shape: bf16[36,16], index: 1, kind: input, shape index: {}]
  %s2 = inlined_call_operand.vmem [shape: f32[2,256,16], index: 2, kind: output, shape index: {}]
  %s3 = sld [smem:[#allocation0]]
  $region41: #{n3block_forward.3} parent=0
    _
  %s5 = ssub.s32 1, %s3
  %s6 = scalar_select 0, %s5, %s3
  loop: start=0, step=1, limit=4
  $region2: #{n3block_forward.3} parent=0 // loop_pre_header
    _
  $region3: #{n3block_forward.3} parent=0 // loop_header
    %s8 = sphi 0, %s12
    %p9 = scmp.ge.s32.totalorder %s8, 4
    %s18 = sphi 0, %s20
    %s21 = sphi 0, %s18
    %s22 = sphi 0, %s21
    %s38 = sphi 0, %s22
    %s42 = sphi 0, %s42
    %s44 = sphi 0, %s42
    %s45 = sphi 0, %s44
    %s59 = sphi 0, %s45
    %s65 = sphi 0, %s67
    %s68 = sphi 0, %s65
    %s69 = sphi 0, %s68
    %s85 = sphi 0, %s69
  $region4: #{n3block_forward.3} parent=0 // loop_header_branch
    %11 = sbr.rel (%p9) target = $region8
  $region5: #{n3block_forward.3} parent=0 // loop_body
    %s13 = ssub.s32 %s8, 1
    %s14 = ssub.s32 %s8, 2
    %s15 = sadd.s32 %s8, 1
    %s16 = ssub.s32 %s8, %s15
    %p17 = scmp.eq.s32.totalorder %s16, 0
    %s19 = sadd.s32 %s18, 1
    %s20 = scalar_select %p17, %s18, %s19
    %p23 = pneg %p17
    %p24 = scmp.eq.s32.totalorder %s8, 1
    %p25 = por %p23, %p24
    %p26 = scmp.ne.s32.totalorder %s18, %s21
    %p27 = scmp.eq.s32.totalorder %s8, 0
    %p28 = por %p26, %p27
    %p29 = scmp.ne.s32.totalorder %s18, %s21
    %p30 = scmp.eq.s32.totalorder %s13, 1
    %p31 = por %p29, %p30
    %p32 = scmp.ne.s32.totalorder %s21, %s22
    %p33 = scmp.eq.s32.totalorder %s13, 0
    %p34 = por %p32, %p33
    %p35 = scmp.ne.s32.totalorder %s21, %s22
    %p36 = scmp.eq.s32.totalorder %s14, 1
    %p37 = por %p35, %p36
    %p39 = scmp.ne.s32.totalorder %s22, %s38
    %p40 = scmp.eq.s32.totalorder %s14, 0
    %p41 = por %p39, %p40
    %s43 = sadd.s32 %s42, 1
    %p46 = scmp.eq.s32.totalorder %s8, 1
    %p47 = scmp.ne.s32.totalorder %s42, %s44
    %p48 = scmp.eq.s32.totalorder %s8, 0
    %p49 = por %p47, %p48
    %p50 = scmp.ne.s32.totalorder %s42, %s44
    %p51 = scmp.eq.s32.totalorder %s13, 1
    %p52 = por %p50, %p51
    %p53 = scmp.ne.s32.totalorder %s44, %s45
    %p54 = scmp.eq.s32.totalorder %s13, 0
    %p55 = por %p53, %p54
    %p56 = scmp.ne.s32.totalorder %s44, %s45
    %p57 = scmp.eq.s32.totalorder %s14, 1
    %p58 = por %p56, %p57
    %p60 = scmp.ne.s32.totalorder %s45, %s59
    %p61 = scmp.eq.s32.totalorder %s14, 0
    %p62 = por %p60, %p61
    %s63 = ssub.s32 %s8, %s15
    %p64 = scmp.eq.s32.totalorder %s63, 0
    %s66 = sadd.s32 %s65, 1
    %s67 = scalar_select %p64, %s65, %s66
    %p70 = pneg %p64
    %p71 = scmp.eq.s32.totalorder %s8, 1
    %p72 = por %p70, %p71
    %p73 = scmp.ne.s32.totalorder %s65, %s68
    %p74 = scmp.eq.s32.totalorder %s8, 0
    %p75 = por %p73, %p74
    %p76 = scmp.ne.s32.totalorder %s65, %s68
    %p77 = scmp.eq.s32.totalorder %s13, 1
    %p78 = por %p76, %p77
    %p79 = scmp.ne.s32.totalorder %s68, %s69
    %p80 = scmp.eq.s32.totalorder %s13, 0
    %p81 = por %p79, %p80
    %p82 = scmp.ne.s32.totalorder %s68, %s69
    %p83 = scmp.eq.s32.totalorder %s14, 1
    %p84 = por %p82, %p83
    %p86 = scmp.ne.s32.totalorder %s69, %s85
    %p87 = scmp.eq.s32.totalorder %s14, 0
    %p88 = por %p86, %p87
    %p89 = scmp.le.s32.totalorder 1, %s8
    %p90 = scmp.lt.s32.totalorder %s8, 3
    %p91 = pnand %p89, %p90
    %p92 = pneg %p91
    // Predicated region
    $region9: #{n3block_forward.3} parent=5 // pred_check
      _
    $region10: #{n3block_forward.3} parent=5 // pred_check_branch
      %94 = sbr.rel (%p91) target = $region12
    $region11: #{n3block_forward.3} parent=5 // pred_region
      %s95 = ssub.s32 %s8, 1
      // Predicated region
      $region13: #{n3block_forward.3} parent=11 // pred_check
        %p96 = pneg %p55
      $region14: #{n3block_forward.3} parent=11 // pred_check_branch
        %98 = sbr.rel (%p96) target = $region16
      $region15: #{n3block_forward.3} parent=11 // pred_region
        _
      $region16: #{n3block_forward.3} parent=11 // pred_fallthru
        _
    $region12: #{n3block_forward.3} parent=5 // pred_fallthru
      _
    %p99 = scmp.lt.s32.totalorder %s8, 2
    // Predicated region
    $region17: #{n3block_forward.3} parent=5 // pred_check
      %p100 = pneg %p99
    $region18: #{n3block_forward.3} parent=5 // pred_check_branch
      %102 = sbr.rel (%p100) target = $region20
    $region19: #{n3block_forward.3} parent=5 // pred_region
      // Predicated region
      $region21: #{n3block_forward.3} parent=19 // pred_check
        %p103 = pneg %p28
      $region22: #{n3block_forward.3} parent=19 // pred_check_branch
        %105 = sbr.rel (%p103) target = $region24
      $region23: #{n3block_forward.3} parent=19 // pred_region
        %p106 = scmp.lt.s32.totalorder %s8, 1
        %s107 = scalar_select %p106, %s8, 1
        %s108 = smul.addr %s107, 54
        %s109 = smul.addr %s108, 4
        %s110 = scalar_lea.vmem %s0, %s109
      $region24: #{n3block_forward.3} parent=19 // pred_fallthru
        _
    $region20: #{n3block_forward.3} parent=5 // pred_fallthru
      _
    %p111 = scmp.le.s32.totalorder 1, %s8
    %p112 = scmp.lt.s32.totalorder %s8, 3
    %p113 = pnand %p111, %p112
    %p114 = pneg %p113
    // Predicated region
    $region25: #{n3block_forward.3} parent=5 // pred_check
      _
    $region26: #{n3block_forward.3} parent=5 // pred_check_branch
      %116 = sbr.rel (%p113) target = $region28
    $region27: #{n3block_forward.3} parent=5 // pred_region
      %s117 = ssub.s32 %s8, 1
      %p118 = scmp.lt.s32.totalorder %s13, 1
      %s119 = scalar_select %p118, %s13, 1
      %s120 = smul.addr %s119, 54
      %s121 = smul.addr %s120, 4
      %s122 = scalar_lea.vmem %s0, %s121
      %p123 = pneg %p34
      %p124 = pneg %p31
      %p125 = pneg %p55
      %p126 = pneg %p52
      %p127 = pneg %p81
      %p128 = pneg %p78
      %p129 = scmp.lt.s32.totalorder %s13, 1
      %s130 = scalar_select %p129, %s13, 1
      %s131 = smul.addr %s130, 32
      %s132 = smul.addr %s131, 8
      %s133 = scalar_lea.vmem %s2, %s132
      %p134 = scmp.lt.s32.totalorder %s13, 1
      %s135 = scalar_select %p134, %s13, 1
      %s136 = smul.addr %s135, 54
      %s137 = smul.addr %s136, 4
      %s138 = scalar_lea.vmem %s0, %s137
      %p139 = scmp.lt.s32.totalorder %s13, 1
      %s140 = scalar_select %p139, %s13, 1
      %s141 = smul.addr %s140, 32
      %s142 = smul.addr %s141, 8
      %s143 = scalar_lea.vmem %s2, %s142
      %v145 = vld [vmem:[%s138] sm:$0xf]
      %v146 = vld [vmem:[%s138 + $0x4] sm:$0xf]
      %v147 = vld [vmem:[%s138 + $0x8] sm:$0x1]
      %v148 = vld [vmem:[%s138 + $0xc] sm:$0xf]
      %v149 = vld [vmem:[%s138 + $0x10] sm:$0xf]
      %v150 = vld [vmem:[%s138 + $0x14] sm:$0x1]
      %v151 = vld [vmem:[%s138 + $0x18] sm:$0xf]
      %v152 = vld [vmem:[%s138 + $0x1c] sm:$0xf]
      %v153 = vld [vmem:[%s138 + $0x20] sm:$0x1]
      %v154 = vld [vmem:[%s138 + $0x24] sm:$0xf]
      %v155 = vld [vmem:[%s138 + $0x28] sm:$0xf]
      %v156 = vld [vmem:[%s138 + $0x2c] sm:$0x1]
      %v157 = vld [vmem:[%s138 + $0x30] sm:$0xf]
      %v158 = vld [vmem:[%s138 + $0x34] sm:$0xf]
      %v159 = vld [vmem:[%s138 + $0x38] sm:$0x1]
      %v160 = vld [vmem:[%s138 + $0x3c] sm:$0xf]
      %v161 = vld [vmem:[%s138 + $0x40] sm:$0xf]
      %v162 = vld [vmem:[%s138 + $0x44] sm:$0x1]
      %v163 = vld [vmem:[%s138 + $0x48] sm:$0xf]
      %v164 = vld [vmem:[%s138 + $0x4c] sm:$0xf]
      %v165 = vld [vmem:[%s138 + $0x50] sm:$0x1]
      %v166 = vld [vmem:[%s138 + $0x54] sm:$0xf]
      %v167 = vld [vmem:[%s138 + $0x58] sm:$0xf]
      %v168 = vld [vmem:[%s138 + $0x5c] sm:$0x1]
      %v169 = vld [vmem:[%s138 + $0x60] sm:$0xf]
      %v170 = vld [vmem:[%s138 + $0x64] sm:$0xf]
      %v171 = vld [vmem:[%s138 + $0x68] sm:$0x1]
      %v172 = vld [vmem:[%s138 + $0x6c] sm:$0xf]
      %v173 = vld [vmem:[%s138 + $0x70] sm:$0xf]
      %v174 = vld [vmem:[%s138 + $0x74] sm:$0x1]
      %v175 = vld [vmem:[%s138 + $0x78] sm:$0xf]
      %v176 = vld [vmem:[%s138 + $0x7c] sm:$0xf]
      %v177 = vld [vmem:[%s138 + $0x80] sm:$0x1]
      %v178 = vld [vmem:[%s138 + $0x84] sm:$0xf]
      %v179 = vld [vmem:[%s138 + $0x88] sm:$0xf]
      %v180 = vld [vmem:[%s138 + $0x8c] sm:$0x1]
      %v181 = vld [vmem:[%s138 + $0x90] sm:$0xf]
      %v182 = vld [vmem:[%s138 + $0x94] sm:$0xf]
      %v183 = vld [vmem:[%s138 + $0x98] sm:$0x1]
      %v184 = vld [vmem:[%s138 + $0x9c] sm:$0xf]
      %v185 = vld [vmem:[%s138 + $0xa0] sm:$0xf]
      %v186 = vld [vmem:[%s138 + $0xa4] sm:$0x1]
      %v187 = vld [vmem:[%s138 + $0xa8] sm:$0xf]
      %v188 = vld [vmem:[%s138 + $0xac] sm:$0xf]
      %v189 = vld [vmem:[%s138 + $0xb0] sm:$0x1]
      %v190 = vld [vmem:[%s138 + $0xb4] sm:$0xf]
      %v191 = vld [vmem:[%s138 + $0xb8] sm:$0xf]
      %v192 = vld [vmem:[%s138 + $0xbc] sm:$0x1]
      %v193 = vld [vmem:[%s138 + $0xc0] sm:$0xf]
      %v194 = vld [vmem:[%s138 + $0xc4] sm:$0xf]
      %v195 = vld [vmem:[%s138 + $0xc8] sm:$0x1]
      %v196 = vld [vmem:[%s138 + $0xcc] sm:$0xf]
      %v197 = vld [vmem:[%s138 + $0xd0] sm:$0xf]
      %v198 = vld [vmem:[%s138 + $0xd4] sm:$0x1]
      %v231 = vunpack.c.l.b16 %v145
      %v232 = vunpack.c.l.b16 %v146
      %v233 = vunpack.c.l.b16 %v148
      %v234 = vunpack.c.l.b16 %v149
      %v235 = vunpack.c.l.b16 %v151
      %v236 = vunpack.c.l.b16 %v152
      %v237 = vunpack.c.l.b16 %v154
      %v238 = vunpack.c.l.b16 %v155
      %v239 = vunpack.c.l.b16 %v157
      %v240 = vunpack.c.l.b16 %v158
      %v241 = vunpack.c.l.b16 %v160
      %v242 = vunpack.c.l.b16 %v161
      %v243 = vunpack.c.l.b16 %v163
      %v244 = vunpack.c.l.b16 %v164
      %v245 = vunpack.c.l.b16 %v166
      %v246 = vunpack.c.l.b16 %v167
      %v247 = vunpack.c.l.b16 %v169
      %v248 = vunpack.c.l.b16 %v170
      %v249 = vunpack.c.l.b16 %v172
      %v250 = vunpack.c.l.b16 %v173
      %v251 = vunpack.c.l.b16 %v175
      %v252 = vunpack.c.l.b16 %v176
      %v253 = vunpack.c.l.b16 %v178
      %v254 = vunpack.c.l.b16 %v179
      %v255 = vunpack.c.l.b16 %v181
      %v256 = vunpack.c.l.b16 %v182
      %v257 = vunpack.c.l.b16 %v184
      %v258 = vunpack.c.l.b16 %v185
      %v259 = vunpack.c.l.b16 %v187
      %v260 = vunpack.c.l.b16 %v188
      %v261 = vunpack.c.l.b16 %v190
      %v262 = vunpack.c.l.b16 %v191
      %v263 = vpack.c.b16 %v232, %v231
      %v264 = vpack.c.b16 %v234, %v233
      %v265 = vpack.c.b16 %v236, %v235
      %v266 = vpack.c.b16 %v238, %v237
      %v267 = vpack.c.b16 %v240, %v239
      %v268 = vpack.c.b16 %v242, %v241
      %v269 = vpack.c.b16 %v244, %v243
      %v270 = vpack.c.b16 %v246, %v245
      %v271 = vpack.c.b16 %v248, %v247
      %v272 = vpack.c.b16 %v250, %v249
      %v273 = vpack.c.b16 %v252, %v251
      %v274 = vpack.c.b16 %v254, %v253
      %v275 = vpack.c.b16 %v256, %v255
      %v276 = vpack.c.b16 %v258, %v257
      %v277 = vpack.c.b16 %v260, %v259
      %v278 = vpack.c.b16 %v262, %v261
      %v295 = vunpack.c.l.b16 %v147
      %v296 = vunpack.c.l.b16 %v150
      %v297 = vunpack.c.l.b16 %v153
      %v298 = vunpack.c.l.b16 %v156
      %v299 = vunpack.c.l.b16 %v159
      %v300 = vunpack.c.l.b16 %v162
      %v301 = vunpack.c.l.b16 %v165
      %v302 = vunpack.c.l.b16 %v168
      %v303 = vunpack.c.l.b16 %v171
      %v304 = vunpack.c.l.b16 %v174
      %v305 = vunpack.c.l.b16 %v177
      %v306 = vunpack.c.l.b16 %v180
      %v307 = vunpack.c.l.b16 %v183
      %v308 = vunpack.c.l.b16 %v186
      %v309 = vunpack.c.l.b16 %v189
      %v310 = vunpack.c.l.b16 %v192
      %v311 = vpack.c.b16 %v295, %v295
      %v312 = vpack.c.b16 %v296, %v296
      %v313 = vpack.c.b16 %v297, %v297
      %v314 = vpack.c.b16 %v298, %v298
      %v315 = vpack.c.b16 %v299, %v299
      %v316 = vpack.c.b16 %v300, %v300
      %v317 = vpack.c.b16 %v301, %v301
      %v318 = vpack.c.b16 %v302, %v302
      %v319 = vpack.c.b16 %v303, %v303
      %v320 = vpack.c.b16 %v304, %v304
      %v321 = vpack.c.b16 %v305, %v305
      %v322 = vpack.c.b16 %v306, %v306
      %v323 = vpack.c.b16 %v307, %v307
      %v324 = vpack.c.b16 %v308, %v308
      %v325 = vpack.c.b16 %v309, %v309
      %v326 = vpack.c.b16 %v310, %v310
      %vm327 = vsmask.f32 7424
      %v329 = vshrl.u32 %v263, 16
      %v331 = vshll.u32 %v263, 16
      %v333 = vrot.slane %v331, 1
      %v334 = vor.u32 %v329, %v333
      %v336 = vshll.u32 %v311, 16
      %v338 = vrot.slane %v336, 1
      %v339 = vsel %vm327, %v334, %v338
      %v341 = vshrl.u32 %v264, 16
      %v343 = vshll.u32 %v264, 16
      %v345 = vrot.slane %v343, 1
      %v346 = vor.u32 %v341, %v345
      %v348 = vshll.u32 %v312, 16
      %v350 = vrot.slane %v348, 1
      %v351 = vsel %vm327, %v346, %v350
      %v353 = vshrl.u32 %v265, 16
      %v355 = vshll.u32 %v265, 16
      %v357 = vrot.slane %v355, 1
      %v358 = vor.u32 %v353, %v357
      %v360 = vshll.u32 %v313, 16
      %v362 = vrot.slane %v360, 1
      %v363 = vsel %vm327, %v358, %v362
      %v365 = vshrl.u32 %v266, 16
      %v367 = vshll.u32 %v266, 16
      %v369 = vrot.slane %v367, 1
      %v370 = vor.u32 %v365, %v369
      %v372 = vshll.u32 %v314, 16
      %v374 = vrot.slane %v372, 1
      %v375 = vsel %vm327, %v370, %v374
      %v377 = vshrl.u32 %v267, 16
      %v379 = vshll.u32 %v267, 16
      %v381 = vrot.slane %v379, 1
      %v382 = vor.u32 %v377, %v381
      %v384 = vshll.u32 %v315, 16
      %v386 = vrot.slane %v384, 1
      %v387 = vsel %vm327, %v382, %v386
      %v389 = vshrl.u32 %v268, 16
      %v391 = vshll.u32 %v268, 16
      %v393 = vrot.slane %v391, 1
      %v394 = vor.u32 %v389, %v393
      %v396 = vshll.u32 %v316, 16
      %v398 = vrot.slane %v396, 1
      %v399 = vsel %vm327, %v394, %v398
      %v401 = vshrl.u32 %v269, 16
      %v403 = vshll.u32 %v269, 16
      %v405 = vrot.slane %v403, 1
      %v406 = vor.u32 %v401, %v405
      %v408 = vshll.u32 %v317, 16
      %v410 = vrot.slane %v408, 1
      %v411 = vsel %vm327, %v406, %v410
      %v413 = vshrl.u32 %v270, 16
      %v415 = vshll.u32 %v270, 16
      %v417 = vrot.slane %v415, 1
      %v418 = vor.u32 %v413, %v417
      %v420 = vshll.u32 %v318, 16
      %v422 = vrot.slane %v420, 1
      %v423 = vsel %vm327, %v418, %v422
      %v425 = vshrl.u32 %v271, 16
      %v427 = vshll.u32 %v271, 16
      %v429 = vrot.slane %v427, 1
      %v430 = vor.u32 %v425, %v429
      %v432 = vshll.u32 %v319, 16
      %v434 = vrot.slane %v432, 1
      %v435 = vsel %vm327, %v430, %v434
      %v437 = vshrl.u32 %v272, 16
      %v439 = vshll.u32 %v272, 16
      %v441 = vrot.slane %v439, 1
      %v442 = vor.u32 %v437, %v441
      %v444 = vshll.u32 %v320, 16
      %v446 = vrot.slane %v444, 1
      %v447 = vsel %vm327, %v442, %v446
      %v449 = vshrl.u32 %v273, 16
      %v451 = vshll.u32 %v273, 16
      %v453 = vrot.slane %v451, 1
      %v454 = vor.u32 %v449, %v453
      %v456 = vshll.u32 %v321, 16
      %v458 = vrot.slane %v456, 1
      %v459 = vsel %vm327, %v454, %v458
      %v461 = vshrl.u32 %v274, 16
      %v463 = vshll.u32 %v274, 16
      %v465 = vrot.slane %v463, 1
      %v466 = vor.u32 %v461, %v465
      %v468 = vshll.u32 %v322, 16
      %v470 = vrot.slane %v468, 1
      %v471 = vsel %vm327, %v466, %v470
      %v473 = vshrl.u32 %v275, 16
      %v475 = vshll.u32 %v275, 16
      %v477 = vrot.slane %v475, 1
      %v478 = vor.u32 %v473, %v477
      %v480 = vshll.u32 %v323, 16
      %v482 = vrot.slane %v480, 1
      %v483 = vsel %vm327, %v478, %v482
      %v485 = vshrl.u32 %v276, 16
      %v487 = vshll.u32 %v276, 16
      %v489 = vrot.slane %v487, 1
      %v490 = vor.u32 %v485, %v489
      %v492 = vshll.u32 %v324, 16
      %v494 = vrot.slane %v492, 1
      %v495 = vsel %vm327, %v490, %v494
      %v497 = vshrl.u32 %v277, 16
      %v499 = vshll.u32 %v277, 16
      %v501 = vrot.slane %v499, 1
      %v502 = vor.u32 %v497, %v501
      %v504 = vshll.u32 %v325, 16
      %v506 = vrot.slane %v504, 1
      %v507 = vsel %vm327, %v502, %v506
      %v509 = vshrl.u32 %v278, 16
      %v511 = vshll.u32 %v278, 16
      %v513 = vrot.slane %v511, 1
      %v514 = vor.u32 %v509, %v513
      %v516 = vshll.u32 %v326, 16
      %v518 = vrot.slane %v516, 1
      %v519 = vsel %vm327, %v514, %v518
      %520 = vrot.lane.b32.xlu0 %v339, 4
      %v521 = vpop.permute.xlu0 %520
      %522 = vrot.lane.b32.xlu0 %v351, 4
      %v523 = vpop.permute.xlu0 %522
      %524 = vrot.lane.b32.xlu0 %v363, 4
      %v525 = vpop.permute.xlu0 %524
      %526 = vrot.lane.b32.xlu0 %v375, 4
      %v527 = vpop.permute.xlu0 %526
      %528 = vrot.lane.b32.xlu0 %v387, 4
      %v529 = vpop.permute.xlu0 %528
      %530 = vrot.lane.b32.xlu0 %v399, 4
      %v531 = vpop.permute.xlu0 %530
      %532 = vrot.lane.b32.xlu0 %v411, 4
      %v533 = vpop.permute.xlu0 %532
      %534 = vrot.lane.b32.xlu0 %v423, 4
      %v535 = vpop.permute.xlu0 %534
      %536 = vrot.lane.b32.xlu0 %v435, 4
      %v537 = vpop.permute.xlu0 %536
      %538 = vrot.lane.b32.xlu0 %v447, 4
      %v539 = vpop.permute.xlu0 %538
      %540 = vrot.lane.b32.xlu0 %v459, 4
      %v541 = vpop.permute.xlu0 %540
      %542 = vrot.lane.b32.xlu0 %v471, 4
      %v543 = vpop.permute.xlu0 %542
      %544 = vrot.lane.b32.xlu0 %v483, 4
      %v545 = vpop.permute.xlu0 %544
      %546 = vrot.lane.b32.xlu0 %v495, 4
      %v547 = vpop.permute.xlu0 %546
      %548 = vrot.lane.b32.xlu0 %v507, 4
      %v549 = vpop.permute.xlu0 %548
      %550 = vrot.lane.b32.xlu0 %v519, 4
      %v551 = vpop.permute.xlu0 %550
      %vm552 = vcmask 1046528
      %v553 = vrot.slane %v263, 1
      %v554 = vrot.slane %v311, 1
      %v555 = vsel %vm552, %v553, %v554
      %v556 = vrot.slane %v264, 1
      %v557 = vrot.slane %v312, 1
      %v558 = vsel %vm552, %v556, %v557
      %v559 = vrot.slane %v265, 1
      %v560 = vrot.slane %v313, 1
      %v561 = vsel %vm552, %v559, %v560
      %v562 = vrot.slane %v266, 1
      %v563 = vrot.slane %v314, 1
      %v564 = vsel %vm552, %v562, %v563
      %v565 = vrot.slane %v267, 1
      %v566 = vrot.slane %v315, 1
      %v567 = vsel %vm552, %v565, %v566
      %v568 = vrot.slane %v268, 1
      %v569 = vrot.slane %v316, 1
      %v570 = vsel %vm552, %v568, %v569
      %v571 = vrot.slane %v269, 1
      %v572 = vrot.slane %v317, 1
      %v573 = vsel %vm552, %v571, %v572
      %v574 = vrot.slane %v270, 1
      %v575 = vrot.slane %v318, 1
      %v576 = vsel %vm552, %v574, %v575
      %v577 = vrot.slane %v271, 1
      %v578 = vrot.slane %v319, 1
      %v579 = vsel %vm552, %v577, %v578
      %v580 = vrot.slane %v272, 1
      %v581 = vrot.slane %v320, 1
      %v582 = vsel %vm552, %v580, %v581
      %v583 = vrot.slane %v273, 1
      %v584 = vrot.slane %v321, 1
      %v585 = vsel %vm552, %v583, %v584
      %v586 = vrot.slane %v274, 1
      %v587 = vrot.slane %v322, 1
      %v588 = vsel %vm552, %v586, %v587
      %v589 = vrot.slane %v275, 1
      %v590 = vrot.slane %v323, 1
      %v591 = vsel %vm552, %v589, %v590
      %v592 = vrot.slane %v276, 1
      %v593 = vrot.slane %v324, 1
      %v594 = vsel %vm552, %v592, %v593
      %v595 = vrot.slane %v277, 1
      %v596 = vrot.slane %v325, 1
      %v597 = vsel %vm552, %v595, %v596
      %v598 = vrot.slane %v278, 1
      %v599 = vrot.slane %v326, 1
      %v600 = vsel %vm552, %v598, %v599
      %601 = vrot.lane.b32.xlu0 %v555, 8
      %v602 = vpop.permute.xlu0 %601
      %603 = vrot.lane.b32.xlu0 %v558, 8
      %v604 = vpop.permute.xlu0 %603
      %605 = vrot.lane.b32.xlu0 %v561, 8
      %v606 = vpop.permute.xlu0 %605
      %607 = vrot.lane.b32.xlu0 %v564, 8
      %v608 = vpop.permute.xlu0 %607
      %609 = vrot.lane.b32.xlu0 %v567, 8
      %v610 = vpop.permute.xlu0 %609
      %611 = vrot.lane.b32.xlu0 %v570, 8
      %v612 = vpop.permute.xlu0 %611
      %613 = vrot.lane.b32.xlu0 %v573, 8
      %v614 = vpop.permute.xlu0 %613
      %615 = vrot.lane.b32.xlu0 %v576, 8
      %v616 = vpop.permute.xlu0 %615
      %617 = vrot.lane.b32.xlu0 %v579, 8
      %v618 = vpop.permute.xlu0 %617
      %619 = vrot.lane.b32.xlu0 %v582, 8
      %v620 = vpop.permute.xlu0 %619
      %621 = vrot.lane.b32.xlu0 %v585, 8
      %v622 = vpop.permute.xlu0 %621
      %623 = vrot.lane.b32.xlu0 %v588, 8
      %v624 = vpop.permute.xlu0 %623
      %625 = vrot.lane.b32.xlu0 %v591, 8
      %v626 = vpop.permute.xlu0 %625
      %627 = vrot.lane.b32.xlu0 %v594, 8
      %v628 = vpop.permute.xlu0 %627
      %629 = vrot.lane.b32.xlu0 %v597, 8
      %v630 = vpop.permute.xlu0 %629
      %631 = vrot.lane.b32.xlu0 %v600, 8
      %v632 = vpop.permute.xlu0 %631
      %v635 = vunpack.c.l.b16 %v193
      %v636 = vunpack.c.l.b16 %v194
      %v637 = vpack.c.b16 %v636, %v635
      %638 = vrot.lane.b32.xlu0 %v264, 12
      %v639 = vpop.permute.xlu0 %638
      %640 = vrot.lane.b32.xlu0 %v265, 12
      %v641 = vpop.permute.xlu0 %640
      %642 = vrot.lane.b32.xlu0 %v266, 12
      %v643 = vpop.permute.xlu0 %642
      %644 = vrot.lane.b32.xlu0 %v267, 12
      %v645 = vpop.permute.xlu0 %644
      %646 = vrot.lane.b32.xlu0 %v268, 12
      %v647 = vpop.permute.xlu0 %646
      %648 = vrot.lane.b32.xlu0 %v269, 12
      %v649 = vpop.permute.xlu0 %648
      %650 = vrot.lane.b32.xlu0 %v270, 12
      %v651 = vpop.permute.xlu0 %650
      %652 = vrot.lane.b32.xlu0 %v271, 12
      %v653 = vpop.permute.xlu0 %652
      %654 = vrot.lane.b32.xlu0 %v272, 12
      %v655 = vpop.permute.xlu0 %654
      %656 = vrot.lane.b32.xlu0 %v273, 12
      %v657 = vpop.permute.xlu0 %656
      %658 = vrot.lane.b32.xlu0 %v274, 12
      %v659 = vpop.permute.xlu0 %658
      %660 = vrot.lane.b32.xlu0 %v275, 12
      %v661 = vpop.permute.xlu0 %660
      %662 = vrot.lane.b32.xlu0 %v276, 12
      %v663 = vpop.permute.xlu0 %662
      %664 = vrot.lane.b32.xlu0 %v277, 12
      %v665 = vpop.permute.xlu0 %664
      %666 = vrot.lane.b32.xlu0 %v278, 12
      %v667 = vpop.permute.xlu0 %666
      %668 = vrot.lane.b32.xlu0 %v637, 12
      %v669 = vpop.permute.xlu0 %668
      %v671 = vunpack.c.l.b16 %v195
      %v672 = vpack.c.b16 %v671, %v671
      %v674 = vshrl.u32 %v637, 16
      %v676 = vshll.u32 %v637, 16
      %v678 = vrot.slane %v676, 1
      %v679 = vor.u32 %v674, %v678
      %v681 = vshll.u32 %v672, 16
      %v683 = vrot.slane %v681, 1
      %v684 = vsel %vm327, %v679, %v683
      %685 = vrot.lane.b32.xlu0 %v351, 16
      %v686 = vpop.permute.xlu0 %685
      %687 = vrot.lane.b32.xlu0 %v363, 16
      %v688 = vpop.permute.xlu0 %687
      %689 = vrot.lane.b32.xlu0 %v375, 16
      %v690 = vpop.permute.xlu0 %689
      %691 = vrot.lane.b32.xlu0 %v387, 16
      %v692 = vpop.permute.xlu0 %691
      %693 = vrot.lane.b32.xlu0 %v399, 16
      %v694 = vpop.permute.xlu0 %693
      %695 = vrot.lane.b32.xlu0 %v411, 16
      %v696 = vpop.permute.xlu0 %695
      %697 = vrot.lane.b32.xlu0 %v423, 16
      %v698 = vpop.permute.xlu0 %697
      %699 = vrot.lane.b32.xlu0 %v435, 16
      %v700 = vpop.permute.xlu0 %699
      %701 = vrot.lane.b32.xlu0 %v447, 16
      %v702 = vpop.permute.xlu0 %701
      %703 = vrot.lane.b32.xlu0 %v459, 16
      %v704 = vpop.permute.xlu0 %703
      %705 = vrot.lane.b32.xlu0 %v471, 16
      %v706 = vpop.permute.xlu0 %705
      %707 = vrot.lane.b32.xlu0 %v483, 16
      %v708 = vpop.permute.xlu0 %707
      %709 = vrot.lane.b32.xlu0 %v495, 16
      %v710 = vpop.permute.xlu0 %709
      %711 = vrot.lane.b32.xlu0 %v507, 16
      %v712 = vpop.permute.xlu0 %711
      %713 = vrot.lane.b32.xlu0 %v519, 16
      %v714 = vpop.permute.xlu0 %713
      %715 = vrot.lane.b32.xlu0 %v684, 16
      %v716 = vpop.permute.xlu0 %715
      %v717 = vrot.slane %v637, 1
      %v718 = vrot.slane %v672, 1
      %v719 = vsel %vm552, %v717, %v718
      %720 = vrot.lane.b32.xlu0 %v558, 20
      %v721 = vpop.permute.xlu0 %720
      %722 = vrot.lane.b32.xlu0 %v561, 20
      %v723 = vpop.permute.xlu0 %722
      %724 = vrot.lane.b32.xlu0 %v564, 20
      %v725 = vpop.permute.xlu0 %724
      %726 = vrot.lane.b32.xlu0 %v567, 20
      %v727 = vpop.permute.xlu0 %726
      %728 = vrot.lane.b32.xlu0 %v570, 20
      %v729 = vpop.permute.xlu0 %728
      %730 = vrot.lane.b32.xlu0 %v573, 20
      %v731 = vpop.permute.xlu0 %730
      %732 = vrot.lane.b32.xlu0 %v576, 20
      %v733 = vpop.permute.xlu0 %732
      %734 = vrot.lane.b32.xlu0 %v579, 20
      %v735 = vpop.permute.xlu0 %734
      %736 = vrot.lane.b32.xlu0 %v582, 20
      %v737 = vpop.permute.xlu0 %736
      %738 = vrot.lane.b32.xlu0 %v585, 20
      %v739 = vpop.permute.xlu0 %738
      %740 = vrot.lane.b32.xlu0 %v588, 20
      %v741 = vpop.permute.xlu0 %740
      %742 = vrot.lane.b32.xlu0 %v591, 20
      %v743 = vpop.permute.xlu0 %742
      %744 = vrot.lane.b32.xlu0 %v594, 20
      %v745 = vpop.permute.xlu0 %744
      %746 = vrot.lane.b32.xlu0 %v597, 20
      %v747 = vpop.permute.xlu0 %746
      %748 = vrot.lane.b32.xlu0 %v600, 20
      %v749 = vpop.permute.xlu0 %748
      %750 = vrot.lane.b32.xlu0 %v719, 20
      %v751 = vpop.permute.xlu0 %750
      %v754 = vunpack.c.l.b16 %v196
      %v755 = vunpack.c.l.b16 %v197
      %v756 = vpack.c.b16 %v755, %v754
      %757 = vrot.lane.b32.xlu0 %v265, 24
      %v758 = vpop.permute.xlu0 %757
      %759 = vrot.lane.b32.xlu0 %v266, 24
      %v760 = vpop.permute.xlu0 %759
      %761 = vrot.lane.b32.xlu0 %v267, 24
      %v762 = vpop.permute.xlu0 %761
      %763 = vrot.lane.b32.xlu0 %v268, 24
      %v764 = vpop.permute.xlu0 %763
      %765 = vrot.lane.b32.xlu0 %v269, 24
      %v766 = vpop.permute.xlu0 %765
      %767 = vrot.lane.b32.xlu0 %v270, 24
      %v768 = vpop.permute.xlu0 %767
      %769 = vrot.lane.b32.xlu0 %v271, 24
      %v770 = vpop.permute.xlu0 %769
      %771 = vrot.lane.b32.xlu0 %v272, 24
      %v772 = vpop.permute.xlu0 %771
      %773 = vrot.lane.b32.xlu0 %v273, 24
      %v774 = vpop.permute.xlu0 %773
      %775 = vrot.lane.b32.xlu0 %v274, 24
      %v776 = vpop.permute.xlu0 %775
      %777 = vrot.lane.b32.xlu0 %v275, 24
      %v778 = vpop.permute.xlu0 %777
      %779 = vrot.lane.b32.xlu0 %v276, 24
      %v780 = vpop.permute.xlu0 %779
      %781 = vrot.lane.b32.xlu0 %v277, 24
      %v782 = vpop.permute.xlu0 %781
      %783 = vrot.lane.b32.xlu0 %v278, 24
      %v784 = vpop.permute.xlu0 %783
      %785 = vrot.lane.b32.xlu0 %v637, 24
      %v786 = vpop.permute.xlu0 %785
      %787 = vrot.lane.b32.xlu0 %v756, 24
      %v788 = vpop.permute.xlu0 %787
      %v790 = vunpack.c.l.b16 %v198
      %v791 = vpack.c.b16 %v790, %v790
      %v793 = vshrl.u32 %v756, 16
      %v795 = vshll.u32 %v756, 16
      %v797 = vrot.slane %v795, 1
      %v798 = vor.u32 %v793, %v797
      %v800 = vshll.u32 %v791, 16
      %v802 = vrot.slane %v800, 1
      %v803 = vsel %vm327, %v798, %v802
      %804 = vrot.lane.b32.xlu0 %v363, 28
      %v805 = vpop.permute.xlu0 %804
      %806 = vrot.lane.b32.xlu0 %v375, 28
      %v807 = vpop.permute.xlu0 %806
      %808 = vrot.lane.b32.xlu0 %v387, 28
      %v809 = vpop.permute.xlu0 %808
      %810 = vrot.lane.b32.xlu0 %v399, 28
      %v811 = vpop.permute.xlu0 %810
      %812 = vrot.lane.b32.xlu0 %v411, 28
      %v813 = vpop.permute.xlu0 %812
      %814 = vrot.lane.b32.xlu0 %v423, 28
      %v815 = vpop.permute.xlu0 %814
      %816 = vrot.lane.b32.xlu0 %v435, 28
      %v817 = vpop.permute.xlu0 %816
      %818 = vrot.lane.b32.xlu0 %v447, 28
      %v819 = vpop.permute.xlu0 %818
      %820 = vrot.lane.b32.xlu0 %v459, 28
      %v821 = vpop.permute.xlu0 %820
      %822 = vrot.lane.b32.xlu0 %v471, 28
      %v823 = vpop.permute.xlu0 %822
      %824 = vrot.lane.b32.xlu0 %v483, 28
      %v825 = vpop.permute.xlu0 %824
      %826 = vrot.lane.b32.xlu0 %v495, 28
      %v827 = vpop.permute.xlu0 %826
      %828 = vrot.lane.b32.xlu0 %v507, 28
      %v829 = vpop.permute.xlu0 %828
      %830 = vrot.lane.b32.xlu0 %v519, 28
      %v831 = vpop.permute.xlu0 %830
      %832 = vrot.lane.b32.xlu0 %v684, 28
      %v833 = vpop.permute.xlu0 %832
      %834 = vrot.lane.b32.xlu0 %v803, 28
      %v835 = vpop.permute.xlu0 %834
      %v836 = vrot.slane %v756, 1
      %v837 = vrot.slane %v791, 1
      %v838 = vsel %vm552, %v836, %v837
      %839 = vrot.lane.b32.xlu0 %v561, 32
      %v840 = vpop.permute.xlu0 %839
      %841 = vrot.lane.b32.xlu0 %v564, 32
      %v842 = vpop.permute.xlu0 %841
      %843 = vrot.lane.b32.xlu0 %v567, 32
      %v844 = vpop.permute.xlu0 %843
      %845 = vrot.lane.b32.xlu0 %v570, 32
      %v846 = vpop.permute.xlu0 %845
      %847 = vrot.lane.b32.xlu0 %v573, 32
      %v848 = vpop.permute.xlu0 %847
      %849 = vrot.lane.b32.xlu0 %v576, 32
      %v850 = vpop.permute.xlu0 %849
      %851 = vrot.lane.b32.xlu0 %v579, 32
      %v852 = vpop.permute.xlu0 %851
      %853 = vrot.lane.b32.xlu0 %v582, 32
      %v854 = vpop.permute.xlu0 %853
      %855 = vrot.lane.b32.xlu0 %v585, 32
      %v856 = vpop.permute.xlu0 %855
      %857 = vrot.lane.b32.xlu0 %v588, 32
      %v858 = vpop.permute.xlu0 %857
      %859 = vrot.lane.b32.xlu0 %v591, 32
      %v860 = vpop.permute.xlu0 %859
      %861 = vrot.lane.b32.xlu0 %v594, 32
      %v862 = vpop.permute.xlu0 %861
      %863 = vrot.lane.b32.xlu0 %v597, 32
      %v864 = vpop.permute.xlu0 %863
      %865 = vrot.lane.b32.xlu0 %v600, 32
      %v866 = vpop.permute.xlu0 %865
      %867 = vrot.lane.b32.xlu0 %v719, 32
      %v868 = vpop.permute.xlu0 %867
      %869 = vrot.lane.b32.xlu0 %v838, 32
      %v870 = vpop.permute.xlu0 %869
      %vm871 = vcmask 31744
      %v873 = vsel %vm871, %v263, %v521
      %v875 = vsel %vm871, %v264, %v523
      %v877 = vsel %vm871, %v265, %v525
      %v879 = vsel %vm871, %v266, %v527
      %v881 = vsel %vm871, %v267, %v529
      %v883 = vsel %vm871, %v268, %v531
      %v885 = vsel %vm871, %v269, %v533
      %v887 = vsel %vm871, %v270, %v535
      %v889 = vsel %vm871, %v271, %v537
      %v891 = vsel %vm871, %v272, %v539
      %v893 = vsel %vm871, %v273, %v541
      %v895 = vsel %vm871, %v274, %v543
      %v897 = vsel %vm871, %v275, %v545
      %v899 = vsel %vm871, %v276, %v547
      %v901 = vsel %vm871, %v277, %v549
      %v903 = vsel %vm871, %v278, %v551
      %vm904 = vcmask 64512
      %v906 = vsel %vm904, %v873, %v602
      %v908 = vsel %vm904, %v875, %v604
      %v910 = vsel %vm904, %v877, %v606
      %v912 = vsel %vm904, %v879, %v608
      %v914 = vsel %vm904, %v881, %v610
      %v916 = vsel %vm904, %v883, %v612
      %v918 = vsel %vm904, %v885, %v614
      %v920 = vsel %vm904, %v887, %v616
      %v922 = vsel %vm904, %v889, %v618
      %v924 = vsel %vm904, %v891, %v620
      %v926 = vsel %vm904, %v893, %v622
      %v928 = vsel %vm904, %v895, %v624
      %v930 = vsel %vm904, %v897, %v626
      %v932 = vsel %vm904, %v899, %v628
      %v934 = vsel %vm904, %v901, %v630
      %v936 = vsel %vm904, %v903, %v632
      %vm937 = vcmask 97280
      %v939 = vsel %vm937, %v906, %v639
      %v941 = vsel %vm937, %v908, %v641
      %v943 = vsel %vm937, %v910, %v643
      %v945 = vsel %vm937, %v912, %v645
      %v947 = vsel %vm937, %v914, %v647
      %v949 = vsel %vm937, %v916, %v649
      %v951 = vsel %vm937, %v918, %v651
      %v953 = vsel %vm937, %v920, %v653
      %v955 = vsel %vm937, %v922, %v655
      %v957 = vsel %vm937, %v924, %v657
      %v959 = vsel %vm937, %v926, %v659
      %v961 = vsel %vm937, %v928, %v661
      %v963 = vsel %vm937, %v930, %v663
      %v965 = vsel %vm937, %v932, %v665
      %v967 = vsel %vm937, %v934, %v667
      %v969 = vsel %vm937, %v936, %v669
      %vm970 = vcmask 130048
      %v972 = vsel %vm970, %v939, %v686
      %v974 = vsel %vm970, %v941, %v688
      %v976 = vsel %vm970, %v943, %v690
      %v978 = vsel %vm970, %v945, %v692
      %v980 = vsel %vm970, %v947, %v694
      %v982 = vsel %vm970, %v949, %v696
      %v984 = vsel %vm970, %v951, %v698
      %v986 = vsel %vm970, %v953, %v700
      %v988 = vsel %vm970, %v955, %v702
      %v990 = vsel %vm970, %v957, %v704
      %v992 = vsel %vm970, %v959, %v706
      %v994 = vsel %vm970, %v961, %v708
      %v996 = vsel %vm970, %v963, %v710
      %v998 = vsel %vm970, %v965, %v712
      %v1000 = vsel %vm970, %v967, %v714
      %v1002 = vsel %vm970, %v969, %v716
      %vm1003 = vcmask 162816
      %v1005 = vsel %vm1003, %v972, %v721
      %v1007 = vsel %vm1003, %v974, %v723
      %v1009 = vsel %vm1003, %v976, %v725
      %v1011 = vsel %vm1003, %v978, %v727
      %v1013 = vsel %vm1003, %v980, %v729
      %v1015 = vsel %vm1003, %v982, %v731
      %v1017 = vsel %vm1003, %v984, %v733
      %v1019 = vsel %vm1003, %v986, %v735
      %v1021 = vsel %vm1003, %v988, %v737
      %v1023 = vsel %vm1003, %v990, %v739
      %v1025 = vsel %vm1003, %v992, %v741
      %v1027 = vsel %vm1003, %v994, %v743
      %v1029 = vsel %vm1003, %v996, %v745
      %v1031 = vsel %vm1003, %v998, %v747
      %v1033 = vsel %vm1003, %v1000, %v749
      %v1035 = vsel %vm1003, %v1002, %v751
      %vm1036 = vcmask 195584
      %v1038 = vsel %vm1036, %v1005, %v758
      %v1040 = vsel %vm1036, %v1007, %v760
      %v1042 = vsel %vm1036, %v1009, %v762
      %v1044 = vsel %vm1036, %v1011, %v764
      %v1046 = vsel %vm1036, %v1013, %v766
      %v1048 = vsel %vm1036, %v1015, %v768
      %v1050 = vsel %vm1036, %v1017, %v770
      %v1052 = vsel %vm1036, %v1019, %v772
      %v1054 = vsel %vm1036, %v1021, %v774
      %v1056 = vsel %vm1036, %v1023, %v776
      %v1058 = vsel %vm1036, %v1025, %v778
      %v1060 = vsel %vm1036, %v1027, %v780
      %v1062 = vsel %vm1036, %v1029, %v782
      %v1064 = vsel %vm1036, %v1031, %v784
      %v1066 = vsel %vm1036, %v1033, %v786
      %v1068 = vsel %vm1036, %v1035, %v788
      %vm1069 = vcmask 228352
      %v1071 = vsel %vm1069, %v1038, %v805
      %v1073 = vsel %vm1069, %v1040, %v807
      %v1075 = vsel %vm1069, %v1042, %v809
      %v1077 = vsel %vm1069, %v1044, %v811
      %v1079 = vsel %vm1069, %v1046, %v813
      %v1081 = vsel %vm1069, %v1048, %v815
      %v1083 = vsel %vm1069, %v1050, %v817
      %v1085 = vsel %vm1069, %v1052, %v819
      %v1087 = vsel %vm1069, %v1054, %v821
      %v1089 = vsel %vm1069, %v1056, %v823
      %v1091 = vsel %vm1069, %v1058, %v825
      %v1093 = vsel %vm1069, %v1060, %v827
      %v1095 = vsel %vm1069, %v1062, %v829
      %v1097 = vsel %vm1069, %v1064, %v831
      %v1099 = vsel %vm1069, %v1066, %v833
      %v1101 = vsel %vm1069, %v1068, %v835
      %vm1102 = vcmask 261120
      %v1104 = vsel %vm1102, %v1071, %v840
      %v1106 = vsel %vm1102, %v1073, %v842
      %v1108 = vsel %vm1102, %v1075, %v844
      %v1110 = vsel %vm1102, %v1077, %v846
      %v1112 = vsel %vm1102, %v1079, %v848
      %v1114 = vsel %vm1102, %v1081, %v850
      %v1116 = vsel %vm1102, %v1083, %v852
      %v1118 = vsel %vm1102, %v1085, %v854
      %v1120 = vsel %vm1102, %v1087, %v856
      %v1122 = vsel %vm1102, %v1089, %v858
      %v1124 = vsel %vm1102, %v1091, %v860
      %v1126 = vsel %vm1102, %v1093, %v862
      %v1128 = vsel %vm1102, %v1095, %v864
      %v1130 = vsel %vm1102, %v1097, %v866
      %v1132 = vsel %vm1102, %v1099, %v868
      %v1134 = vsel %vm1102, %v1101, %v870
      %v1135 = vld [vmem:[%s1] sm:$0xf]
      %v1136 = vld [vmem:[%s1 + $0x4] sm:$0xf]
      %v1137 = vld [vmem:[%s1 + $0x8] sm:$0xf]
      %v1138 = vld [vmem:[%s1 + $0xc] sm:$0xf]
      %v1139 = vld [vmem:[%s1 + $0x10] sm:$0x3]
      %v1145 = vunpack.c.l.b16 %v1135
      %v1146 = vunpack.c.l.b16 %v1136
      %v1147 = vunpack.c.l.b16 %v1137
      %v1148 = vunpack.c.l.b16 %v1138
      %v1149 = vunpack.c.l.b16 %v1139
      %v1150 = vpack.c.b16 %v1146, %v1145
      %v1151 = vpack.c.b16 %v1148, %v1147
      %v1152 = vpack.c.b16 %v1149, %v1149
      %vm1155 = vcmask 293888
      %v1156 = vsel %vm1155, %v1104, 0
      %v1158 = vsel %vm1155, %v1106, 0
      %v1160 = vsel %vm1155, %v1108, 0
      %v1162 = vsel %vm1155, %v1110, 0
      %v1164 = vsel %vm1155, %v1112, 0
      %v1166 = vsel %vm1155, %v1114, 0
      %v1168 = vsel %vm1155, %v1116, 0
      %v1170 = vsel %vm1155, %v1118, 0
      %v1172 = vsel %vm1155, %v1120, 0
      %v1174 = vsel %vm1155, %v1122, 0
      %v1176 = vsel %vm1155, %v1124, 0
      %v1178 = vsel %vm1155, %v1126, 0
      %v1180 = vsel %vm1155, %v1128, 0
      %v1182 = vsel %vm1155, %v1130, 0
      %v1184 = vsel %vm1155, %v1132, 0
      %v1186 = vsel %vm1155, %v1134, 0
      %vm1188 = vcmask 1041408
      %v1190 = vsel %vm1188, %v1152, 0
      %1192 = vmatprep.subr.bf16.mxu0 0
      %1193 = vmatpush1.bf16.msra.mxu0 0
      %1194 = vmatprep.subr.bf16.mxu0 0
      %1195 = vmatpush1.bf16.msra.mxu0 0
      %1196 = vmatprep.subr.bf16.mxu0 0
      %1197 = vmatpush1.bf16.msra.mxu0 0
      %1198 = vmatprep.subr.bf16.mxu0 0
      %1199 = vmatpush1.bf16.msra.mxu0 0
      %1200 = vmatprep.subr.bf16.mxu0 0
      %1201 = vmatpush1.bf16.msra.mxu0 0
      %1202 = vmatprep.subr.bf16.mxu0 0
      %1203 = vmatpush1.bf16.msra.mxu0 %v1190
      %1204 = vmatprep.subr.bf16.mxu0 0
      %1205 = vmatpush1.bf16.msra.mxu0 %v1151
      %1206 = vmatprep.subr.bf16.mxu0 0
      %1207 = vmatpush1.bf16.msra.mxu0 %v1150
      %1208 = vmatprep.subr.bf16.mxu0 0
      %1209 = vmatpush2.bf16.msra.mxu0 0
      %1210 = vmatprep.subr.bf16.mxu0 0
      %1211 = vmatpush2.bf16.msra.mxu0 0
      %1212 = vmatprep.subr.bf16.mxu0 0
      %1213 = vmatpush2.bf16.msra.mxu0 0
      %1214 = vmatprep.subr.bf16.mxu0 0
      %1215 = vmatpush2.bf16.msra.mxu0 0
      %1216 = vmatprep.subr.bf16.mxu0 0
      %1217 = vmatpush2.bf16.msra.mxu0 0
      %1218 = vmatprep.subr.bf16.mxu0 0
      %1219 = vmatpush2.bf16.msra.mxu0 0
      %1220 = vmatprep.subr.bf16.mxu0 0
      %1221 = vmatpush2.bf16.msra.mxu0 0
      %1222 = vmatprep.subr.bf16.mxu0 0
      %1223 = vmatpush2.bf16.msra.mxu0 0
      %1224 = vmatprep.mubr.bf16.mxu0 0
      %1225 = vmatmul.mubr.bf16.gmra.mxu0 %v1156
      %v1226 = vpop.f32.mrf.mxu0
      %v1227 = vadd.f32 0.0, %v1226
      %v1228 = vpop.f32.mrf.mxu0
      %v1229 = vpop.f32.mrf.mxu0
      %v1230 = vadd.f32 0.0, %v1229
      %v1231 = vpop.f32.mrf.mxu0
      %1232 = vmatprep.mubr.bf16.mxu0 0
      %1233 = vmatmul.mubr.bf16.gmra.mxu0 %v1158
      %v1234 = vpop.f32.mrf.mxu0
      %v1235 = vadd.f32 0.0, %v1234
      %v1236 = vpop.f32.mrf.mxu0
      %v1237 = vpop.f32.mrf.mxu0
      %v1238 = vadd.f32 0.0, %v1237
      %v1239 = vpop.f32.mrf.mxu0
      %1240 = vmatprep.mubr.bf16.mxu0 0
      %1241 = vmatmul.mubr.bf16.gmra.mxu0 %v1160
      %v1242 = vpop.f32.mrf.mxu0
      %v1243 = vadd.f32 0.0, %v1242
      %v1244 = vpop.f32.mrf.mxu0
      %v1245 = vpop.f32.mrf.mxu0
      %v1246 = vadd.f32 0.0, %v1245
      %v1247 = vpop.f32.mrf.mxu0
      %1248 = vmatprep.mubr.bf16.mxu0 0
      %1249 = vmatmul.mubr.bf16.gmra.mxu0 %v1162
      %v1250 = vpop.f32.mrf.mxu0
      %v1251 = vadd.f32 0.0, %v1250
      %v1252 = vpop.f32.mrf.mxu0
      %v1253 = vpop.f32.mrf.mxu0
      %v1254 = vadd.f32 0.0, %v1253
      %v1255 = vpop.f32.mrf.mxu0
      %1256 = vmatprep.mubr.bf16.mxu0 0
      %1257 = vmatmul.mubr.bf16.gmra.mxu0 %v1164
      %v1258 = vpop.f32.mrf.mxu0
      %v1259 = vadd.f32 0.0, %v1258
      %v1260 = vpop.f32.mrf.mxu0
      %v1261 = vpop.f32.mrf.mxu0
      %v1262 = vadd.f32 0.0, %v1261
      %v1263 = vpop.f32.mrf.mxu0
      %1264 = vmatprep.mubr.bf16.mxu0 0
      %1265 = vmatmul.mubr.bf16.gmra.mxu0 %v1166
      %v1266 = vpop.f32.mrf.mxu0
      %v1267 = vadd.f32 0.0, %v1266
      %v1268 = vpop.f32.mrf.mxu0
      %v1269 = vpop.f32.mrf.mxu0
      %v1270 = vadd.f32 0.0, %v1269
      %v1271 = vpop.f32.mrf.mxu0
      %1272 = vmatprep.mubr.bf16.mxu0 0
      %1273 = vmatmul.mubr.bf16.gmra.mxu0 %v1168
      %v1274 = vpop.f32.mrf.mxu0
      %v1275 = vadd.f32 0.0, %v1274
      %v1276 = vpop.f32.mrf.mxu0
      %v1277 = vpop.f32.mrf.mxu0
      %v1278 = vadd.f32 0.0, %v1277
      %v1279 = vpop.f32.mrf.mxu0
      %1280 = vmatprep.mubr.bf16.mxu0 0
      %1281 = vmatmul.mubr.bf16.gmra.mxu0 %v1170
      %v1282 = vpop.f32.mrf.mxu0
      %v1283 = vadd.f32 0.0, %v1282
      %v1284 = vpop.f32.mrf.mxu0
      %v1285 = vpop.f32.mrf.mxu0
      %v1286 = vadd.f32 0.0, %v1285
      %v1287 = vpop.f32.mrf.mxu0
      %1288 = vmatprep.mubr.bf16.mxu0 0
      %1289 = vmatmul.mubr.bf16.gmra.mxu0 %v1172
      %v1290 = vpop.f32.mrf.mxu0
      %v1291 = vadd.f32 0.0, %v1290
      %v1292 = vpop.f32.mrf.mxu0
      %v1293 = vpop.f32.mrf.mxu0
      %v1294 = vadd.f32 0.0, %v1293
      %v1295 = vpop.f32.mrf.mxu0
      %1296 = vmatprep.mubr.bf16.mxu0 0
      %1297 = vmatmul.mubr.bf16.gmra.mxu0 %v1174
      %v1298 = vpop.f32.mrf.mxu0
      %v1299 = vadd.f32 0.0, %v1298
      %v1300 = vpop.f32.mrf.mxu0
      %v1301 = vpop.f32.mrf.mxu0
      %v1302 = vadd.f32 0.0, %v1301
      %v1303 = vpop.f32.mrf.mxu0
      %1304 = vmatprep.mubr.bf16.mxu0 0
      %1305 = vmatmul.mubr.bf16.gmra.mxu0 %v1176
      %v1306 = vpop.f32.mrf.mxu0
      %v1307 = vadd.f32 0.0, %v1306
      %v1308 = vpop.f32.mrf.mxu0
      %v1309 = vpop.f32.mrf.mxu0
      %v1310 = vadd.f32 0.0, %v1309
      %v1311 = vpop.f32.mrf.mxu0
      %1312 = vmatprep.mubr.bf16.mxu0 0
      %1313 = vmatmul.mubr.bf16.gmra.mxu0 %v1178
      %v1314 = vpop.f32.mrf.mxu0
      %v1315 = vadd.f32 0.0, %v1314
      %v1316 = vpop.f32.mrf.mxu0
      %v1317 = vpop.f32.mrf.mxu0
      %v1318 = vadd.f32 0.0, %v1317
      %v1319 = vpop.f32.mrf.mxu0
      %1320 = vmatprep.mubr.bf16.mxu0 0
      %1321 = vmatmul.mubr.bf16.gmra.mxu0 %v1180
      %v1322 = vpop.f32.mrf.mxu0
      %v1323 = vadd.f32 0.0, %v1322
      %v1324 = vpop.f32.mrf.mxu0
      %v1325 = vpop.f32.mrf.mxu0
      %v1326 = vadd.f32 0.0, %v1325
      %v1327 = vpop.f32.mrf.mxu0
      %1328 = vmatprep.mubr.bf16.mxu0 0
      %1329 = vmatmul.mubr.bf16.gmra.mxu0 %v1182
      %v1330 = vpop.f32.mrf.mxu0
      %v1331 = vadd.f32 0.0, %v1330
      %v1332 = vpop.f32.mrf.mxu0
      %v1333 = vpop.f32.mrf.mxu0
      %v1334 = vadd.f32 0.0, %v1333
      %v1335 = vpop.f32.mrf.mxu0
      %1336 = vmatprep.mubr.bf16.mxu0 0
      %1337 = vmatmul.mubr.bf16.gmra.mxu0 %v1184
      %v1338 = vpop.f32.mrf.mxu0
      %v1339 = vadd.f32 0.0, %v1338
      %v1340 = vpop.f32.mrf.mxu0
      %v1341 = vpop.f32.mrf.mxu0
      %v1342 = vadd.f32 0.0, %v1341
      %v1343 = vpop.f32.mrf.mxu0
      %1344 = vmatprep.mubr.bf16.mxu0 0
      %1345 = vmatmul.mubr.bf16.gmra.mxu0 %v1186
      %v1346 = vpop.f32.mrf.mxu0
      %v1347 = vadd.f32 0.0, %v1346
      %v1348 = vpop.f32.mrf.mxu0
      %v1349 = vpop.f32.mrf.mxu0
      %v1350 = vadd.f32 0.0, %v1349
      %v1351 = vpop.f32.mrf.mxu0
      %1352 = vdwg.mxu0
      %1353 = vst.msk [vmem:[%s143] sm:$0xff] %vm970, %v1227
      %1354 = vst.msk [vmem:[%s143 + $0x8] sm:$0xff] %vm970, %v1230
      %1355 = vst.msk [vmem:[%s143 + $0x10] sm:$0xff] %vm970, %v1235
      %1356 = vst.msk [vmem:[%s143 + $0x18] sm:$0xff] %vm970, %v1238
      %1357 = vst.msk [vmem:[%s143 + $0x20] sm:$0xff] %vm970, %v1243
      %1358 = vst.msk [vmem:[%s143 + $0x28] sm:$0xff] %vm970, %v1246
      %1359 = vst.msk [vmem:[%s143 + $0x30] sm:$0xff] %vm970, %v1251
      %1360 = vst.msk [vmem:[%s143 + $0x38] sm:$0xff] %vm970, %v1254
      %1361 = vst.msk [vmem:[%s143 + $0x40] sm:$0xff] %vm970, %v1259
      %1362 = vst.msk [vmem:[%s143 + $0x48] sm:$0xff] %vm970, %v1262
      %1363 = vst.msk [vmem:[%s143 + $0x50] sm:$0xff] %vm970, %v1267
      %1364 = vst.msk [vmem:[%s143 + $0x58] sm:$0xff] %vm970, %v1270
      %1365 = vst.msk [vmem:[%s143 + $0x60] sm:$0xff] %vm970, %v1275
      %1366 = vst.msk [vmem:[%s143 + $0x68] sm:$0xff] %vm970, %v1278
      %1367 = vst.msk [vmem:[%s143 + $0x70] sm:$0xff] %vm970, %v1283
      %1368 = vst.msk [vmem:[%s143 + $0x78] sm:$0xff] %vm970, %v1286
      %1369 = vst.msk [vmem:[%s143 + $0x80] sm:$0xff] %vm970, %v1291
      %1370 = vst.msk [vmem:[%s143 + $0x88] sm:$0xff] %vm970, %v1294
      %1371 = vst.msk [vmem:[%s143 + $0x90] sm:$0xff] %vm970, %v1299
      %1372 = vst.msk [vmem:[%s143 + $0x98] sm:$0xff] %vm970, %v1302
      %1373 = vst.msk [vmem:[%s143 + $0xa0] sm:$0xff] %vm970, %v1307
      %1374 = vst.msk [vmem:[%s143 + $0xa8] sm:$0xff] %vm970, %v1310
      %1375 = vst.msk [vmem:[%s143 + $0xb0] sm:$0xff] %vm970, %v1315
      %1376 = vst.msk [vmem:[%s143 + $0xb8] sm:$0xff] %vm970, %v1318
      %1377 = vst.msk [vmem:[%s143 + $0xc0] sm:$0xff] %vm970, %v1323
      %1378 = vst.msk [vmem:[%s143 + $0xc8] sm:$0xff] %vm970, %v1326
      %1379 = vst.msk [vmem:[%s143 + $0xd0] sm:$0xff] %vm970, %v1331
      %1380 = vst.msk [vmem:[%s143 + $0xd8] sm:$0xff] %vm970, %v1334
      %1381 = vst.msk [vmem:[%s143 + $0xe0] sm:$0xff] %vm970, %v1339
      %1382 = vst.msk [vmem:[%s143 + $0xe8] sm:$0xff] %vm970, %v1342
      %1383 = vst.msk [vmem:[%s143 + $0xf0] sm:$0xff] %vm970, %v1347
      %1384 = vst.msk [vmem:[%s143 + $0xf8] sm:$0xff] %vm970, %v1350
      %p1385 = scmp.lt.s32.totalorder %s13, 1
      %s1386 = scalar_select %p1385, %s13, 1
      %s1387 = smul.addr %s1386, 32
      %s1388 = smul.addr %s1387, 8
      %s1389 = scalar_lea.vmem %s2, %s1388
      // Predicated region
      $region29: #{n3block_forward.3} parent=27 // pred_check
        %p1390 = pneg %p78
      $region30: #{n3block_forward.3} parent=27 // pred_check_branch
        %1392 = sbr.rel (%p1390) target = $region32
      $region31: #{n3block_forward.3} parent=27 // pred_region
        _
      $region32: #{n3block_forward.3} parent=27 // pred_fallthru
        _
    $region28: #{n3block_forward.3} parent=5 // pred_fallthru
      _
    %p1393 = scmp.le.s32.totalorder 2, %s8
    // Predicated region
    $region33: #{n3block_forward.3} parent=5 // pred_check
      %p1394 = pneg %p1393
    $region34: #{n3block_forward.3} parent=5 // pred_check_branch
      %1396 = sbr.rel (%p1394) target = $region36
    $region35: #{n3block_forward.3} parent=5 // pred_region
      %s1397 = ssub.s32 %s8, 2
      // Predicated region
      $region37: #{n3block_forward.3} parent=35 // pred_check
        %p1398 = pneg %p84
      $region38: #{n3block_forward.3} parent=35 // pred_check_branch
        %1400 = sbr.rel (%p1398) target = $region40
      $region39: #{n3block_forward.3} parent=35 // pred_region
        %p1401 = scmp.lt.s32.totalorder %s14, 1
        %s1402 = scalar_select %p1401, %s14, 1
        %s1403 = smul.addr %s1402, 32
        %s1404 = smul.addr %s1403, 8
        %s1405 = scalar_lea.vmem %s2, %s1404
      $region40: #{n3block_forward.3} parent=35 // pred_fallthru
        _
    $region36: #{n3block_forward.3} parent=5 // pred_fallthru
      _
  $region6: #{n3block_forward.3} parent=0 // loop_footer
    %s12 = sadd.s32 1, %s8
  $region7: #{n3block_forward.3} parent=0 // loop_footer_branch
    %7 = sbr.rel target = $region3
  $region8: #{n3block_forward.3} parent=0 // loop_exit
    _

// kernel: n3block_forward.4
$region0: #{n3block_forward.4}
  #allocation0 [shape = 'u32[]', space=smem, size = 0x4, offset = 0x4, fixed_abs, tag = 'smem constant byte address 0x4 - core index']
  #allocation1 [shape = 'u32[144,128]{1,0:T(1,128)}', space=vmem, size = 0x12000, scoped, tag = 'internal scratch']
  %s0 = inlined_call_operand.vmem [shape: f32[2,18,18,16], index: 0, kind: input, shape index: {}]
  %s1 = inlined_call_operand.vmem [shape: f32[18,18,1], index: 1, kind: input, shape index: {}]
  %s2 = inlined_call_operand.vmem [shape: f32[1,16], index: 2, kind: input, shape index: {}]
  %s3 = inlined_call_operand.vmem [shape: f32[1,16], index: 3, kind: input, shape index: {}]
  %s4 = inlined_call_operand.vmem [shape: bf16[144,9], index: 4, kind: input, shape index: {}]
  %s5 = inlined_call_operand.vmem [shape: f32[1,9], index: 5, kind: input, shape index: {}]
  %s6 = inlined_call_operand.vmem [shape: f32[2,256,9], index: 6, kind: output, shape index: {}]
  %s7 = sld [smem:[#allocation0]]
  $region57: #{n3block_forward.4} parent=0
    _
  %s9 = ssub.s32 1, %s7
  %s10 = scalar_select 0, %s9, %s7
  loop: start=0, step=1, limit=4
  $region2: #{n3block_forward.4} parent=0 // loop_pre_header
    _
  $region3: #{n3block_forward.4} parent=0 // loop_header
    %s12 = sphi 0, %s16
    %p13 = scmp.ge.s32.totalorder %s12, 4
    %s22 = sphi 0, %s24
    %s25 = sphi 0, %s22
    %s26 = sphi 0, %s25
    %s42 = sphi 0, %s26
    %s46 = sphi 0, %s46
    %s48 = sphi 0, %s46
    %s49 = sphi 0, %s48
    %s63 = sphi 0, %s49
    %s67 = sphi 0, %s67
    %s69 = sphi 0, %s67
    %s70 = sphi 0, %s69
    %s84 = sphi 0, %s70
    %s88 = sphi 0, %s88
    %s90 = sphi 0, %s88
    %s91 = sphi 0, %s90
    %s105 = sphi 0, %s91
    %s109 = sphi 0, %s109
    %s111 = sphi 0, %s109
    %s112 = sphi 0, %s111
    %s126 = sphi 0, %s112
    %s130 = sphi 0, %s130
    %s132 = sphi 0, %s130
    %s133 = sphi 0, %s132
    %s147 = sphi 0, %s133
    %s153 = sphi 0, %s155
    %s156 = sphi 0, %s153
    %s157 = sphi 0, %s156
    %s173 = sphi 0, %s157
  $region4: #{n3block_forward.4} parent=0 // loop_header_branch
    %15 = sbr.rel (%p13) target = $region8
  $region5: #{n3block_forward.4} parent=0 // loop_body
    %s17 = ssub.s32 %s12, 1
    %s18 = ssub.s32 %s12, 2
    %s19 = sadd.s32 %s12, 1
    %s20 = ssub.s32 %s12, %s19
    %p21 = scmp.eq.s32.totalorder %s20, 0
    %s23 = sadd.s32 %s22, 1
    %s24 = scalar_select %p21, %s22, %s23
    %p27 = pneg %p21
    %p28 = scmp.eq.s32.totalorder %s12, 1
    %p29 = por %p27, %p28
    %p30 = scmp.ne.s32.totalorder %s22, %s25
    %p31 = scmp.eq.s32.totalorder %s12, 0
    %p32 = por %p30, %p31
    %p33 = scmp.ne.s32.totalorder %s22, %s25
    %p34 = scmp.eq.s32.totalorder %s17, 1
    %p35 = por %p33, %p34
    %p36 = scmp.ne.s32.totalorder %s25, %s26
    %p37 = scmp.eq.s32.totalorder %s17, 0
    %p38 = por %p36, %p37
    %p39 = scmp.ne.s32.totalorder %s25, %s26
    %p40 = scmp.eq.s32.totalorder %s18, 1
    %p41 = por %p39, %p40
    %p43 = scmp.ne.s32.totalorder %s26, %s42
    %p44 = scmp.eq.s32.totalorder %s18, 0
    %p45 = por %p43, %p44
    %s47 = sadd.s32 %s46, 1
    %p50 = scmp.eq.s32.totalorder %s12, 1
    %p51 = scmp.ne.s32.totalorder %s46, %s48
    %p52 = scmp.eq.s32.totalorder %s12, 0
    %p53 = por %p51, %p52
    %p54 = scmp.ne.s32.totalorder %s46, %s48
    %p55 = scmp.eq.s32.totalorder %s17, 1
    %p56 = por %p54, %p55
    %p57 = scmp.ne.s32.totalorder %s48, %s49
    %p58 = scmp.eq.s32.totalorder %s17, 0
    %p59 = por %p57, %p58
    %p60 = scmp.ne.s32.totalorder %s48, %s49
    %p61 = scmp.eq.s32.totalorder %s18, 1
    %p62 = por %p60, %p61
    %p64 = scmp.ne.s32.totalorder %s49, %s63
    %p65 = scmp.eq.s32.totalorder %s18, 0
    %p66 = por %p64, %p65
    %s68 = sadd.s32 %s67, 1
    %p71 = scmp.eq.s32.totalorder %s12, 1
    %p72 = scmp.ne.s32.totalorder %s67, %s69
    %p73 = scmp.eq.s32.totalorder %s12, 0
    %p74 = por %p72, %p73
    %p75 = scmp.ne.s32.totalorder %s67, %s69
    %p76 = scmp.eq.s32.totalorder %s17, 1
    %p77 = por %p75, %p76
    %p78 = scmp.ne.s32.totalorder %s69, %s70
    %p79 = scmp.eq.s32.totalorder %s17, 0
    %p80 = por %p78, %p79
    %p81 = scmp.ne.s32.totalorder %s69, %s70
    %p82 = scmp.eq.s32.totalorder %s18, 1
    %p83 = por %p81, %p82
    %p85 = scmp.ne.s32.totalorder %s70, %s84
    %p86 = scmp.eq.s32.totalorder %s18, 0
    %p87 = por %p85, %p86
    %s89 = sadd.s32 %s88, 1
    %p92 = scmp.eq.s32.totalorder %s12, 1
    %p93 = scmp.ne.s32.totalorder %s88, %s90
    %p94 = scmp.eq.s32.totalorder %s12, 0
    %p95 = por %p93, %p94
    %p96 = scmp.ne.s32.totalorder %s88, %s90
    %p97 = scmp.eq.s32.totalorder %s17, 1
    %p98 = por %p96, %p97
    %p99 = scmp.ne.s32.totalorder %s90, %s91
    %p100 = scmp.eq.s32.totalorder %s17, 0
    %p101 = por %p99, %p100
    %p102 = scmp.ne.s32.totalorder %s90, %s91
    %p103 = scmp.eq.s32.totalorder %s18, 1
    %p104 = por %p102, %p103
    %p106 = scmp.ne.s32.totalorder %s91, %s105
    %p107 = scmp.eq.s32.totalorder %s18, 0
    %p108 = por %p106, %p107
    %s110 = sadd.s32 %s109, 1
    %p113 = scmp.eq.s32.totalorder %s12, 1
    %p114 = scmp.ne.s32.totalorder %s109, %s111
    %p115 = scmp.eq.s32.totalorder %s12, 0
    %p116 = por %p114, %p115
    %p117 = scmp.ne.s32.totalorder %s109, %s111
    %p118 = scmp.eq.s32.totalorder %s17, 1
    %p119 = por %p117, %p118
    %p120 = scmp.ne.s32.totalorder %s111, %s112
    %p121 = scmp.eq.s32.totalorder %s17, 0
    %p122 = por %p120, %p121
    %p123 = scmp.ne.s32.totalorder %s111, %s112
    %p124 = scmp.eq.s32.totalorder %s18, 1
    %p125 = por %p123, %p124
    %p127 = scmp.ne.s32.totalorder %s112, %s126
    %p128 = scmp.eq.s32.totalorder %s18, 0
    %p129 = por %p127, %p128
    %s131 = sadd.s32 %s130, 1
    %p134 = scmp.eq.s32.totalorder %s12, 1
    %p135 = scmp.ne.s32.totalorder %s130, %s132
    %p136 = scmp.eq.s32.totalorder %s12, 0
    %p137 = por %p135, %p136
    %p138 = scmp.ne.s32.totalorder %s130, %s132
    %p139 = scmp.eq.s32.totalorder %s17, 1
    %p140 = por %p138, %p139
    %p141 = scmp.ne.s32.totalorder %s132, %s133
    %p142 = scmp.eq.s32.totalorder %s17, 0
    %p143 = por %p141, %p142
    %p144 = scmp.ne.s32.totalorder %s132, %s133
    %p145 = scmp.eq.s32.totalorder %s18, 1
    %p146 = por %p144, %p145
    %p148 = scmp.ne.s32.totalorder %s133, %s147
    %p149 = scmp.eq.s32.totalorder %s18, 0
    %p150 = por %p148, %p149
    %s151 = ssub.s32 %s12, %s19
    %p152 = scmp.eq.s32.totalorder %s151, 0
    %s154 = sadd.s32 %s153, 1
    %s155 = scalar_select %p152, %s153, %s154
    %p158 = pneg %p152
    %p159 = scmp.eq.s32.totalorder %s12, 1
    %p160 = por %p158, %p159
    %p161 = scmp.ne.s32.totalorder %s153, %s156
    %p162 = scmp.eq.s32.totalorder %s12, 0
    %p163 = por %p161, %p162
    %p164 = scmp.ne.s32.totalorder %s153, %s156
    %p165 = scmp.eq.s32.totalorder %s17, 1
    %p166 = por %p164, %p165
    %p167 = scmp.ne.s32.totalorder %s156, %s157
    %p168 = scmp.eq.s32.totalorder %s17, 0
    %p169 = por %p167, %p168
    %p170 = scmp.ne.s32.totalorder %s156, %s157
    %p171 = scmp.eq.s32.totalorder %s18, 1
    %p172 = por %p170, %p171
    %p174 = scmp.ne.s32.totalorder %s157, %s173
    %p175 = scmp.eq.s32.totalorder %s18, 0
    %p176 = por %p174, %p175
    %p177 = scmp.le.s32.totalorder 1, %s12
    %p178 = scmp.lt.s32.totalorder %s12, 3
    %p179 = pnand %p177, %p178
    %p180 = pneg %p179
    // Predicated region
    $region9: #{n3block_forward.4} parent=5 // pred_check
      _
    $region10: #{n3block_forward.4} parent=5 // pred_check_branch
      %182 = sbr.rel (%p179) target = $region12
    $region11: #{n3block_forward.4} parent=5 // pred_region
      %s183 = ssub.s32 %s12, 1
      // Predicated region
      $region13: #{n3block_forward.4} parent=11 // pred_check
        %p184 = pneg %p59
      $region14: #{n3block_forward.4} parent=11 // pred_check_branch
        %186 = sbr.rel (%p184) target = $region16
      $region15: #{n3block_forward.4} parent=11 // pred_region
        _
      $region16: #{n3block_forward.4} parent=11 // pred_fallthru
        _
      // Predicated region
      $region17: #{n3block_forward.4} parent=11 // pred_check
        %p187 = pneg %p80
      $region18: #{n3block_forward.4} parent=11 // pred_check_branch
        %189 = sbr.rel (%p187) target = $region20
      $region19: #{n3block_forward.4} parent=11 // pred_region
        _
      $region20: #{n3block_forward.4} parent=11 // pred_fallthru
        _
      // Predicated region
      $region21: #{n3block_forward.4} parent=11 // pred_check
        %p190 = pneg %p101
      $region22: #{n3block_forward.4} parent=11 // pred_check_branch
        %192 = sbr.rel (%p190) target = $region24
      $region23: #{n3block_forward.4} parent=11 // pred_region
        _
      $region24: #{n3block_forward.4} parent=11 // pred_fallthru
        _
      // Predicated region
      $region25: #{n3block_forward.4} parent=11 // pred_check
        %p193 = pneg %p122
      $region26: #{n3block_forward.4} parent=11 // pred_check_branch
        %195 = sbr.rel (%p193) target = $region28
      $region27: #{n3block_forward.4} parent=11 // pred_region
        _
      $region28: #{n3block_forward.4} parent=11 // pred_fallthru
        _
      // Predicated region
      $region29: #{n3block_forward.4} parent=11 // pred_check
        %p196 = pneg %p143
      $region30: #{n3block_forward.4} parent=11 // pred_check_branch
        %198 = sbr.rel (%p196) target = $region32
      $region31: #{n3block_forward.4} parent=11 // pred_region
        _
      $region32: #{n3block_forward.4} parent=11 // pred_fallthru
        _
    $region12: #{n3block_forward.4} parent=5 // pred_fallthru
      _
    %p199 = scmp.lt.s32.totalorder %s12, 2
    // Predicated region
    $region33: #{n3block_forward.4} parent=5 // pred_check
      %p200 = pneg %p199
    $region34: #{n3block_forward.4} parent=5 // pred_check_branch
      %202 = sbr.rel (%p200) target = $region36
    $region35: #{n3block_forward.4} parent=5 // pred_region
      // Predicated region
      $region37: #{n3block_forward.4} parent=35 // pred_check
        %p203 = pneg %p32
      $region38: #{n3block_forward.4} parent=35 // pred_check_branch
        %205 = sbr.rel (%p203) target = $region40
      $region39: #{n3block_forward.4} parent=35 // pred_region
        %p206 = scmp.lt.s32.totalorder %s12, 1
        %s207 = scalar_select %p206, %s12, 1
        %s208 = smul.addr %s207, 54
        %s209 = smul.addr %s208, 8
        %s210 = scalar_lea.vmem %s0, %s209
      $region40: #{n3block_forward.4} parent=35 // pred_fallthru
        _
    $region36: #{n3block_forward.4} parent=5 // pred_fallthru
      _
    %p211 = scmp.le.s32.totalorder 1, %s12
    %p212 = scmp.lt.s32.totalorder %s12, 3
    %p213 = pnand %p211, %p212
    %p214 = pneg %p213
    // Predicated region
    $region41: #{n3block_forward.4} parent=5 // pred_check
      _
    $region42: #{n3block_forward.4} parent=5 // pred_check_branch
      %216 = sbr.rel (%p213) target = $region44
    $region43: #{n3block_forward.4} parent=5 // pred_region
      %s217 = ssub.s32 %s12, 1
      %p218 = scmp.lt.s32.totalorder %s17, 1
      %s219 = scalar_select %p218, %s17, 1
      %s220 = smul.addr %s219, 54
      %s221 = smul.addr %s220, 8
      %s222 = scalar_lea.vmem %s0, %s221
      %p223 = pneg %p38
      %p224 = pneg %p35
      %p225 = pneg %p59
      %p226 = pneg %p56
      %p227 = pneg %p80
      %p228 = pneg %p77
      %p229 = pneg %p101
      %p230 = pneg %p98
      %p231 = pneg %p122
      %p232 = pneg %p119
      %p233 = pneg %p143
      %p234 = pneg %p140
      %p235 = pneg %p169
      %p236 = pneg %p166
      %p237 = scmp.lt.s32.totalorder %s17, 1
      %s238 = scalar_select %p237, %s17, 1
      %s239 = smul.addr %s238, 32
      %s240 = smul.addr %s239, 8
      %s241 = scalar_lea.vmem %s6, %s240
      %p242 = scmp.lt.s32.totalorder %s17, 1
      %s243 = scalar_select %p242, %s17, 1
      %s244 = smul.addr %s243, 54
      %s245 = smul.addr %s244, 8
      %s246 = scalar_lea.vmem %s0, %s245
      %p247 = scmp.lt.s32.totalorder %s17, 1
      %s248 = scalar_select %p247, %s17, 1
      %s249 = smul.addr %s248, 32
      %s250 = smul.addr %s249, 8
      %s251 = scalar_lea.vmem %s6, %s250
      %v253 = vld [vmem:[%s246] sm:$0xff]
      %v254 = vld [vmem:[%s246 + $0x8] sm:$0xff]
      %v255 = vld [vmem:[%s246 + $0x10] sm:$0x3]
      %v256 = vld [vmem:[%s246 + $0x18] sm:$0xff]
      %v257 = vld [vmem:[%s246 + $0x20] sm:$0xff]
      %v258 = vld [vmem:[%s246 + $0x28] sm:$0x3]
      %v259 = vld [vmem:[%s246 + $0x30] sm:$0xff]
      %v260 = vld [vmem:[%s246 + $0x38] sm:$0xff]
      %v261 = vld [vmem:[%s246 + $0x40] sm:$0x3]
      %v262 = vld [vmem:[%s246 + $0x48] sm:$0xff]
      %v263 = vld [vmem:[%s246 + $0x50] sm:$0xff]
      %v264 = vld [vmem:[%s246 + $0x58] sm:$0x3]
      %v265 = vld [vmem:[%s246 + $0x60] sm:$0xff]
      %v266 = vld [vmem:[%s246 + $0x68] sm:$0xff]
      %v267 = vld [vmem:[%s246 + $0x70] sm:$0x3]
      %v268 = vld [vmem:[%s246 + $0x78] sm:$0xff]
      %v269 = vld [vmem:[%s246 + $0x80] sm:$0xff]
      %v270 = vld [vmem:[%s246 + $0x88] sm:$0x3]
      %v271 = vld [vmem:[%s246 + $0x90] sm:$0xff]
      %v272 = vld [vmem:[%s246 + $0x98] sm:$0xff]
      %v273 = vld [vmem:[%s246 + $0xa0] sm:$0x3]
      %v274 = vld [vmem:[%s246 + $0xa8] sm:$0xff]
      %v275 = vld [vmem:[%s246 + $0xb0] sm:$0xff]
      %v276 = vld [vmem:[%s246 + $0xb8] sm:$0x3]
      %v277 = vld [vmem:[%s246 + $0xc0] sm:$0xff]
      %v278 = vld [vmem:[%s246 + $0xc8] sm:$0xff]
      %v279 = vld [vmem:[%s246 + $0xd0] sm:$0x3]
      %v280 = vld [vmem:[%s246 + $0xd8] sm:$0xff]
      %v281 = vld [vmem:[%s246 + $0xe0] sm:$0xff]
      %v282 = vld [vmem:[%s246 + $0xe8] sm:$0x3]
      %v283 = vld [vmem:[%s246 + $0xf0] sm:$0xff]
      %v284 = vld [vmem:[%s246 + $0xf8] sm:$0xff]
      %v285 = vld [vmem:[%s246 + $0x100] sm:$0x3]
      %v286 = vld [vmem:[%s246 + $0x108] sm:$0xff]
      %v287 = vld [vmem:[%s246 + $0x110] sm:$0xff]
      %v288 = vld [vmem:[%s246 + $0x118] sm:$0x3]
      %v289 = vld [vmem:[%s246 + $0x120] sm:$0xff]
      %v290 = vld [vmem:[%s246 + $0x128] sm:$0xff]
      %v291 = vld [vmem:[%s246 + $0x130] sm:$0x3]
      %v292 = vld [vmem:[%s246 + $0x138] sm:$0xff]
      %v293 = vld [vmem:[%s246 + $0x140] sm:$0xff]
      %v294 = vld [vmem:[%s246 + $0x148] sm:$0x3]
      %v295 = vld [vmem:[%s246 + $0x150] sm:$0xff]
      %v296 = vld [vmem:[%s246 + $0x158] sm:$0xff]
      %v297 = vld [vmem:[%s246 + $0x160] sm:$0x3]
      %v298 = vld [vmem:[%s246 + $0x168] sm:$0xff]
      %v299 = vld [vmem:[%s246 + $0x170] sm:$0xff]
      %v300 = vld [vmem:[%s246 + $0x178] sm:$0x3]
      %v301 = vld [vmem:[%s246 + $0x180] sm:$0xff]
      %v302 = vld [vmem:[%s246 + $0x188] sm:$0xff]
      %v303 = vld [vmem:[%s246 + $0x190] sm:$0x3]
      %v304 = vld [vmem:[%s246 + $0x198] sm:$0xff]
      %v305 = vld [vmem:[%s246 + $0x1a0] sm:$0xff]
      %v306 = vld [vmem:[%s246 + $0x1a8] sm:$0x3]
      %v307 = vld [vmem:[%s2] sm:$0x1]
      %v309 = vlaneseq
      %v310 = vshrl.u32 %v309, 7
      %v311 = vsub.s32 0, %v310
      %v312 = vrot.slane %v307, %v311
      %v314 = vmul.f32 %v253, %v312
      %v315 = vmul.f32 %v254, %v312
      %v316 = vmul.f32 %v255, %v312
      %v317 = vmul.f32 %v256, %v312
      %v318 = vmul.f32 %v257, %v312
      %v319 = vmul.f32 %v258, %v312
      %v320 = vmul.f32 %v259, %v312
      %v321 = vmul.f32 %v260, %v312
      %v322 = vmul.f32 %v261, %v312
      %v323 = vmul.f32 %v262, %v312
      %v324 = vmul.f32 %v263, %v312
      %v325 = vmul.f32 %v264, %v312
      %v326 = vmul.f32 %v265, %v312
      %v327 = vmul.f32 %v266, %v312
      %v328 = vmul.f32 %v267, %v312
      %v329 = vmul.f32 %v268, %v312
      %v330 = vmul.f32 %v269, %v312
      %v331 = vmul.f32 %v270, %v312
      %v332 = vmul.f32 %v271, %v312
      %v333 = vmul.f32 %v272, %v312
      %v334 = vmul.f32 %v273, %v312
      %v335 = vmul.f32 %v274, %v312
      %v336 = vmul.f32 %v275, %v312
      %v337 = vmul.f32 %v276, %v312
      %v338 = vmul.f32 %v277, %v312
      %v339 = vmul.f32 %v278, %v312
      %v340 = vmul.f32 %v279, %v312
      %v341 = vmul.f32 %v280, %v312
      %v342 = vmul.f32 %v281, %v312
      %v343 = vmul.f32 %v282, %v312
      %v344 = vmul.f32 %v283, %v312
      %v345 = vmul.f32 %v284, %v312
      %v346 = vmul.f32 %v285, %v312
      %v347 = vmul.f32 %v286, %v312
      %v348 = vmul.f32 %v287, %v312
      %v349 = vmul.f32 %v288, %v312
      %v350 = vmul.f32 %v289, %v312
      %v351 = vmul.f32 %v290, %v312
      %v352 = vmul.f32 %v291, %v312
      %v353 = vmul.f32 %v292, %v312
      %v354 = vmul.f32 %v293, %v312
      %v355 = vmul.f32 %v294, %v312
      %v356 = vmul.f32 %v295, %v312
      %v357 = vmul.f32 %v296, %v312
      %v358 = vmul.f32 %v297, %v312
      %v359 = vmul.f32 %v298, %v312
      %v360 = vmul.f32 %v299, %v312
      %v361 = vmul.f32 %v300, %v312
      %v362 = vmul.f32 %v301, %v312
      %v363 = vmul.f32 %v302, %v312
      %v364 = vmul.f32 %v303, %v312
      %v365 = vmul.f32 %v304, %v312
      %v366 = vmul.f32 %v305, %v312
      %v367 = vmul.f32 %v306, %v312
      %v368 = vld [vmem:[%s3] sm:$0x1]
      %v370 = vlaneseq
      %v371 = vshrl.u32 %v370, 7
      %v372 = vsub.s32 0, %v371
      %v373 = vrot.slane %v368, %v372
      %v375 = vadd.f32 %v314, %v373
      %v376 = vadd.f32 %v315, %v373
      %v377 = vadd.f32 %v316, %v373
      %v378 = vadd.f32 %v317, %v373
      %v379 = vadd.f32 %v318, %v373
      %v380 = vadd.f32 %v319, %v373
      %v381 = vadd.f32 %v320, %v373
      %v382 = vadd.f32 %v321, %v373
      %v383 = vadd.f32 %v322, %v373
      %v384 = vadd.f32 %v323, %v373
      %v385 = vadd.f32 %v324, %v373
      %v386 = vadd.f32 %v325, %v373
      %v387 = vadd.f32 %v326, %v373
      %v388 = vadd.f32 %v327, %v373
      %v389 = vadd.f32 %v328, %v373
      %v390 = vadd.f32 %v329, %v373
      %v391 = vadd.f32 %v330, %v373
      %v392 = vadd.f32 %v331, %v373
      %v393 = vadd.f32 %v332, %v373
      %v394 = vadd.f32 %v333, %v373
      %v395 = vadd.f32 %v334, %v373
      %v396 = vadd.f32 %v335, %v373
      %v397 = vadd.f32 %v336, %v373
      %v398 = vadd.f32 %v337, %v373
      %v399 = vadd.f32 %v338, %v373
      %v400 = vadd.f32 %v339, %v373
      %v401 = vadd.f32 %v340, %v373
      %v402 = vadd.f32 %v341, %v373
      %v403 = vadd.f32 %v342, %v373
      %v404 = vadd.f32 %v343, %v373
      %v405 = vadd.f32 %v344, %v373
      %v406 = vadd.f32 %v345, %v373
      %v407 = vadd.f32 %v346, %v373
      %v408 = vadd.f32 %v347, %v373
      %v409 = vadd.f32 %v348, %v373
      %v410 = vadd.f32 %v349, %v373
      %v411 = vadd.f32 %v350, %v373
      %v412 = vadd.f32 %v351, %v373
      %v413 = vadd.f32 %v352, %v373
      %v414 = vadd.f32 %v353, %v373
      %v415 = vadd.f32 %v354, %v373
      %v416 = vadd.f32 %v355, %v373
      %v417 = vadd.f32 %v356, %v373
      %v418 = vadd.f32 %v357, %v373
      %v419 = vadd.f32 %v358, %v373
      %v420 = vadd.f32 %v359, %v373
      %v421 = vadd.f32 %v360, %v373
      %v422 = vadd.f32 %v361, %v373
      %v423 = vadd.f32 %v362, %v373
      %v424 = vadd.f32 %v363, %v373
      %v425 = vadd.f32 %v364, %v373
      %v426 = vadd.f32 %v365, %v373
      %v427 = vadd.f32 %v366, %v373
      %v428 = vadd.f32 %v367, %v373
      %v429 = vmax.f32 %v375, 0.0
      %v430 = vmax.f32 %v376, 0.0
      %v431 = vmax.f32 %v377, 0.0
      %v432 = vmax.f32 %v378, 0.0
      %v433 = vmax.f32 %v379, 0.0
      %v434 = vmax.f32 %v380, 0.0
      %v435 = vmax.f32 %v381, 0.0
      %v436 = vmax.f32 %v382, 0.0
      %v437 = vmax.f32 %v383, 0.0
      %v438 = vmax.f32 %v384, 0.0
      %v439 = vmax.f32 %v385, 0.0
      %v440 = vmax.f32 %v386, 0.0
      %v441 = vmax.f32 %v387, 0.0
      %v442 = vmax.f32 %v388, 0.0
      %v443 = vmax.f32 %v389, 0.0
      %v444 = vmax.f32 %v390, 0.0
      %v445 = vmax.f32 %v391, 0.0
      %v446 = vmax.f32 %v392, 0.0
      %v447 = vmax.f32 %v393, 0.0
      %v448 = vmax.f32 %v394, 0.0
      %v449 = vmax.f32 %v395, 0.0
      %v450 = vmax.f32 %v396, 0.0
      %v451 = vmax.f32 %v397, 0.0
      %v452 = vmax.f32 %v398, 0.0
      %v453 = vmax.f32 %v399, 0.0
      %v454 = vmax.f32 %v400, 0.0
      %v455 = vmax.f32 %v401, 0.0
      %v456 = vmax.f32 %v402, 0.0
      %v457 = vmax.f32 %v403, 0.0
      %v458 = vmax.f32 %v404, 0.0
      %v459 = vmax.f32 %v405, 0.0
      %v460 = vmax.f32 %v406, 0.0
      %v461 = vmax.f32 %v407, 0.0
      %v462 = vmax.f32 %v408, 0.0
      %v463 = vmax.f32 %v409, 0.0
      %v464 = vmax.f32 %v410, 0.0
      %v465 = vmax.f32 %v411, 0.0
      %v466 = vmax.f32 %v412, 0.0
      %v467 = vmax.f32 %v413, 0.0
      %v468 = vmax.f32 %v414, 0.0
      %v469 = vmax.f32 %v415, 0.0
      %v470 = vmax.f32 %v416, 0.0
      %v471 = vmax.f32 %v417, 0.0
      %v472 = vmax.f32 %v418, 0.0
      %v473 = vmax.f32 %v419, 0.0
      %v474 = vmax.f32 %v420, 0.0
      %v475 = vmax.f32 %v421, 0.0
      %v476 = vmax.f32 %v422, 0.0
      %v477 = vmax.f32 %v423, 0.0
      %v478 = vmax.f32 %v424, 0.0
      %v479 = vmax.f32 %v425, 0.0
      %v480 = vmax.f32 %v426, 0.0
      %v481 = vmax.f32 %v427, 0.0
      %v482 = vmax.f32 %v428, 0.0
      %v483 = vld [vmem:[%s1] sm:$0xff]
      %v484 = vld [vmem:[%s1 + $0x8] sm:$0xff]
      %v485 = vld [vmem:[%s1 + $0x10] sm:$0x3]
      %v486 = vld [vmem:[%s1 + $0x18] sm:$0xff]
      %v487 = vld [vmem:[%s1 + $0x20] sm:$0xff]
      %v488 = vld [vmem:[%s1 + $0x28] sm:$0x3]
      %v489 = vld [vmem:[%s1 + $0x30] sm:$0xff]
      %v490 = vld [vmem:[%s1 + $0x38] sm:$0xff]
      %v491 = vld [vmem:[%s1 + $0x40] sm:$0x3]
      %v492 = vld [vmem:[%s1 + $0x48] sm:$0xff]
      %v493 = vld [vmem:[%s1 + $0x50] sm:$0xff]
      %v494 = vld [vmem:[%s1 + $0x58] sm:$0x3]
      %v495 = vld [vmem:[%s1 + $0x60] sm:$0xff]
      %v496 = vld [vmem:[%s1 + $0x68] sm:$0xff]
      %v497 = vld [vmem:[%s1 + $0x70] sm:$0x3]
      %v498 = vld [vmem:[%s1 + $0x78] sm:$0xff]
      %v499 = vld [vmem:[%s1 + $0x80] sm:$0xff]
      %v500 = vld [vmem:[%s1 + $0x88] sm:$0x3]
      %v501 = vld [vmem:[%s1 + $0x90] sm:$0xff]
      %v502 = vld [vmem:[%s1 + $0x98] sm:$0xff]
      %v503 = vld [vmem:[%s1 + $0xa0] sm:$0x3]
      %v504 = vld [vmem:[%s1 + $0xa8] sm:$0xff]
      %v505 = vld [vmem:[%s1 + $0xb0] sm:$0xff]
      %v506 = vld [vmem:[%s1 + $0xb8] sm:$0x3]
      %v507 = vld [vmem:[%s1 + $0xc0] sm:$0xff]
      %v508 = vld [vmem:[%s1 + $0xc8] sm:$0xff]
      %v509 = vld [vmem:[%s1 + $0xd0] sm:$0x3]
      %v510 = vld [vmem:[%s1 + $0xd8] sm:$0xff]
      %v511 = vld [vmem:[%s1 + $0xe0] sm:$0xff]
      %v512 = vld [vmem:[%s1 + $0xe8] sm:$0x3]
      %v513 = vld [vmem:[%s1 + $0xf0] sm:$0xff]
      %v514 = vld [vmem:[%s1 + $0xf8] sm:$0xff]
      %v515 = vld [vmem:[%s1 + $0x100] sm:$0x3]
      %v516 = vld [vmem:[%s1 + $0x108] sm:$0xff]
      %v517 = vld [vmem:[%s1 + $0x110] sm:$0xff]
      %v518 = vld [vmem:[%s1 + $0x118] sm:$0x3]
      %v519 = vld [vmem:[%s1 + $0x120] sm:$0xff]
      %v520 = vld [vmem:[%s1 + $0x128] sm:$0xff]
      %v521 = vld [vmem:[%s1 + $0x130] sm:$0x3]
      %v522 = vld [vmem:[%s1 + $0x138] sm:$0xff]
      %v523 = vld [vmem:[%s1 + $0x140] sm:$0xff]
      %v524 = vld [vmem:[%s1 + $0x148] sm:$0x3]
      %v525 = vld [vmem:[%s1 + $0x150] sm:$0xff]
      %v526 = vld [vmem:[%s1 + $0x158] sm:$0xff]
      %v527 = vld [vmem:[%s1 + $0x160] sm:$0x3]
      %v528 = vld [vmem:[%s1 + $0x168] sm:$0xff]
      %v529 = vld [vmem:[%s1 + $0x170] sm:$0xff]
      %v530 = vld [vmem:[%s1 + $0x178] sm:$0x3]
      %v531 = vld [vmem:[%s1 + $0x180] sm:$0xff]
      %v532 = vld [vmem:[%s1 + $0x188] sm:$0xff]
      %v533 = vld [vmem:[%s1 + $0x190] sm:$0x3]
      %v534 = vld [vmem:[%s1 + $0x198] sm:$0xff]
      %v535 = vld [vmem:[%s1 + $0x1a0] sm:$0xff]
      %v536 = vld [vmem:[%s1 + $0x1a8] sm:$0x3]
      %538 = vset.pattern.permute.xlu0 0
      %539 = vperm.xlu0 %538, %v483
      %v540 = vpop.permute.xlu0 %539
      %543 = vset.pattern.permute.xlu0 0
      %544 = vperm.xlu0 %543, %v484
      %v545 = vpop.permute.xlu0 %544
      %548 = vset.pattern.permute.xlu0 0
      %549 = vperm.xlu0 %548, %v485
      %v550 = vpop.permute.xlu0 %549
      %553 = vset.pattern.permute.xlu0 0
      %554 = vperm.xlu0 %553, %v486
      %v555 = vpop.permute.xlu0 %554
      %558 = vset.pattern.permute.xlu0 0
      %559 = vperm.xlu0 %558, %v487
      %v560 = vpop.permute.xlu0 %559
      %563 = vset.pattern.permute.xlu0 0
      %564 = vperm.xlu0 %563, %v488
      %v565 = vpop.permute.xlu0 %564
      %568 = vset.pattern.permute.xlu0 0
      %569 = vperm.xlu0 %568, %v489
      %v570 = vpop.permute.xlu0 %569
      %573 = vset.pattern.permute.xlu0 0
      %574 = vperm.xlu0 %573, %v490
      %v575 = vpop.permute.xlu0 %574
      %578 = vset.pattern.permute.xlu0 0
      %579 = vperm.xlu0 %578, %v491
      %v580 = vpop.permute.xlu0 %579
      %583 = vset.pattern.permute.xlu0 0
      %584 = vperm.xlu0 %583, %v492
      %v585 = vpop.permute.xlu0 %584
      %588 = vset.pattern.permute.xlu0 0
      %589 = vperm.xlu0 %588, %v493
      %v590 = vpop.permute.xlu0 %589
      %593 = vset.pattern.permute.xlu0 0
      %594 = vperm.xlu0 %593, %v494
      %v595 = vpop.permute.xlu0 %594
      %598 = vset.pattern.permute.xlu0 0
      %599 = vperm.xlu0 %598, %v495
      %v600 = vpop.permute.xlu0 %599
      %603 = vset.pattern.permute.xlu0 0
      %604 = vperm.xlu0 %603, %v496
      %v605 = vpop.permute.xlu0 %604
      %608 = vset.pattern.permute.xlu0 0
      %609 = vperm.xlu0 %608, %v497
      %v610 = vpop.permute.xlu0 %609
      %613 = vset.pattern.permute.xlu0 0
      %614 = vperm.xlu0 %613, %v498
      %v615 = vpop.permute.xlu0 %614
      %618 = vset.pattern.permute.xlu0 0
      %619 = vperm.xlu0 %618, %v499
      %v620 = vpop.permute.xlu0 %619
      %623 = vset.pattern.permute.xlu0 0
      %624 = vperm.xlu0 %623, %v500
      %v625 = vpop.permute.xlu0 %624
      %628 = vset.pattern.permute.xlu0 0
      %629 = vperm.xlu0 %628, %v501
      %v630 = vpop.permute.xlu0 %629
      %633 = vset.pattern.permute.xlu0 0
      %634 = vperm.xlu0 %633, %v502
      %v635 = vpop.permute.xlu0 %634
      %638 = vset.pattern.permute.xlu0 0
      %639 = vperm.xlu0 %638, %v503
      %v640 = vpop.permute.xlu0 %639
      %643 = vset.pattern.permute.xlu0 0
      %644 = vperm.xlu0 %643, %v504
      %v645 = vpop.permute.xlu0 %644
      %648 = vset.pattern.permute.xlu0 0
      %649 = vperm.xlu0 %648, %v505
      %v650 = vpop.permute.xlu0 %649
      %653 = vset.pattern.permute.xlu0 0
      %654 = vperm.xlu0 %653, %v506
      %v655 = vpop.permute.xlu0 %654
      %658 = vset.pattern.permute.xlu0 0
      %659 = vperm.xlu0 %658, %v507
      %v660 = vpop.permute.xlu0 %659
      %663 = vset.pattern.permute.xlu0 0
      %664 = vperm.xlu0 %663, %v508
      %v665 = vpop.permute.xlu0 %664
      %668 = vset.pattern.permute.xlu0 0
      %669 = vperm.xlu0 %668, %v509
      %v670 = vpop.permute.xlu0 %669
      %673 = vset.pattern.permute.xlu0 0
      %674 = vperm.xlu0 %673, %v510
      %v675 = vpop.permute.xlu0 %674
      %678 = vset.pattern.permute.xlu0 0
      %679 = vperm.xlu0 %678, %v511
      %v680 = vpop.permute.xlu0 %679
      %683 = vset.pattern.permute.xlu0 0
      %684 = vperm.xlu0 %683, %v512
      %v685 = vpop.permute.xlu0 %684
      %688 = vset.pattern.permute.xlu0 0
      %689 = vperm.xlu0 %688, %v513
      %v690 = vpop.permute.xlu0 %689
      %693 = vset.pattern.permute.xlu0 0
      %694 = vperm.xlu0 %693, %v514
      %v695 = vpop.permute.xlu0 %694
      %698 = vset.pattern.permute.xlu0 0
      %699 = vperm.xlu0 %698, %v515
      %v700 = vpop.permute.xlu0 %699
      %703 = vset.pattern.permute.xlu0 0
      %704 = vperm.xlu0 %703, %v516
      %v705 = vpop.permute.xlu0 %704
      %708 = vset.pattern.permute.xlu0 0
      %709 = vperm.xlu0 %708, %v517
      %v710 = vpop.permute.xlu0 %709
      %713 = vset.pattern.permute.xlu0 0
      %714 = vperm.xlu0 %713, %v518
      %v715 = vpop.permute.xlu0 %714
      %718 = vset.pattern.permute.xlu0 0
      %719 = vperm.xlu0 %718, %v519
      %v720 = vpop.permute.xlu0 %719
      %723 = vset.pattern.permute.xlu0 0
      %724 = vperm.xlu0 %723, %v520
      %v725 = vpop.permute.xlu0 %724
      %728 = vset.pattern.permute.xlu0 0
      %729 = vperm.xlu0 %728, %v521
      %v730 = vpop.permute.xlu0 %729
      %733 = vset.pattern.permute.xlu0 0
      %734 = vperm.xlu0 %733, %v522
      %v735 = vpop.permute.xlu0 %734
      %738 = vset.pattern.permute.xlu0 0
      %739 = vperm.xlu0 %738, %v523
      %v740 = vpop.permute.xlu0 %739
      %743 = vset.pattern.permute.xlu0 0
      %744 = vperm.xlu0 %743, %v524
      %v745 = vpop.permute.xlu0 %744
      %748 = vset.pattern.permute.xlu0 0
      %749 = vperm.xlu0 %748, %v525
      %v750 = vpop.permute.xlu0 %749
      %753 = vset.pattern.permute.xlu0 0
      %754 = vperm.xlu0 %753, %v526
      %v755 = vpop.permute.xlu0 %754
      %758 = vset.pattern.permute.xlu0 0
      %759 = vperm.xlu0 %758, %v527
      %v760 = vpop.permute.xlu0 %759
      %763 = vset.pattern.permute.xlu0 0
      %764 = vperm.xlu0 %763, %v528
      %v765 = vpop.permute.xlu0 %764
      %768 = vset.pattern.permute.xlu0 0
      %769 = vperm.xlu0 %768, %v529
      %v770 = vpop.permute.xlu0 %769
      %773 = vset.pattern.permute.xlu0 0
      %774 = vperm.xlu0 %773, %v530
      %v775 = vpop.permute.xlu0 %774
      %778 = vset.pattern.permute.xlu0 0
      %779 = vperm.xlu0 %778, %v531
      %v780 = vpop.permute.xlu0 %779
      %783 = vset.pattern.permute.xlu0 0
      %784 = vperm.xlu0 %783, %v532
      %v785 = vpop.permute.xlu0 %784
      %788 = vset.pattern.permute.xlu0 0
      %789 = vperm.xlu0 %788, %v533
      %v790 = vpop.permute.xlu0 %789
      %793 = vset.pattern.permute.xlu0 0
      %794 = vperm.xlu0 %793, %v534
      %v795 = vpop.permute.xlu0 %794
      %798 = vset.pattern.permute.xlu0 0
      %799 = vperm.xlu0 %798, %v535
      %v800 = vpop.permute.xlu0 %799
      %803 = vset.pattern.permute.xlu0 0
      %804 = vperm.xlu0 %803, %v536
      %v805 = vpop.permute.xlu0 %804
      %v807 = vmul.f32 %v429, %v540
      %v808 = vmul.f32 %v430, %v545
      %v809 = vmul.f32 %v431, %v550
      %v810 = vmul.f32 %v432, %v555
      %v811 = vmul.f32 %v433, %v560
      %v812 = vmul.f32 %v434, %v565
      %v813 = vmul.f32 %v435, %v570
      %v814 = vmul.f32 %v436, %v575
      %v815 = vmul.f32 %v437, %v580
      %v816 = vmul.f32 %v438, %v585
      %v817 = vmul.f32 %v439, %v590
      %v818 = vmul.f32 %v440, %v595
      %v819 = vmul.f32 %v441, %v600
      %v820 = vmul.f32 %v442, %v605
      %v821 = vmul.f32 %v443, %v610
      %v822 = vmul.f32 %v444, %v615
      %v823 = vmul.f32 %v445, %v620
      %v824 = vmul.f32 %v446, %v625
      %v825 = vmul.f32 %v447, %v630
      %v826 = vmul.f32 %v448, %v635
      %v827 = vmul.f32 %v449, %v640
      %v828 = vmul.f32 %v450, %v645
      %v829 = vmul.f32 %v451, %v650
      %v830 = vmul.f32 %v452, %v655
      %v831 = vmul.f32 %v453, %v660
      %v832 = vmul.f32 %v454, %v665
      %v833 = vmul.f32 %v455, %v670
      %v834 = vmul.f32 %v456, %v675
      %v835 = vmul.f32 %v457, %v680
      %v836 = vmul.f32 %v458, %v685
      %v837 = vmul.f32 %v459, %v690
      %v838 = vmul.f32 %v460, %v695
      %v839 = vmul.f32 %v461, %v700
      %v840 = vmul.f32 %v462, %v705
      %v841 = vmul.f32 %v463, %v710
      %v842 = vmul.f32 %v464, %v715
      %v843 = vmul.f32 %v465, %v720
      %v844 = vmul.f32 %v466, %v725
      %v845 = vmul.f32 %v467, %v730
      %v846 = vmul.f32 %v468, %v735
      %v847 = vmul.f32 %v469, %v740
      %v848 = vmul.f32 %v470, %v745
      %v849 = vmul.f32 %v471, %v750
      %v850 = vmul.f32 %v472, %v755
      %v851 = vmul.f32 %v473, %v760
      %v852 = vmul.f32 %v474, %v765
      %v853 = vmul.f32 %v475, %v770
      %v854 = vmul.f32 %v476, %v775
      %v855 = vmul.f32 %v477, %v780
      %v856 = vmul.f32 %v478, %v785
      %v857 = vmul.f32 %v479, %v790
      %v858 = vmul.f32 %v480, %v795
      %v859 = vmul.f32 %v481, %v800
      %v860 = vmul.f32 %v482, %v805
      %v861 = vpack.c.bf16 %v808, %v807
      %v862 = vpack.c.bf16 %v809, %v809
      %v863 = vpack.c.bf16 %v811, %v810
      %v864 = vpack.c.bf16 %v812, %v812
      %v865 = vpack.c.bf16 %v814, %v813
      %v866 = vpack.c.bf16 %v815, %v815
      %v867 = vpack.c.bf16 %v817, %v816
      %v868 = vpack.c.bf16 %v818, %v818
      %v869 = vpack.c.bf16 %v820, %v819
      %v870 = vpack.c.bf16 %v821, %v821
      %v871 = vpack.c.bf16 %v823, %v822
      %v872 = vpack.c.bf16 %v824, %v824
      %v873 = vpack.c.bf16 %v826, %v825
      %v874 = vpack.c.bf16 %v827, %v827
      %v875 = vpack.c.bf16 %v829, %v828
      %v876 = vpack.c.bf16 %v830, %v830
      %v877 = vpack.c.bf16 %v832, %v831
      %v878 = vpack.c.bf16 %v833, %v833
      %v879 = vpack.c.bf16 %v835, %v834
      %v880 = vpack.c.bf16 %v836, %v836
      %v881 = vpack.c.bf16 %v838, %v837
      %v882 = vpack.c.bf16 %v839, %v839
      %v883 = vpack.c.bf16 %v841, %v840
      %v884 = vpack.c.bf16 %v842, %v842
      %v885 = vpack.c.bf16 %v844, %v843
      %v886 = vpack.c.bf16 %v845, %v845
      %v887 = vpack.c.bf16 %v847, %v846
      %v888 = vpack.c.bf16 %v848, %v848
      %v889 = vpack.c.bf16 %v850, %v849
      %v890 = vpack.c.bf16 %v851, %v851
      %v891 = vpack.c.bf16 %v853, %v852
      %v892 = vpack.c.bf16 %v854, %v854
      %v893 = vpack.c.bf16 %v856, %v855
      %v894 = vpack.c.bf16 %v857, %v857
      %v895 = vpack.c.bf16 %v859, %v858
      %v896 = vpack.c.bf16 %v860, %v860
      %vm897 = vsmask.f32 7424
      %v899 = vshrl.u32 %v861, 16
      %v901 = vshll.u32 %v861, 16
      %v903 = vrot.slane %v901, 1
      %v904 = vor.u32 %v899, %v903
      %v906 = vshll.u32 %v862, 16
      %v908 = vrot.slane %v906, 1
      %v909 = vsel %vm897, %v904, %v908
      %v911 = vshrl.u32 %v863, 16
      %v913 = vshll.u32 %v863, 16
      %v915 = vrot.slane %v913, 1
      %v916 = vor.u32 %v911, %v915
      %v918 = vshll.u32 %v864, 16
      %v920 = vrot.slane %v918, 1
      %v921 = vsel %vm897, %v916, %v920
      %v923 = vshrl.u32 %v865, 16
      %v925 = vshll.u32 %v865, 16
      %v927 = vrot.slane %v925, 1
      %v928 = vor.u32 %v923, %v927
      %v930 = vshll.u32 %v866, 16
      %v932 = vrot.slane %v930, 1
      %v933 = vsel %vm897, %v928, %v932
      %v935 = vshrl.u32 %v867, 16
      %v937 = vshll.u32 %v867, 16
      %v939 = vrot.slane %v937, 1
      %v940 = vor.u32 %v935, %v939
      %v942 = vshll.u32 %v868, 16
      %v944 = vrot.slane %v942, 1
      %v945 = vsel %vm897, %v940, %v944
      %v947 = vshrl.u32 %v869, 16
      %v949 = vshll.u32 %v869, 16
      %v951 = vrot.slane %v949, 1
      %v952 = vor.u32 %v947, %v951
      %v954 = vshll.u32 %v870, 16
      %v956 = vrot.slane %v954, 1
      %v957 = vsel %vm897, %v952, %v956
      %v959 = vshrl.u32 %v871, 16
      %v961 = vshll.u32 %v871, 16
      %v963 = vrot.slane %v961, 1
      %v964 = vor.u32 %v959, %v963
      %v966 = vshll.u32 %v872, 16
      %v968 = vrot.slane %v966, 1
      %v969 = vsel %vm897, %v964, %v968
      %v971 = vshrl.u32 %v873, 16
      %v973 = vshll.u32 %v873, 16
      %v975 = vrot.slane %v973, 1
      %v976 = vor.u32 %v971, %v975
      %v978 = vshll.u32 %v874, 16
      %v980 = vrot.slane %v978, 1
      %v981 = vsel %vm897, %v976, %v980
      %v983 = vshrl.u32 %v875, 16
      %v985 = vshll.u32 %v875, 16
      %v987 = vrot.slane %v985, 1
      %v988 = vor.u32 %v983, %v987
      %v990 = vshll.u32 %v876, 16
      %v992 = vrot.slane %v990, 1
      %v993 = vsel %vm897, %v988, %v992
      %v995 = vshrl.u32 %v877, 16
      %v997 = vshll.u32 %v877, 16
      %v999 = vrot.slane %v997, 1
      %v1000 = vor.u32 %v995, %v999
      %v1002 = vshll.u32 %v878, 16
      %v1004 = vrot.slane %v1002, 1
      %v1005 = vsel %vm897, %v1000, %v1004
      %v1007 = vshrl.u32 %v879, 16
      %v1009 = vshll.u32 %v879, 16
      %v1011 = vrot.slane %v1009, 1
      %v1012 = vor.u32 %v1007, %v1011
      %v1014 = vshll.u32 %v880, 16
      %v1016 = vrot.slane %v1014, 1
      %v1017 = vsel %vm897, %v1012, %v1016
      %v1019 = vshrl.u32 %v881, 16
      %v1021 = vshll.u32 %v881, 16
      %v1023 = vrot.slane %v1021, 1
      %v1024 = vor.u32 %v1019, %v1023
      %v1026 = vshll.u32 %v882, 16
      %v1028 = vrot.slane %v1026, 1
      %v1029 = vsel %vm897, %v1024, %v1028
      %v1031 = vshrl.u32 %v883, 16
      %v1033 = vshll.u32 %v883, 16
      %v1035 = vrot.slane %v1033, 1
      %v1036 = vor.u32 %v1031, %v1035
      %v1038 = vshll.u32 %v884, 16
      %v1040 = vrot.slane %v1038, 1
      %v1041 = vsel %vm897, %v1036, %v1040
      %v1043 = vshrl.u32 %v885, 16
      %v1045 = vshll.u32 %v885, 16
      %v1047 = vrot.slane %v1045, 1
      %v1048 = vor.u32 %v1043, %v1047
      %v1050 = vshll.u32 %v886, 16
      %v1052 = vrot.slane %v1050, 1
      %v1053 = vsel %vm897, %v1048, %v1052
      %v1055 = vshrl.u32 %v887, 16
      %v1057 = vshll.u32 %v887, 16
      %v1059 = vrot.slane %v1057, 1
      %v1060 = vor.u32 %v1055, %v1059
      %v1062 = vshll.u32 %v888, 16
      %v1064 = vrot.slane %v1062, 1
      %v1065 = vsel %vm897, %v1060, %v1064
      %v1067 = vshrl.u32 %v889, 16
      %v1069 = vshll.u32 %v889, 16
      %v1071 = vrot.slane %v1069, 1
      %v1072 = vor.u32 %v1067, %v1071
      %v1074 = vshll.u32 %v890, 16
      %v1076 = vrot.slane %v1074, 1
      %v1077 = vsel %vm897, %v1072, %v1076
      %v1079 = vshrl.u32 %v891, 16
      %v1081 = vshll.u32 %v891, 16
      %v1083 = vrot.slane %v1081, 1
      %v1084 = vor.u32 %v1079, %v1083
      %v1086 = vshll.u32 %v892, 16
      %v1088 = vrot.slane %v1086, 1
      %v1089 = vsel %vm897, %v1084, %v1088
      %1090 = vrot.lane.b32.xlu0 %v909, 16
      %v1091 = vpop.permute.xlu0 %1090
      %1092 = vrot.lane.b32.xlu0 %v921, 16
      %v1093 = vpop.permute.xlu0 %1092
      %1094 = vrot.lane.b32.xlu0 %v933, 16
      %v1095 = vpop.permute.xlu0 %1094
      %1096 = vrot.lane.b32.xlu0 %v945, 16
      %v1097 = vpop.permute.xlu0 %1096
      %1098 = vrot.lane.b32.xlu0 %v957, 16
      %v1099 = vpop.permute.xlu0 %1098
      %1100 = vrot.lane.b32.xlu0 %v969, 16
      %v1101 = vpop.permute.xlu0 %1100
      %1102 = vrot.lane.b32.xlu0 %v981, 16
      %v1103 = vpop.permute.xlu0 %1102
      %1104 = vrot.lane.b32.xlu0 %v993, 16
      %v1105 = vpop.permute.xlu0 %1104
      %1106 = vrot.lane.b32.xlu0 %v1005, 16
      %v1107 = vpop.permute.xlu0 %1106
      %1108 = vrot.lane.b32.xlu0 %v1017, 16
      %v1109 = vpop.permute.xlu0 %1108
      %1110 = vrot.lane.b32.xlu0 %v1029, 16
      %v1111 = vpop.permute.xlu0 %1110
      %1112 = vrot.lane.b32.xlu0 %v1041, 16
      %v1113 = vpop.permute.xlu0 %1112
      %1114 = vrot.lane.b32.xlu0 %v1053, 16
      %v1115 = vpop.permute.xlu0 %1114
      %1116 = vrot.lane.b32.xlu0 %v1065, 16
      %v1117 = vpop.permute.xlu0 %1116
      %1118 = vrot.lane.b32.xlu0 %v1077, 16
      %v1119 = vpop.permute.xlu0 %1118
      %1120 = vrot.lane.b32.xlu0 %v1089, 16
      %v1121 = vpop.permute.xlu0 %1120
      %vm1154 = vcmask 1046528
      %v1155 = vrot.slane %v861, 1
      %v1156 = vrot.slane %v862, 1
      %v1157 = vsel %vm1154, %v1155, %v1156
      %v1158 = vrot.slane %v863, 1
      %v1159 = vrot.slane %v864, 1
      %v1160 = vsel %vm1154, %v1158, %v1159
      %v1161 = vrot.slane %v865, 1
      %v1162 = vrot.slane %v866, 1
      %v1163 = vsel %vm1154, %v1161, %v1162
      %v1164 = vrot.slane %v867, 1
      %v1165 = vrot.slane %v868, 1
      %v1166 = vsel %vm1154, %v1164, %v1165
      %v1167 = vrot.slane %v869, 1
      %v1168 = vrot.slane %v870, 1
      %v1169 = vsel %vm1154, %v1167, %v1168
      %v1170 = vrot.slane %v871, 1
      %v1171 = vrot.slane %v872, 1
      %v1172 = vsel %vm1154, %v1170, %v1171
      %v1173 = vrot.slane %v873, 1
      %v1174 = vrot.slane %v874, 1
      %v1175 = vsel %vm1154, %v1173, %v1174
      %v1176 = vrot.slane %v875, 1
      %v1177 = vrot.slane %v876, 1
      %v1178 = vsel %vm1154, %v1176, %v1177
      %v1179 = vrot.slane %v877, 1
      %v1180 = vrot.slane %v878, 1
      %v1181 = vsel %vm1154, %v1179, %v1180
      %v1182 = vrot.slane %v879, 1
      %v1183 = vrot.slane %v880, 1
      %v1184 = vsel %vm1154, %v1182, %v1183
      %v1185 = vrot.slane %v881, 1
      %v1186 = vrot.slane %v882, 1
      %v1187 = vsel %vm1154, %v1185, %v1186
      %v1188 = vrot.slane %v883, 1
      %v1189 = vrot.slane %v884, 1
      %v1190 = vsel %vm1154, %v1188, %v1189
      %v1191 = vrot.slane %v885, 1
      %v1192 = vrot.slane %v886, 1
      %v1193 = vsel %vm1154, %v1191, %v1192
      %v1194 = vrot.slane %v887, 1
      %v1195 = vrot.slane %v888, 1
      %v1196 = vsel %vm1154, %v1194, %v1195
      %v1197 = vrot.slane %v889, 1
      %v1198 = vrot.slane %v890, 1
      %v1199 = vsel %vm1154, %v1197, %v1198
      %v1200 = vrot.slane %v891, 1
      %v1201 = vrot.slane %v892, 1
      %v1202 = vsel %vm1154, %v1200, %v1201
      %1203 = vrot.lane.b32.xlu0 %v1157, 32
      %v1204 = vpop.permute.xlu0 %1203
      %1205 = vrot.lane.b32.xlu0 %v1160, 32
      %v1206 = vpop.permute.xlu0 %1205
      %1207 = vrot.lane.b32.xlu0 %v1163, 32
      %v1208 = vpop.permute.xlu0 %1207
      %1209 = vrot.lane.b32.xlu0 %v1166, 32
      %v1210 = vpop.permute.xlu0 %1209
      %1211 = vrot.lane.b32.xlu0 %v1169, 32
      %v1212 = vpop.permute.xlu0 %1211
      %1213 = vrot.lane.b32.xlu0 %v1172, 32
      %v1214 = vpop.permute.xlu0 %1213
      %1215 = vrot.lane.b32.xlu0 %v1175, 32
      %v1216 = vpop.permute.xlu0 %1215
      %1217 = vrot.lane.b32.xlu0 %v1178, 32
      %v1218 = vpop.permute.xlu0 %1217
      %1219 = vrot.lane.b32.xlu0 %v1181, 32
      %v1220 = vpop.permute.xlu0 %1219
      %1221 = vrot.lane.b32.xlu0 %v1184, 32
      %v1222 = vpop.permute.xlu0 %1221
      %1223 = vrot.lane.b32.xlu0 %v1187, 32
      %v1224 = vpop.permute.xlu0 %1223
      %1225 = vrot.lane.b32.xlu0 %v1190, 32
      %v1226 = vpop.permute.xlu0 %1225
      %1227 = vrot.lane.b32.xlu0 %v1193, 32
      %v1228 = vpop.permute.xlu0 %1227
      %1229 = vrot.lane.b32.xlu0 %v1196, 32
      %v1230 = vpop.permute.xlu0 %1229
      %1231 = vrot.lane.b32.xlu0 %v1199, 32
      %v1232 = vpop.permute.xlu0 %1231
      %1233 = vrot.lane.b32.xlu0 %v1202, 32
      %v1234 = vpop.permute.xlu0 %1233
      %1236 = vrot.lane.b32.xlu0 %v863, 48
      %v1237 = vpop.permute.xlu0 %1236
      %1238 = vrot.lane.b32.xlu0 %v865, 48
      %v1239 = vpop.permute.xlu0 %1238
      %1240 = vrot.lane.b32.xlu0 %v867, 48
      %v1241 = vpop.permute.xlu0 %1240
      %1242 = vrot.lane.b32.xlu0 %v869, 48
      %v1243 = vpop.permute.xlu0 %1242
      %1244 = vrot.lane.b32.xlu0 %v871, 48
      %v1245 = vpop.permute.xlu0 %1244
      %1246 = vrot.lane.b32.xlu0 %v873, 48
      %v1247 = vpop.permute.xlu0 %1246
      %1248 = vrot.lane.b32.xlu0 %v875, 48
      %v1249 = vpop.permute.xlu0 %1248
      %1250 = vrot.lane.b32.xlu0 %v877, 48
      %v1251 = vpop.permute.xlu0 %1250
      %1252 = vrot.lane.b32.xlu0 %v879, 48
      %v1253 = vpop.permute.xlu0 %1252
      %1254 = vrot.lane.b32.xlu0 %v881, 48
      %v1255 = vpop.permute.xlu0 %1254
      %1256 = vrot.lane.b32.xlu0 %v883, 48
      %v1257 = vpop.permute.xlu0 %1256
      %1258 = vrot.lane.b32.xlu0 %v885, 48
      %v1259 = vpop.permute.xlu0 %1258
      %1260 = vrot.lane.b32.xlu0 %v887, 48
      %v1261 = vpop.permute.xlu0 %1260
      %1262 = vrot.lane.b32.xlu0 %v889, 48
      %v1263 = vpop.permute.xlu0 %1262
      %1264 = vrot.lane.b32.xlu0 %v891, 48
      %v1265 = vpop.permute.xlu0 %1264
      %1266 = vrot.lane.b32.xlu0 %v893, 48
      %v1267 = vpop.permute.xlu0 %1266
      %v1269 = vshrl.u32 %v893, 16
      %v1271 = vshll.u32 %v893, 16
      %v1273 = vrot.slane %v1271, 1
      %v1274 = vor.u32 %v1269, %v1273
      %v1276 = vshll.u32 %v894, 16
      %v1278 = vrot.slane %v1276, 1
      %v1279 = vsel %vm897, %v1274, %v1278
      %1280 = vrot.lane.b32.xlu0 %v921, 64
      %v1281 = vpop.permute.xlu0 %1280
      %1282 = vrot.lane.b32.xlu0 %v933, 64
      %v1283 = vpop.permute.xlu0 %1282
      %1284 = vrot.lane.b32.xlu0 %v945, 64
      %v1285 = vpop.permute.xlu0 %1284
      %1286 = vrot.lane.b32.xlu0 %v957, 64
      %v1287 = vpop.permute.xlu0 %1286
      %1288 = vrot.lane.b32.xlu0 %v969, 64
      %v1289 = vpop.permute.xlu0 %1288
      %1290 = vrot.lane.b32.xlu0 %v981, 64
      %v1291 = vpop.permute.xlu0 %1290
      %1292 = vrot.lane.b32.xlu0 %v993, 64
      %v1293 = vpop.permute.xlu0 %1292
      %1294 = vrot.lane.b32.xlu0 %v1005, 64
      %v1295 = vpop.permute.xlu0 %1294
      %1296 = vrot.lane.b32.xlu0 %v1017, 64
      %v1297 = vpop.permute.xlu0 %1296
      %1298 = vrot.lane.b32.xlu0 %v1029, 64
      %v1299 = vpop.permute.xlu0 %1298
      %1300 = vrot.lane.b32.xlu0 %v1041, 64
      %v1301 = vpop.permute.xlu0 %1300
      %1302 = vrot.lane.b32.xlu0 %v1053, 64
      %v1303 = vpop.permute.xlu0 %1302
      %1304 = vrot.lane.b32.xlu0 %v1065, 64
      %v1305 = vpop.permute.xlu0 %1304
      %1306 = vrot.lane.b32.xlu0 %v1077, 64
      %v1307 = vpop.permute.xlu0 %1306
      %1308 = vrot.lane.b32.xlu0 %v1089, 64
      %v1309 = vpop.permute.xlu0 %1308
      %1310 = vrot.lane.b32.xlu0 %v1279, 64
      %v1311 = vpop.permute.xlu0 %1310
      %v1313 = vrot.slane %v893, 1
      %v1314 = vrot.slane %v894, 1
      %v1315 = vsel %vm1154, %v1313, %v1314
      %1316 = vrot.lane.b32.xlu0 %v1160, 80
      %v1317 = vpop.permute.xlu0 %1316
      %1318 = vrot.lane.b32.xlu0 %v1163, 80
      %v1319 = vpop.permute.xlu0 %1318
      %1320 = vrot.lane.b32.xlu0 %v1166, 80
      %v1321 = vpop.permute.xlu0 %1320
      %1322 = vrot.lane.b32.xlu0 %v1169, 80
      %v1323 = vpop.permute.xlu0 %1322
      %1324 = vrot.lane.b32.xlu0 %v1172, 80
      %v1325 = vpop.permute.xlu0 %1324
      %1326 = vrot.lane.b32.xlu0 %v1175, 80
      %v1327 = vpop.permute.xlu0 %1326
      %1328 = vrot.lane.b32.xlu0 %v1178, 80
      %v1329 = vpop.permute.xlu0 %1328
      %1330 = vrot.lane.b32.xlu0 %v1181, 80
      %v1331 = vpop.permute.xlu0 %1330
      %1332 = vrot.lane.b32.xlu0 %v1184, 80
      %v1333 = vpop.permute.xlu0 %1332
      %1334 = vrot.lane.b32.xlu0 %v1187, 80
      %v1335 = vpop.permute.xlu0 %1334
      %1336 = vrot.lane.b32.xlu0 %v1190, 80
      %v1337 = vpop.permute.xlu0 %1336
      %1338 = vrot.lane.b32.xlu0 %v1193, 80
      %v1339 = vpop.permute.xlu0 %1338
      %1340 = vrot.lane.b32.xlu0 %v1196, 80
      %v1341 = vpop.permute.xlu0 %1340
      %1342 = vrot.lane.b32.xlu0 %v1199, 80
      %v1343 = vpop.permute.xlu0 %1342
      %1344 = vrot.lane.b32.xlu0 %v1202, 80
      %v1345 = vpop.permute.xlu0 %1344
      %1346 = vrot.lane.b32.xlu0 %v1315, 80
      %v1347 = vpop.permute.xlu0 %1346
      %1349 = vrot.lane.b32.xlu0 %v865, 96
      %v1350 = vpop.permute.xlu0 %1349
      %1351 = vrot.lane.b32.xlu0 %v867, 96
      %v1352 = vpop.permute.xlu0 %1351
      %1353 = vrot.lane.b32.xlu0 %v869, 96
      %v1354 = vpop.permute.xlu0 %1353
      %1355 = vrot.lane.b32.xlu0 %v871, 96
      %v1356 = vpop.permute.xlu0 %1355
      %1357 = vrot.lane.b32.xlu0 %v873, 96
      %v1358 = vpop.permute.xlu0 %1357
      %1359 = vrot.lane.b32.xlu0 %v875, 96
      %v1360 = vpop.permute.xlu0 %1359
      %1361 = vrot.lane.b32.xlu0 %v877, 96
      %v1362 = vpop.permute.xlu0 %1361
      %1363 = vrot.lane.b32.xlu0 %v879, 96
      %v1364 = vpop.permute.xlu0 %1363
      %1365 = vrot.lane.b32.xlu0 %v881, 96
      %v1366 = vpop.permute.xlu0 %1365
      %1367 = vrot.lane.b32.xlu0 %v883, 96
      %v1368 = vpop.permute.xlu0 %1367
      %1369 = vrot.lane.b32.xlu0 %v885, 96
      %v1370 = vpop.permute.xlu0 %1369
      %1371 = vrot.lane.b32.xlu0 %v887, 96
      %v1372 = vpop.permute.xlu0 %1371
      %1373 = vrot.lane.b32.xlu0 %v889, 96
      %v1374 = vpop.permute.xlu0 %1373
      %1375 = vrot.lane.b32.xlu0 %v891, 96
      %v1376 = vpop.permute.xlu0 %1375
      %1377 = vrot.lane.b32.xlu0 %v893, 96
      %v1378 = vpop.permute.xlu0 %1377
      %1379 = vrot.lane.b32.xlu0 %v895, 96
      %v1380 = vpop.permute.xlu0 %1379
      %v1382 = vshrl.u32 %v895, 16
      %v1384 = vshll.u32 %v895, 16
      %v1386 = vrot.slane %v1384, 1
      %v1387 = vor.u32 %v1382, %v1386
      %v1389 = vshll.u32 %v896, 16
      %v1391 = vrot.slane %v1389, 1
      %v1392 = vsel %vm897, %v1387, %v1391
      %1393 = vrot.lane.b32.xlu0 %v933, 112
      %v1394 = vpop.permute.xlu0 %1393
      %1395 = vrot.lane.b32.xlu0 %v945, 112
      %v1396 = vpop.permute.xlu0 %1395
      %1397 = vrot.lane.b32.xlu0 %v957, 112
      %v1398 = vpop.permute.xlu0 %1397
      %1399 = vrot.lane.b32.xlu0 %v969, 112
      %v1400 = vpop.permute.xlu0 %1399
      %1401 = vrot.lane.b32.xlu0 %v981, 112
      %v1402 = vpop.permute.xlu0 %1401
      %1403 = vrot.lane.b32.xlu0 %v993, 112
      %v1404 = vpop.permute.xlu0 %1403
      %1405 = vrot.lane.b32.xlu0 %v1005, 112
      %v1406 = vpop.permute.xlu0 %1405
      %1407 = vrot.lane.b32.xlu0 %v1017, 112
      %v1408 = vpop.permute.xlu0 %1407
      %1409 = vrot.lane.b32.xlu0 %v1029, 112
      %v1410 = vpop.permute.xlu0 %1409
      %1411 = vrot.lane.b32.xlu0 %v1041, 112
      %v1412 = vpop.permute.xlu0 %1411
      %1413 = vrot.lane.b32.xlu0 %v1053, 112
      %v1414 = vpop.permute.xlu0 %1413
      %1415 = vrot.lane.b32.xlu0 %v1065, 112
      %v1416 = vpop.permute.xlu0 %1415
      %1417 = vrot.lane.b32.xlu0 %v1077, 112
      %v1418 = vpop.permute.xlu0 %1417
      %1419 = vrot.lane.b32.xlu0 %v1089, 112
      %v1420 = vpop.permute.xlu0 %1419
      %1421 = vrot.lane.b32.xlu0 %v1279, 112
      %v1422 = vpop.permute.xlu0 %1421
      %1423 = vrot.lane.b32.xlu0 %v1392, 112
      %v1424 = vpop.permute.xlu0 %1423
      %v1426 = vrot.slane %v895, 1
      %v1427 = vrot.slane %v896, 1
      %v1428 = vsel %vm1154, %v1426, %v1427
      %vm1429 = vcmask 130048
      %v1431 = vsel %vm1429, %v861, %v1091
      %v1433 = vsel %vm1429, %v863, %v1093
      %v1435 = vsel %vm1429, %v865, %v1095
      %v1437 = vsel %vm1429, %v867, %v1097
      %v1439 = vsel %vm1429, %v869, %v1099
      %v1441 = vsel %vm1429, %v871, %v1101
      %v1443 = vsel %vm1429, %v873, %v1103
      %v1445 = vsel %vm1429, %v875, %v1105
      %v1447 = vsel %vm1429, %v877, %v1107
      %v1449 = vsel %vm1429, %v879, %v1109
      %v1451 = vsel %vm1429, %v881, %v1111
      %v1453 = vsel %vm1429, %v883, %v1113
      %v1455 = vsel %vm1429, %v885, %v1115
      %v1457 = vsel %vm1429, %v887, %v1117
      %v1459 = vsel %vm1429, %v889, %v1119
      %v1461 = vsel %vm1429, %v891, %v1121
      %vm1462 = vcmask 261120
      %v1464 = vsel %vm1462, %v1431, %v1204
      %v1466 = vsel %vm1462, %v1433, %v1206
      %v1468 = vsel %vm1462, %v1435, %v1208
      %v1470 = vsel %vm1462, %v1437, %v1210
      %v1472 = vsel %vm1462, %v1439, %v1212
      %v1474 = vsel %vm1462, %v1441, %v1214
      %v1476 = vsel %vm1462, %v1443, %v1216
      %v1478 = vsel %vm1462, %v1445, %v1218
      %v1480 = vsel %vm1462, %v1447, %v1220
      %v1482 = vsel %vm1462, %v1449, %v1222
      %v1484 = vsel %vm1462, %v1451, %v1224
      %v1486 = vsel %vm1462, %v1453, %v1226
      %v1488 = vsel %vm1462, %v1455, %v1228
      %v1490 = vsel %vm1462, %v1457, %v1230
      %v1492 = vsel %vm1462, %v1459, %v1232
      %v1494 = vsel %vm1462, %v1461, %v1234
      %vm1495 = vcmask 392192
      %v1497 = vsel %vm1495, %v1464, %v1237
      %v1499 = vsel %vm1495, %v1466, %v1239
      %v1501 = vsel %vm1495, %v1468, %v1241
      %v1503 = vsel %vm1495, %v1470, %v1243
      %v1505 = vsel %vm1495, %v1472, %v1245
      %v1507 = vsel %vm1495, %v1474, %v1247
      %v1509 = vsel %vm1495, %v1476, %v1249
      %v1511 = vsel %vm1495, %v1478, %v1251
      %v1513 = vsel %vm1495, %v1480, %v1253
      %v1515 = vsel %vm1495, %v1482, %v1255
      %v1517 = vsel %vm1495, %v1484, %v1257
      %v1519 = vsel %vm1495, %v1486, %v1259
      %v1521 = vsel %vm1495, %v1488, %v1261
      %v1523 = vsel %vm1495, %v1490, %v1263
      %v1525 = vsel %vm1495, %v1492, %v1265
      %v1527 = vsel %vm1495, %v1494, %v1267
      %vm1528 = vcmask 523264
      %v1530 = vsel %vm1528, %v1497, %v1281
      %v1532 = vsel %vm1528, %v1499, %v1283
      %v1534 = vsel %vm1528, %v1501, %v1285
      %v1536 = vsel %vm1528, %v1503, %v1287
      %v1538 = vsel %vm1528, %v1505, %v1289
      %v1540 = vsel %vm1528, %v1507, %v1291
      %v1542 = vsel %vm1528, %v1509, %v1293
      %v1544 = vsel %vm1528, %v1511, %v1295
      %v1546 = vsel %vm1528, %v1513, %v1297
      %v1548 = vsel %vm1528, %v1515, %v1299
      %v1550 = vsel %vm1528, %v1517, %v1301
      %v1552 = vsel %vm1528, %v1519, %v1303
      %v1554 = vsel %vm1528, %v1521, %v1305
      %v1556 = vsel %vm1528, %v1523, %v1307
      %v1558 = vsel %vm1528, %v1525, %v1309
      %v1560 = vsel %vm1528, %v1527, %v1311
      %vm1561 = vcmask 654336
      %v1563 = vsel %vm1561, %v1530, %v1317
      %v1565 = vsel %vm1561, %v1532, %v1319
      %v1567 = vsel %vm1561, %v1534, %v1321
      %v1569 = vsel %vm1561, %v1536, %v1323
      %v1571 = vsel %vm1561, %v1538, %v1325
      %v1573 = vsel %vm1561, %v1540, %v1327
      %v1575 = vsel %vm1561, %v1542, %v1329
      %v1577 = vsel %vm1561, %v1544, %v1331
      %v1579 = vsel %vm1561, %v1546, %v1333
      %v1581 = vsel %vm1561, %v1548, %v1335
      %v1583 = vsel %vm1561, %v1550, %v1337
      %v1585 = vsel %vm1561, %v1552, %v1339
      %v1587 = vsel %vm1561, %v1554, %v1341
      %v1589 = vsel %vm1561, %v1556, %v1343
      %v1591 = vsel %vm1561, %v1558, %v1345
      %v1593 = vsel %vm1561, %v1560, %v1347
      %vm1594 = vcmask 785408
      %v1596 = vsel %vm1594, %v1563, %v1350
      %v1598 = vsel %vm1594, %v1565, %v1352
      %v1600 = vsel %vm1594, %v1567, %v1354
      %v1602 = vsel %vm1594, %v1569, %v1356
      %v1604 = vsel %vm1594, %v1571, %v1358
      %v1606 = vsel %vm1594, %v1573, %v1360
      %v1608 = vsel %vm1594, %v1575, %v1362
      %v1610 = vsel %vm1594, %v1577, %v1364
      %v1612 = vsel %vm1594, %v1579, %v1366
      %v1614 = vsel %vm1594, %v1581, %v1368
      %v1616 = vsel %vm1594, %v1583, %v1370
      %v1618 = vsel %vm1594, %v1585, %v1372
      %v1620 = vsel %vm1594, %v1587, %v1374
      %v1622 = vsel %vm1594, %v1589, %v1376
      %v1624 = vsel %vm1594, %v1591, %v1378
      %v1626 = vsel %vm1594, %v1593, %v1380
      %vm1627 = vcmask 916480
      %v1629 = vsel %vm1627, %v1596, %v1394
      %v1632 = vsel %vm1627, %v1598, %v1396
      %v1635 = vsel %vm1627, %v1600, %v1398
      %v1638 = vsel %vm1627, %v1602, %v1400
      %v1641 = vsel %vm1627, %v1604, %v1402
      %v1644 = vsel %vm1627, %v1606, %v1404
      %v1647 = vsel %vm1627, %v1608, %v1406
      %v1650 = vsel %vm1627, %v1610, %v1408
      %v1653 = vsel %vm1627, %v1612, %v1410
      %v1656 = vsel %vm1627, %v1614, %v1412
      %v1659 = vsel %vm1627, %v1616, %v1414
      %v1662 = vsel %vm1627, %v1618, %v1416
      %v1665 = vsel %vm1627, %v1620, %v1418
      %v1668 = vsel %vm1627, %v1622, %v1420
      %v1671 = vsel %vm1627, %v1624, %v1422
      %v1674 = vsel %vm1627, %v1626, %v1424
      %v1676 = vld [vmem:[%s4] sm:$0xf]
      %v1677 = vld [vmem:[%s4 + $0x4] sm:$0xf]
      %v1678 = vld [vmem:[%s4 + $0x8] sm:$0xf]
      %v1679 = vld [vmem:[%s4 + $0xc] sm:$0xf]
      %v1680 = vld [vmem:[%s4 + $0x10] sm:$0xf]
      %v1681 = vld [vmem:[%s4 + $0x14] sm:$0xf]
      %v1682 = vld [vmem:[%s4 + $0x18] sm:$0xf]
      %v1683 = vld [vmem:[%s4 + $0x1c] sm:$0xf]
      %v1684 = vld [vmem:[%s4 + $0x20] sm:$0xf]
      %v1685 = vld [vmem:[%s4 + $0x24] sm:$0xf]
      %v1686 = vld [vmem:[%s4 + $0x28] sm:$0xf]
      %v1687 = vld [vmem:[%s4 + $0x2c] sm:$0xf]
      %v1688 = vld [vmem:[%s4 + $0x30] sm:$0xf]
      %v1689 = vld [vmem:[%s4 + $0x34] sm:$0xf]
      %v1690 = vld [vmem:[%s4 + $0x38] sm:$0xf]
      %v1691 = vld [vmem:[%s4 + $0x3c] sm:$0xf]
      %v1692 = vld [vmem:[%s4 + $0x40] sm:$0xf]
      %v1693 = vld [vmem:[%s4 + $0x44] sm:$0xf]
      %v1694 = vld [vmem:[%s5] sm:$0x1]
      %v1696 = vlaneseq
      %v1697 = vshrl.u32 %v1696, 7
      %v1698 = vsub.s32 0, %v1697
      %v1699 = vrot.slane %v1694, %v1698
      %v1719 = vunpack.c.l.b16 %v1676
      %v1720 = vunpack.c.l.b16 %v1677
      %v1721 = vunpack.c.l.b16 %v1678
      %v1722 = vunpack.c.l.b16 %v1679
      %v1723 = vunpack.c.l.b16 %v1680
      %v1724 = vunpack.c.l.b16 %v1681
      %v1725 = vunpack.c.l.b16 %v1682
      %v1726 = vunpack.c.l.b16 %v1683
      %v1727 = vunpack.c.l.b16 %v1684
      %v1728 = vunpack.c.l.b16 %v1685
      %v1729 = vunpack.c.l.b16 %v1686
      %v1730 = vunpack.c.l.b16 %v1687
      %v1731 = vunpack.c.l.b16 %v1688
      %v1732 = vunpack.c.l.b16 %v1689
      %v1733 = vunpack.c.l.b16 %v1690
      %v1734 = vunpack.c.l.b16 %v1691
      %v1735 = vunpack.c.l.b16 %v1692
      %v1736 = vunpack.c.l.b16 %v1693
      %v1737 = vpack.c.b16 %v1720, %v1719
      %v1738 = vpack.c.b16 %v1722, %v1721
      %v1739 = vpack.c.b16 %v1724, %v1723
      %v1740 = vpack.c.b16 %v1726, %v1725
      %v1741 = vpack.c.b16 %v1728, %v1727
      %v1742 = vpack.c.b16 %v1730, %v1729
      %v1743 = vpack.c.b16 %v1732, %v1731
      %v1744 = vpack.c.b16 %v1734, %v1733
      %v1745 = vpack.c.b16 %v1736, %v1735
      %v1756 = vsel %vm1429, %v1163, 0
      %v1759 = vsel %vm1429, %v1166, 0
      %v1762 = vsel %vm1429, %v1169, 0
      %v1765 = vsel %vm1429, %v1172, 0
      %v1768 = vsel %vm1429, %v1175, 0
      %v1771 = vsel %vm1429, %v1178, 0
      %v1774 = vsel %vm1429, %v1181, 0
      %v1777 = vsel %vm1429, %v1184, 0
      %v1780 = vsel %vm1429, %v1187, 0
      %v1783 = vsel %vm1429, %v1190, 0
      %v1786 = vsel %vm1429, %v1193, 0
      %v1789 = vsel %vm1429, %v1196, 0
      %v1792 = vsel %vm1429, %v1199, 0
      %v1795 = vsel %vm1429, %v1202, 0
      %v1798 = vsel %vm1429, %v1315, 0
      %v1801 = vsel %vm1429, %v1428, 0
      %1803 = vmatprep.subr.bf16.mxu0 0
      %1804 = vmatpush1.bf16.msra.mxu0 %v1744
      %1805 = vmatprep.subr.bf16.mxu0 0
      %1806 = vmatpush1.bf16.msra.mxu0 %v1743
      %1807 = vmatprep.subr.bf16.mxu0 0
      %1808 = vmatpush1.bf16.msra.mxu0 %v1742
      %1809 = vmatprep.subr.bf16.mxu0 0
      %1810 = vmatpush1.bf16.msra.mxu0 %v1741
      %1811 = vmatprep.subr.bf16.mxu0 0
      %1812 = vmatpush1.bf16.msra.mxu0 %v1740
      %1813 = vmatprep.subr.bf16.mxu0 0
      %1814 = vmatpush1.bf16.msra.mxu0 %v1739
      %1815 = vmatprep.subr.bf16.mxu0 0
      %1816 = vmatpush1.bf16.msra.mxu0 %v1738
      %1817 = vmatprep.subr.bf16.mxu0 0
      %1818 = vmatpush1.bf16.msra.mxu0 %v1737
      %1819 = vmatprep.subr.bf16.mxu0 0
      %1820 = vmatpush2.bf16.msra.mxu0 0
      %1821 = vmatprep.subr.bf16.mxu0 0
      %1822 = vmatpush2.bf16.msra.mxu0 0
      %1823 = vmatprep.subr.bf16.mxu0 0
      %1824 = vmatpush2.bf16.msra.mxu0 0
      %1825 = vmatprep.subr.bf16.mxu0 0
      %1826 = vmatpush2.bf16.msra.mxu0 0
      %1827 = vmatprep.subr.bf16.mxu0 0
      %1828 = vmatpush2.bf16.msra.mxu0 0
      %1829 = vmatprep.subr.bf16.mxu0 0
      %1830 = vmatpush2.bf16.msra.mxu0 0
      %1831 = vmatprep.subr.bf16.mxu0 0
      %1832 = vmatpush2.bf16.msra.mxu0 0
      %1833 = vmatprep.subr.bf16.mxu0 0
      %1834 = vmatpush2.bf16.msra.mxu0 %v1745
      %1835 = vmatprep.mubr.bf16.mxu0 %v1756
      %1836 = vmatmul.mubr.bf16.gmra.mxu0 %v1629
      %v1837 = vpop.f32.mrf.mxu0
      %v1838 = vadd.f32 %v1699, %v1837
      %v1839 = vpop.f32.mrf.mxu0
      %v1840 = vpop.f32.mrf.mxu0
      %v1841 = vadd.f32 %v1699, %v1840
      %v1842 = vpop.f32.mrf.mxu0
      %1843 = vmatprep.mubr.bf16.mxu0 %v1759
      %1844 = vmatmul.mubr.bf16.gmra.mxu0 %v1632
      %v1845 = vpop.f32.mrf.mxu0
      %v1846 = vadd.f32 %v1699, %v1845
      %v1847 = vpop.f32.mrf.mxu0
      %v1848 = vpop.f32.mrf.mxu0
      %v1849 = vadd.f32 %v1699, %v1848
      %v1850 = vpop.f32.mrf.mxu0
      %1851 = vmatprep.mubr.bf16.mxu0 %v1762
      %1852 = vmatmul.mubr.bf16.gmra.mxu0 %v1635
      %v1853 = vpop.f32.mrf.mxu0
      %v1854 = vadd.f32 %v1699, %v1853
      %v1855 = vpop.f32.mrf.mxu0
      %v1856 = vpop.f32.mrf.mxu0
      %v1857 = vadd.f32 %v1699, %v1856
      %v1858 = vpop.f32.mrf.mxu0
      %1859 = vmatprep.mubr.bf16.mxu0 %v1765
      %1860 = vmatmul.mubr.bf16.gmra.mxu0 %v1638
      %v1861 = vpop.f32.mrf.mxu0
      %v1862 = vadd.f32 %v1699, %v1861
      %v1863 = vpop.f32.mrf.mxu0
      %v1864 = vpop.f32.mrf.mxu0
      %v1865 = vadd.f32 %v1699, %v1864
      %v1866 = vpop.f32.mrf.mxu0
      %1867 = vmatprep.mubr.bf16.mxu0 %v1768
      %1868 = vmatmul.mubr.bf16.gmra.mxu0 %v1641
      %v1869 = vpop.f32.mrf.mxu0
      %v1870 = vadd.f32 %v1699, %v1869
      %v1871 = vpop.f32.mrf.mxu0
      %v1872 = vpop.f32.mrf.mxu0
      %v1873 = vadd.f32 %v1699, %v1872
      %v1874 = vpop.f32.mrf.mxu0
      %1875 = vmatprep.mubr.bf16.mxu0 %v1771
      %1876 = vmatmul.mubr.bf16.gmra.mxu0 %v1644
      %v1877 = vpop.f32.mrf.mxu0
      %v1878 = vadd.f32 %v1699, %v1877
      %v1879 = vpop.f32.mrf.mxu0
      %v1880 = vpop.f32.mrf.mxu0
      %v1881 = vadd.f32 %v1699, %v1880
      %v1882 = vpop.f32.mrf.mxu0
      %1883 = vmatprep.mubr.bf16.mxu0 %v1774
      %1884 = vmatmul.mubr.bf16.gmra.mxu0 %v1647
      %v1885 = vpop.f32.mrf.mxu0
      %v1886 = vadd.f32 %v1699, %v1885
      %v1887 = vpop.f32.mrf.mxu0
      %v1888 = vpop.f32.mrf.mxu0
      %v1889 = vadd.f32 %v1699, %v1888
      %v1890 = vpop.f32.mrf.mxu0
      %1891 = vmatprep.mubr.bf16.mxu0 %v1777
      %1892 = vmatmul.mubr.bf16.gmra.mxu0 %v1650
      %v1893 = vpop.f32.mrf.mxu0
      %v1894 = vadd.f32 %v1699, %v1893
      %v1895 = vpop.f32.mrf.mxu0
      %v1896 = vpop.f32.mrf.mxu0
      %v1897 = vadd.f32 %v1699, %v1896
      %v1898 = vpop.f32.mrf.mxu0
      %1899 = vmatprep.mubr.bf16.mxu0 %v1780
      %1900 = vmatmul.mubr.bf16.gmra.mxu0 %v1653
      %v1901 = vpop.f32.mrf.mxu0
      %v1902 = vadd.f32 %v1699, %v1901
      %v1903 = vpop.f32.mrf.mxu0
      %v1904 = vpop.f32.mrf.mxu0
      %v1905 = vadd.f32 %v1699, %v1904
      %v1906 = vpop.f32.mrf.mxu0
      %1907 = vmatprep.mubr.bf16.mxu0 %v1783
      %1908 = vmatmul.mubr.bf16.gmra.mxu0 %v1656
      %v1909 = vpop.f32.mrf.mxu0
      %v1910 = vadd.f32 %v1699, %v1909
      %v1911 = vpop.f32.mrf.mxu0
      %v1912 = vpop.f32.mrf.mxu0
      %v1913 = vadd.f32 %v1699, %v1912
      %v1914 = vpop.f32.mrf.mxu0
      %1915 = vmatprep.mubr.bf16.mxu0 %v1786
      %1916 = vmatmul.mubr.bf16.gmra.mxu0 %v1659
      %v1917 = vpop.f32.mrf.mxu0
      %v1918 = vadd.f32 %v1699, %v1917
      %v1919 = vpop.f32.mrf.mxu0
      %v1920 = vpop.f32.mrf.mxu0
      %v1921 = vadd.f32 %v1699, %v1920
      %v1922 = vpop.f32.mrf.mxu0
      %1923 = vmatprep.mubr.bf16.mxu0 %v1789
      %1924 = vmatmul.mubr.bf16.gmra.mxu0 %v1662
      %v1925 = vpop.f32.mrf.mxu0
      %v1926 = vadd.f32 %v1699, %v1925
      %v1927 = vpop.f32.mrf.mxu0
      %v1928 = vpop.f32.mrf.mxu0
      %v1929 = vadd.f32 %v1699, %v1928
      %v1930 = vpop.f32.mrf.mxu0
      %1931 = vmatprep.mubr.bf16.mxu0 %v1792
      %1932 = vmatmul.mubr.bf16.gmra.mxu0 %v1665
      %v1933 = vpop.f32.mrf.mxu0
      %v1934 = vadd.f32 %v1699, %v1933
      %v1935 = vpop.f32.mrf.mxu0
      %v1936 = vpop.f32.mrf.mxu0
      %v1937 = vadd.f32 %v1699, %v1936
      %v1938 = vpop.f32.mrf.mxu0
      %1939 = vmatprep.mubr.bf16.mxu0 %v1795
      %1940 = vmatmul.mubr.bf16.gmra.mxu0 %v1668
      %v1941 = vpop.f32.mrf.mxu0
      %v1942 = vadd.f32 %v1699, %v1941
      %v1943 = vpop.f32.mrf.mxu0
      %v1944 = vpop.f32.mrf.mxu0
      %v1945 = vadd.f32 %v1699, %v1944
      %v1946 = vpop.f32.mrf.mxu0
      %1947 = vmatprep.mubr.bf16.mxu0 %v1798
      %1948 = vmatmul.mubr.bf16.gmra.mxu0 %v1671
      %v1949 = vpop.f32.mrf.mxu0
      %v1950 = vadd.f32 %v1699, %v1949
      %v1951 = vpop.f32.mrf.mxu0
      %v1952 = vpop.f32.mrf.mxu0
      %v1953 = vadd.f32 %v1699, %v1952
      %v1954 = vpop.f32.mrf.mxu0
      %1955 = vmatprep.mubr.bf16.mxu0 %v1801
      %1956 = vmatmul.mubr.bf16.gmra.mxu0 %v1674
      %v1957 = vpop.f32.mrf.mxu0
      %v1958 = vadd.f32 %v1699, %v1957
      %v1959 = vpop.f32.mrf.mxu0
      %v1960 = vpop.f32.mrf.mxu0
      %v1961 = vadd.f32 %v1699, %v1960
      %v1962 = vpop.f32.mrf.mxu0
      %1963 = vdwg.mxu0
      %vm1964 = vcmask 72704
      %1965 = vst.msk [vmem:[%s251] sm:$0xff] %vm1964, %v1838
      %1966 = vst.msk [vmem:[%s251 + $0x8] sm:$0xff] %vm1964, %v1841
      %1967 = vst.msk [vmem:[%s251 + $0x10] sm:$0xff] %vm1964, %v1846
      %1968 = vst.msk [vmem:[%s251 + $0x18] sm:$0xff] %vm1964, %v1849
      %1969 = vst.msk [vmem:[%s251 + $0x20] sm:$0xff] %vm1964, %v1854
      %1970 = vst.msk [vmem:[%s251 + $0x28] sm:$0xff] %vm1964, %v1857
      %1971 = vst.msk [vmem:[%s251 + $0x30] sm:$0xff] %vm1964, %v1862
      %1972 = vst.msk [vmem:[%s251 + $0x38] sm:$0xff] %vm1964, %v1865
      %1973 = vst.msk [vmem:[%s251 + $0x40] sm:$0xff] %vm1964, %v1870
      %1974 = vst.msk [vmem:[%s251 + $0x48] sm:$0xff] %vm1964, %v1873
      %1975 = vst.msk [vmem:[%s251 + $0x50] sm:$0xff] %vm1964, %v1878
      %1976 = vst.msk [vmem:[%s251 + $0x58] sm:$0xff] %vm1964, %v1881
      %1977 = vst.msk [vmem:[%s251 + $0x60] sm:$0xff] %vm1964, %v1886
      %1978 = vst.msk [vmem:[%s251 + $0x68] sm:$0xff] %vm1964, %v1889
      %1979 = vst.msk [vmem:[%s251 + $0x70] sm:$0xff] %vm1964, %v1894
      %1980 = vst.msk [vmem:[%s251 + $0x78] sm:$0xff] %vm1964, %v1897
      %1981 = vst.msk [vmem:[%s251 + $0x80] sm:$0xff] %vm1964, %v1902
      %1982 = vst.msk [vmem:[%s251 + $0x88] sm:$0xff] %vm1964, %v1905
      %1983 = vst.msk [vmem:[%s251 + $0x90] sm:$0xff] %vm1964, %v1910
      %1984 = vst.msk [vmem:[%s251 + $0x98] sm:$0xff] %vm1964, %v1913
      %1985 = vst.msk [vmem:[%s251 + $0xa0] sm:$0xff] %vm1964, %v1918
      %1986 = vst.msk [vmem:[%s251 + $0xa8] sm:$0xff] %vm1964, %v1921
      %1987 = vst.msk [vmem:[%s251 + $0xb0] sm:$0xff] %vm1964, %v1926
      %1988 = vst.msk [vmem:[%s251 + $0xb8] sm:$0xff] %vm1964, %v1929
      %1989 = vst.msk [vmem:[%s251 + $0xc0] sm:$0xff] %vm1964, %v1934
      %1990 = vst.msk [vmem:[%s251 + $0xc8] sm:$0xff] %vm1964, %v1937
      %1991 = vst.msk [vmem:[%s251 + $0xd0] sm:$0xff] %vm1964, %v1942
      %1992 = vst.msk [vmem:[%s251 + $0xd8] sm:$0xff] %vm1964, %v1945
      %1993 = vst.msk [vmem:[%s251 + $0xe0] sm:$0xff] %vm1964, %v1950
      %1994 = vst.msk [vmem:[%s251 + $0xe8] sm:$0xff] %vm1964, %v1953
      %1995 = vst.msk [vmem:[%s251 + $0xf0] sm:$0xff] %vm1964, %v1958
      %1996 = vst.msk [vmem:[%s251 + $0xf8] sm:$0xff] %vm1964, %v1961
      %p1997 = scmp.lt.s32.totalorder %s17, 1
      %s1998 = scalar_select %p1997, %s17, 1
      %s1999 = smul.addr %s1998, 32
      %s2000 = smul.addr %s1999, 8
      %s2001 = scalar_lea.vmem %s6, %s2000
      // Predicated region
      $region45: #{n3block_forward.4} parent=43 // pred_check
        %p2002 = pneg %p166
      $region46: #{n3block_forward.4} parent=43 // pred_check_branch
        %2004 = sbr.rel (%p2002) target = $region48
      $region47: #{n3block_forward.4} parent=43 // pred_region
        _
      $region48: #{n3block_forward.4} parent=43 // pred_fallthru
        _
    $region44: #{n3block_forward.4} parent=5 // pred_fallthru
      _
    %p2005 = scmp.le.s32.totalorder 2, %s12
    // Predicated region
    $region49: #{n3block_forward.4} parent=5 // pred_check
      %p2006 = pneg %p2005
    $region50: #{n3block_forward.4} parent=5 // pred_check_branch
      %2008 = sbr.rel (%p2006) target = $region52
    $region51: #{n3block_forward.4} parent=5 // pred_region
      %s2009 = ssub.s32 %s12, 2
      // Predicated region
      $region53: #{n3block_forward.4} parent=51 // pred_check
        %p2010 = pneg %p172
      $region54: #{n3block_forward.4} parent=51 // pred_check_branch
        %2012 = sbr.rel (%p2010) target = $region56
      $region55: #{n3block_forward.4} parent=51 // pred_region
        %p2013 = scmp.lt.s32.totalorder %s18, 1
        %s2014 = scalar_select %p2013, %s18, 1
        %s2015 = smul.addr %s2014, 32
        %s2016 = smul.addr %s2015, 8
        %s2017 = scalar_lea.vmem %s6, %s2016
      $region56: #{n3block_forward.4} parent=51 // pred_fallthru
        _
    $region52: #{n3block_forward.4} parent=5 // pred_fallthru
      _
  $region6: #{n3block_forward.4} parent=0 // loop_footer
    %s16 = sadd.s32 1, %s12
  $region7: #{n3block_forward.4} parent=0 // loop_footer_branch
    %11 = sbr.rel target = $region3
  $region8: #{n3block_forward.4} parent=0 // loop_exit
    _

// kernel: n3block_forward.5
$region0: #{n3block_forward.5}
  #allocation0 [shape = 'u32[]', space=smem, size = 0x4, offset = 0x4, fixed_abs, tag = 'smem constant byte address 0x4 - core index']
  #allocation1 [shape = 'u32[144,128]{1,0:T(1,128)}', space=vmem, size = 0x12000, scoped, tag = 'internal scratch']
  %s0 = inlined_call_operand.vmem [shape: bf16[2,16,128], index: 0, kind: input, shape index: {}]
  %s1 = inlined_call_operand.vmem [shape: bf16[2,128,16], index: 1, kind: input, shape index: {}]
  %s2 = inlined_call_operand.vmem [shape: bf16[2,16,64], index: 2, kind: input, shape index: {}]
  %s3 = inlined_call_operand.vmem [shape: f32[2,16,1], index: 3, kind: input, shape index: {}]
  %s4 = inlined_call_operand.vmem [shape: f32[2,16,256], index: 4, kind: output, shape index: {}]
  %s5 = sld [smem:[#allocation0]]
  $region49: #{n3block_forward.5} parent=0
    _
  %s7 = ssub.s32 1, %s5
  %s8 = scalar_select 0, %s7, %s5
  loop: start=0, step=1, limit=4
  $region2: #{n3block_forward.5} parent=0 // loop_pre_header
    _
  $region3: #{n3block_forward.5} parent=0 // loop_header
    %s10 = sphi 0, %s14
    %p11 = scmp.ge.s32.totalorder %s10, 4
    %s17 = sphi 0, %s29
    %s18 = sphi 0, %s25
    %s19 = sphi 0, %s17
    %s20 = sphi 0, %s18
    %s21 = sphi 0, %s19
    %s22 = sphi 0, %s20
    %s34 = sphi 0, %s36
    %s37 = sphi 0, %s34
    %s38 = sphi 0, %s37
    %s54 = sphi 0, %s38
    %s60 = sphi 0, %s62
    %s63 = sphi 0, %s60
    %s64 = sphi 0, %s63
    %s80 = sphi 0, %s64
    %s86 = sphi 0, %s88
    %s89 = sphi 0, %s86
    %s90 = sphi 0, %s89
    %s106 = sphi 0, %s90
    %s114 = sphi 0, %s116
    %s117 = sphi 0, %s114
    %s118 = sphi 0, %s117
    %s134 = sphi 0, %s118
    %s142 = sphi 0, %s144
    %s145 = sphi 0, %s142
    %s146 = sphi 0, %s145
    %s162 = sphi 0, %s146
  $region4: #{n3block_forward.5} parent=0 // loop_header_branch
    %13 = sbr.rel (%p11) target = $region8
  $region5: #{n3block_forward.5} parent=0 // loop_body
    %s15 = ssub.s32 %s10, 1
    %s16 = ssub.s32 %s10, 2
    %s23 = sadd.s32 1, %s18
    %p24 = scmp.ge.s32.totalorder %s23, 1
    %s25 = scalar_select %p24, 0, %s23
    %s26 = sadd.s32 1, %s17
    %s27 = scalar_select %p24, %s26, %s17
    %p28 = scmp.ge.s32.totalorder %s27, 2
    %s29 = scalar_select %p28, 0, %s27
    %s30 = ssub.s32 %s17, %s29
    %s31 = ssub.s32 %s18, %s25
    %s32 = sor.u32 %s30, %s31
    %p33 = scmp.eq.s32.totalorder %s32, 0
    %s35 = sadd.s32 %s34, 1
    %s36 = scalar_select %p33, %s34, %s35
    %p39 = pneg %p33
    %p40 = scmp.eq.s32.totalorder %s10, 1
    %p41 = por %p39, %p40
    %p42 = scmp.ne.s32.totalorder %s34, %s37
    %p43 = scmp.eq.s32.totalorder %s10, 0
    %p44 = por %p42, %p43
    %p45 = scmp.ne.s32.totalorder %s34, %s37
    %p46 = scmp.eq.s32.totalorder %s15, 1
    %p47 = por %p45, %p46
    %p48 = scmp.ne.s32.totalorder %s37, %s38
    %p49 = scmp.eq.s32.totalorder %s15, 0
    %p50 = por %p48, %p49
    %p51 = scmp.ne.s32.totalorder %s37, %s38
    %p52 = scmp.eq.s32.totalorder %s16, 1
    %p53 = por %p51, %p52
    %p55 = scmp.ne.s32.totalorder %s38, %s54
    %p56 = scmp.eq.s32.totalorder %s16, 0
    %p57 = por %p55, %p56
    %s58 = ssub.s32 %s17, %s29
    %p59 = scmp.eq.s32.totalorder %s58, 0
    %s61 = sadd.s32 %s60, 1
    %s62 = scalar_select %p59, %s60, %s61
    %p65 = pneg %p59
    %p66 = scmp.eq.s32.totalorder %s10, 1
    %p67 = por %p65, %p66
    %p68 = scmp.ne.s32.totalorder %s60, %s63
    %p69 = scmp.eq.s32.totalorder %s10, 0
    %p70 = por %p68, %p69
    %p71 = scmp.ne.s32.totalorder %s60, %s63
    %p72 = scmp.eq.s32.totalorder %s15, 1
    %p73 = por %p71, %p72
    %p74 = scmp.ne.s32.totalorder %s63, %s64
    %p75 = scmp.eq.s32.totalorder %s15, 0
    %p76 = por %p74, %p75
    %p77 = scmp.ne.s32.totalorder %s63, %s64
    %p78 = scmp.eq.s32.totalorder %s16, 1
    %p79 = por %p77, %p78
    %p81 = scmp.ne.s32.totalorder %s64, %s80
    %p82 = scmp.eq.s32.totalorder %s16, 0
    %p83 = por %p81, %p82
    %s84 = ssub.s32 %s17, %s29
    %p85 = scmp.eq.s32.totalorder %s84, 0
    %s87 = sadd.s32 %s86, 1
    %s88 = scalar_select %p85, %s86, %s87
    %p91 = pneg %p85
    %p92 = scmp.eq.s32.totalorder %s10, 1
    %p93 = por %p91, %p92
    %p94 = scmp.ne.s32.totalorder %s86, %s89
    %p95 = scmp.eq.s32.totalorder %s10, 0
    %p96 = por %p94, %p95
    %p97 = scmp.ne.s32.totalorder %s86, %s89
    %p98 = scmp.eq.s32.totalorder %s15, 1
    %p99 = por %p97, %p98
    %p100 = scmp.ne.s32.totalorder %s89, %s90
    %p101 = scmp.eq.s32.totalorder %s15, 0
    %p102 = por %p100, %p101
    %p103 = scmp.ne.s32.totalorder %s89, %s90
    %p104 = scmp.eq.s32.totalorder %s16, 1
    %p105 = por %p103, %p104
    %p107 = scmp.ne.s32.totalorder %s90, %s106
    %p108 = scmp.eq.s32.totalorder %s16, 0
    %p109 = por %p107, %p108
    %s110 = ssub.s32 %s17, %s29
    %s111 = ssub.s32 %s18, %s25
    %s112 = sor.u32 %s110, %s111
    %p113 = scmp.eq.s32.totalorder %s112, 0
    %s115 = sadd.s32 %s114, 1
    %s116 = scalar_select %p113, %s114, %s115
    %p119 = pneg %p113
    %p120 = scmp.eq.s32.totalorder %s10, 1
    %p121 = por %p119, %p120
    %p122 = scmp.ne.s32.totalorder %s114, %s117
    %p123 = scmp.eq.s32.totalorder %s10, 0
    %p124 = por %p122, %p123
    %p125 = scmp.ne.s32.totalorder %s114, %s117
    %p126 = scmp.eq.s32.totalorder %s15, 1
    %p127 = por %p125, %p126
    %p128 = scmp.ne.s32.totalorder %s117, %s118
    %p129 = scmp.eq.s32.totalorder %s15, 0
    %p130 = por %p128, %p129
    %p131 = scmp.ne.s32.totalorder %s117, %s118
    %p132 = scmp.eq.s32.totalorder %s16, 1
    %p133 = por %p131, %p132
    %p135 = scmp.ne.s32.totalorder %s118, %s134
    %p136 = scmp.eq.s32.totalorder %s16, 0
    %p137 = por %p135, %p136
    %s138 = ssub.s32 %s17, %s29
    %s139 = ssub.s32 %s18, %s25
    %s140 = sor.u32 %s138, %s139
    %p141 = scmp.eq.s32.totalorder %s140, 0
    %s143 = sadd.s32 %s142, 1
    %s144 = scalar_select %p141, %s142, %s143
    %p147 = pneg %p141
    %p148 = scmp.eq.s32.totalorder %s10, 1
    %p149 = por %p147, %p148
    %p150 = scmp.ne.s32.totalorder %s142, %s145
    %p151 = scmp.eq.s32.totalorder %s10, 0
    %p152 = por %p150, %p151
    %p153 = scmp.ne.s32.totalorder %s142, %s145
    %p154 = scmp.eq.s32.totalorder %s15, 1
    %p155 = por %p153, %p154
    %p156 = scmp.ne.s32.totalorder %s145, %s146
    %p157 = scmp.eq.s32.totalorder %s15, 0
    %p158 = por %p156, %p157
    %p159 = scmp.ne.s32.totalorder %s145, %s146
    %p160 = scmp.eq.s32.totalorder %s16, 1
    %p161 = por %p159, %p160
    %p163 = scmp.ne.s32.totalorder %s146, %s162
    %p164 = scmp.eq.s32.totalorder %s16, 0
    %p165 = por %p163, %p164
    %p166 = scmp.le.s32.totalorder 1, %s10
    %p167 = scmp.lt.s32.totalorder %s10, 3
    %p168 = pnand %p166, %p167
    %p169 = pneg %p168
    // Predicated region
    $region9: #{n3block_forward.5} parent=5 // pred_check
      _
    $region10: #{n3block_forward.5} parent=5 // pred_check_branch
      %171 = sbr.rel (%p168) target = $region12
    $region11: #{n3block_forward.5} parent=5 // pred_region
      %s172 = ssub.s32 %s10, 1
    $region12: #{n3block_forward.5} parent=5 // pred_fallthru
      _
    %p173 = scmp.lt.s32.totalorder %s10, 2
    // Predicated region
    $region13: #{n3block_forward.5} parent=5 // pred_check
      %p174 = pneg %p173
    $region14: #{n3block_forward.5} parent=5 // pred_check_branch
      %176 = sbr.rel (%p174) target = $region16
    $region15: #{n3block_forward.5} parent=5 // pred_region
      // Predicated region
      $region17: #{n3block_forward.5} parent=15 // pred_check
        %p177 = pneg %p44
      $region18: #{n3block_forward.5} parent=15 // pred_check_branch
        %179 = sbr.rel (%p177) target = $region20
      $region19: #{n3block_forward.5} parent=15 // pred_region
        %s180 = smul.u32 2, %s18
        %p181 = scmp.lt.s32.totalorder %s17, 1
        %s182 = scalar_select %p181, %s17, 1
        %p183 = scmp.lt.s32.totalorder %s180, 1
        %s184 = scalar_select %p183, %s180, 1
        %s185 = smul.addr %s182, 2
        %s186 = sadd.s32 %s184, %s185
        %s187 = smul.addr %s186, 4
        %s188 = scalar_lea.vmem %s0, %s187
        %s189 = smul.u32 2, %s18
      $region20: #{n3block_forward.5} parent=15 // pred_fallthru
        _
      // Predicated region
      $region21: #{n3block_forward.5} parent=15 // pred_check
        %p190 = pneg %p70
      $region22: #{n3block_forward.5} parent=15 // pred_check_branch
        %192 = sbr.rel (%p190) target = $region24
      $region23: #{n3block_forward.5} parent=15 // pred_region
        %p193 = scmp.lt.s32.totalorder %s17, 1
        %s194 = scalar_select %p193, %s17, 1
        %s195 = smul.addr %s194, 16
        %s196 = smul.addr %s195, 4
        %s197 = scalar_lea.vmem %s1, %s196
      $region24: #{n3block_forward.5} parent=15 // pred_fallthru
        _
      // Predicated region
      $region25: #{n3block_forward.5} parent=15 // pred_check
        %p198 = pneg %p96
      $region26: #{n3block_forward.5} parent=15 // pred_check_branch
        %200 = sbr.rel (%p198) target = $region28
      $region27: #{n3block_forward.5} parent=15 // pred_region
        %p201 = scmp.lt.s32.totalorder %s17, 1
        %s202 = scalar_select %p201, %s17, 1
        %s203 = smul.addr %s202, 2
        %s204 = smul.addr %s203, 4
        %s205 = scalar_lea.vmem %s2, %s204
      $region28: #{n3block_forward.5} parent=15 // pred_fallthru
        _
      // Predicated region
      $region29: #{n3block_forward.5} parent=15 // pred_check
        %p206 = pneg %p124
      $region30: #{n3block_forward.5} parent=15 // pred_check_branch
        %208 = sbr.rel (%p206) target = $region32
      $region31: #{n3block_forward.5} parent=15 // pred_region
        %s209 = smul.u32 2, %s18
        %p210 = scmp.lt.s32.totalorder %s17, 1
        %s211 = scalar_select %p210, %s17, 1
        %p212 = scmp.lt.s32.totalorder %s209, 1
        %s213 = scalar_select %p212, %s209, 1
        %s214 = smul.addr %s211, 2
        %s215 = sadd.s32 %s213, %s214
        %s216 = smul.addr %s215, 8
        %s217 = scalar_lea.vmem %s3, %s216
        %s218 = smul.u32 2, %s18
      $region32: #{n3block_forward.5} parent=15 // pred_fallthru
        _
    $region16: #{n3block_forward.5} parent=5 // pred_fallthru
      _
    %p219 = scmp.le.s32.totalorder 1, %s10
    %p220 = scmp.lt.s32.totalorder %s10, 3
    %p221 = pnand %p219, %p220
    %p222 = pneg %p221
    // Predicated region
    $region33: #{n3block_forward.5} parent=5 // pred_check
      _
    $region34: #{n3block_forward.5} parent=5 // pred_check_branch
      %224 = sbr.rel (%p221) target = $region36
    $region35: #{n3block_forward.5} parent=5 // pred_region
      %s225 = ssub.s32 %s10, 1
      %s226 = smul.u32 2, %s20
      %p227 = scmp.lt.s32.totalorder %s19, 1
      %s228 = scalar_select %p227, %s19, 1
      %p229 = scmp.lt.s32.totalorder %s226, 1
      %s230 = scalar_select %p229, %s226, 1
      %s231 = smul.addr %s228, 2
      %s232 = sadd.s32 %s230, %s231
      %s233 = smul.addr %s232, 4
      %s234 = scalar_lea.vmem %s0, %s233
      %p235 = pneg %p50
      %p236 = pneg %p47
      %p237 = scmp.lt.s32.totalorder %s19, 1
      %s238 = scalar_select %p237, %s19, 1
      %s239 = smul.addr %s238, 16
      %s240 = smul.addr %s239, 4
      %s241 = scalar_lea.vmem %s1, %s240
      %p242 = pneg %p76
      %p243 = pneg %p73
      %p244 = scmp.lt.s32.totalorder %s19, 1
      %s245 = scalar_select %p244, %s19, 1
      %s246 = smul.addr %s245, 2
      %s247 = smul.addr %s246, 4
      %s248 = scalar_lea.vmem %s2, %s247
      %p249 = pneg %p102
      %p250 = pneg %p99
      %s251 = smul.u32 2, %s20
      %p252 = scmp.lt.s32.totalorder %s19, 1
      %s253 = scalar_select %p252, %s19, 1
      %p254 = scmp.lt.s32.totalorder %s251, 1
      %s255 = scalar_select %p254, %s251, 1
      %s256 = smul.addr %s253, 2
      %s257 = sadd.s32 %s255, %s256
      %s258 = smul.addr %s257, 8
      %s259 = scalar_lea.vmem %s3, %s258
      %p260 = pneg %p130
      %p261 = pneg %p127
      %p262 = pneg %p158
      %p263 = pneg %p155
      %s264 = smul.u32 2, %s20
      %p265 = scmp.lt.s32.totalorder %s19, 1
      %s266 = scalar_select %p265, %s19, 1
      %p267 = scmp.lt.s32.totalorder %s264, 1
      %s268 = scalar_select %p267, %s264, 1
      %s269 = smul.addr %s268, 2
      %s270 = smul.addr %s266, 4
      %s271 = sadd.s32 %s269, %s270
      %s272 = smul.addr %s271, 8
      %s273 = scalar_lea.vmem %s4, %s272
      %s274 = smul.u32 2, %s20
      %p275 = scmp.lt.s32.totalorder %s19, 1
      %s276 = scalar_select %p275, %s19, 1
      %p277 = scmp.lt.s32.totalorder %s274, 1
      %s278 = scalar_select %p277, %s274, 1
      %s279 = smul.addr %s276, 2
      %s280 = sadd.s32 %s278, %s279
      %s281 = smul.addr %s280, 4
      %s282 = scalar_lea.vmem %s0, %s281
      %s283 = smul.u32 2, %s20
      %p284 = scmp.lt.s32.totalorder %s19, 1
      %s285 = scalar_select %p284, %s19, 1
      %s286 = smul.addr %s285, 16
      %s287 = smul.addr %s286, 4
      %s288 = scalar_lea.vmem %s1, %s287
      %p289 = scmp.lt.s32.totalorder %s19, 1
      %s290 = scalar_select %p289, %s19, 1
      %s291 = smul.addr %s290, 2
      %s292 = smul.addr %s291, 4
      %s293 = scalar_lea.vmem %s2, %s292
      %s294 = smul.u32 2, %s20
      %p295 = scmp.lt.s32.totalorder %s19, 1
      %s296 = scalar_select %p295, %s19, 1
      %p297 = scmp.lt.s32.totalorder %s294, 1
      %s298 = scalar_select %p297, %s294, 1
      %s299 = smul.addr %s296, 2
      %s300 = sadd.s32 %s298, %s299
      %s301 = smul.addr %s300, 8
      %s302 = scalar_lea.vmem %s3, %s301
      %s303 = smul.u32 2, %s20
      %s304 = smul.u32 2, %s20
      %p305 = scmp.lt.s32.totalorder %s19, 1
      %s306 = scalar_select %p305, %s19, 1
      %p307 = scmp.lt.s32.totalorder %s304, 1
      %s308 = scalar_select %p307, %s304, 1
      %s309 = smul.addr %s308, 2
      %s310 = smul.addr %s306, 4
      %s311 = sadd.s32 %s309, %s310
      %s312 = smul.addr %s311, 8
      %s313 = scalar_lea.vmem %s4, %s312
      %s314 = smul.u32 2, %s20
      %v316 = vld [vmem:[%s282] sm:$0xf]
      %v317 = vld [vmem:[%s282 + $0x4] sm:$0xf]
      %v318 = vld [vmem:[%s288] sm:$0xf]
      %v319 = vld [vmem:[%s288 + $0x4] sm:$0xf]
      %v320 = vld [vmem:[%s288 + $0x8] sm:$0xf]
      %v321 = vld [vmem:[%s288 + $0xc] sm:$0xf]
      %v322 = vld [vmem:[%s288 + $0x10] sm:$0xf]
      %v323 = vld [vmem:[%s288 + $0x14] sm:$0xf]
      %v324 = vld [vmem:[%s288 + $0x18] sm:$0xf]
      %v325 = vld [vmem:[%s288 + $0x1c] sm:$0xf]
      %v326 = vld [vmem:[%s288 + $0x20] sm:$0xf]
      %v327 = vld [vmem:[%s288 + $0x24] sm:$0xf]
      %v328 = vld [vmem:[%s288 + $0x28] sm:$0xf]
      %v329 = vld [vmem:[%s288 + $0x2c] sm:$0xf]
      %v330 = vld [vmem:[%s288 + $0x30] sm:$0xf]
      %v331 = vld [vmem:[%s288 + $0x34] sm:$0xf]
      %v332 = vld [vmem:[%s288 + $0x38] sm:$0xf]
      %v333 = vld [vmem:[%s288 + $0x3c] sm:$0xf]
      %v334 = vld [vmem:[%s293] sm:$0xf]
      %v335 = vld [vmem:[%s293 + $0x4] sm:$0xf]
      %v336 = vld [vmem:[%s302] sm:$0xff]
      %v337 = vld [vmem:[%s302 + $0x8] sm:$0xff]
      %v340 = vunpack.c.l.b16 %v316
      %v341 = vunpack.c.l.b16 %v317
      %v342 = vpack.c.b16 %v341, %v340
      %v360 = vunpack.c.l.b16 %v318
      %v361 = vunpack.c.l.b16 %v319
      %v362 = vunpack.c.l.b16 %v320
      %v363 = vunpack.c.l.b16 %v321
      %v364 = vunpack.c.l.b16 %v322
      %v365 = vunpack.c.l.b16 %v323
      %v366 = vunpack.c.l.b16 %v324
      %v367 = vunpack.c.l.b16 %v325
      %v368 = vunpack.c.l.b16 %v326
      %v369 = vunpack.c.l.b16 %v327
      %v370 = vunpack.c.l.b16 %v328
      %v371 = vunpack.c.l.b16 %v329
      %v372 = vunpack.c.l.b16 %v330
      %v373 = vunpack.c.l.b16 %v331
      %v374 = vunpack.c.l.b16 %v332
      %v375 = vunpack.c.l.b16 %v333
      %v376 = vpack.c.b16 %v361, %v360
      %v377 = vpack.c.b16 %v363, %v362
      %v378 = vpack.c.b16 %v365, %v364
      %v379 = vpack.c.b16 %v367, %v366
      %v380 = vpack.c.b16 %v369, %v368
      %v381 = vpack.c.b16 %v371, %v370
      %v382 = vpack.c.b16 %v373, %v372
      %v383 = vpack.c.b16 %v375, %v374
      %392 = vmatprep.subr.bf16.mxu0 0
      %393 = vmatpush1.bf16.msra.mxu0 %v383
      %394 = vmatprep.subr.bf16.mxu0 0
      %395 = vmatpush1.bf16.msra.mxu0 %v382
      %396 = vmatprep.subr.bf16.mxu0 0
      %397 = vmatpush1.bf16.msra.mxu0 %v381
      %398 = vmatprep.subr.bf16.mxu0 0
      %399 = vmatpush1.bf16.msra.mxu0 %v380
      %400 = vmatprep.subr.bf16.mxu0 0
      %401 = vmatpush1.bf16.msra.mxu0 %v379
      %402 = vmatprep.subr.bf16.mxu0 0
      %403 = vmatpush1.bf16.msra.mxu0 %v378
      %404 = vmatprep.subr.bf16.mxu0 0
      %405 = vmatpush1.bf16.msra.mxu0 %v377
      %406 = vmatprep.subr.bf16.mxu0 0
      %407 = vmatpush1.bf16.msra.mxu0 %v376
      %408 = vmatprep.subr.bf16.mxu0 0
      %409 = vmatpush2.bf16.msra.mxu0 0
      %410 = vmatprep.subr.bf16.mxu0 0
      %411 = vmatpush2.bf16.msra.mxu0 0
      %412 = vmatprep.subr.bf16.mxu0 0
      %413 = vmatpush2.bf16.msra.mxu0 0
      %414 = vmatprep.subr.bf16.mxu0 0
      %415 = vmatpush2.bf16.msra.mxu0 0
      %416 = vmatprep.subr.bf16.mxu0 0
      %417 = vmatpush2.bf16.msra.mxu0 0
      %418 = vmatprep.subr.bf16.mxu0 0
      %419 = vmatpush2.bf16.msra.mxu0 0
      %420 = vmatprep.subr.bf16.mxu0 0
      %421 = vmatpush2.bf16.msra.mxu0 0
      %422 = vmatprep.subr.bf16.mxu0 0
      %423 = vmatpush2.bf16.msra.mxu0 0
      %424 = vmatprep.mubr.bf16.mxu0 0
      %425 = vmatmul.mubr.bf16.gmra.mxu0 %v342
      %v426 = vpop.f32.mrf.mxu0
      %v427 = vadd.f32 0.0, %v426
      %v428 = vpop.f32.mrf.mxu0
      %v429 = vpop.f32.mrf.mxu0
      %v430 = vadd.f32 0.0, %v429
      %v431 = vpop.f32.mrf.mxu0
      %432 = vdwg.mxu0
      %v433 = vunpack.c.l.bf16 %v318
      %v434 = vunpack.c.l.bf16 %v319
      %v435 = vunpack.c.l.bf16 %v320
      %v436 = vunpack.c.l.bf16 %v321
      %v437 = vunpack.c.l.bf16 %v322
      %v438 = vunpack.c.l.bf16 %v323
      %v439 = vunpack.c.l.bf16 %v324
      %v440 = vunpack.c.l.bf16 %v325
      %v441 = vunpack.c.l.bf16 %v326
      %v442 = vunpack.c.l.bf16 %v327
      %v443 = vunpack.c.l.bf16 %v328
      %v444 = vunpack.c.l.bf16 %v329
      %v445 = vunpack.c.l.bf16 %v330
      %v446 = vunpack.c.l.bf16 %v331
      %v447 = vunpack.c.l.bf16 %v332
      %v448 = vunpack.c.l.bf16 %v333
      %v449 = vmul.f32 %v433, %v433
      %v450 = vmul.f32 %v434, %v434
      %v451 = vmul.f32 %v435, %v435
      %v452 = vmul.f32 %v436, %v436
      %v453 = vmul.f32 %v437, %v437
      %v454 = vmul.f32 %v438, %v438
      %v455 = vmul.f32 %v439, %v439
      %v456 = vmul.f32 %v440, %v440
      %v457 = vmul.f32 %v441, %v441
      %v458 = vmul.f32 %v442, %v442
      %v459 = vmul.f32 %v443, %v443
      %v460 = vmul.f32 %v444, %v444
      %v461 = vmul.f32 %v445, %v445
      %v462 = vmul.f32 %v446, %v446
      %v463 = vmul.f32 %v447, %v447
      %v464 = vmul.f32 %v448, %v448
      %vm465 = vcmask 130048
      %v466 = vsel %vm465, %v449, 0.0
      %v467 = vsel %vm465, %v450, 0.0
      %v468 = vadd.f32 %v466, %v467
      %v469 = vsel %vm465, %v451, 0.0
      %v470 = vadd.f32 %v468, %v469
      %v471 = vsel %vm465, %v452, 0.0
      %v472 = vadd.f32 %v470, %v471
      %v473 = vsel %vm465, %v453, 0.0
      %v474 = vadd.f32 %v472, %v473
      %v475 = vsel %vm465, %v454, 0.0
      %v476 = vadd.f32 %v474, %v475
      %v477 = vsel %vm465, %v455, 0.0
      %v478 = vadd.f32 %v476, %v477
      %v479 = vsel %vm465, %v456, 0.0
      %v480 = vadd.f32 %v478, %v479
      %v481 = vsel %vm465, %v457, 0.0
      %v482 = vadd.f32 %v480, %v481
      %v483 = vsel %vm465, %v458, 0.0
      %v484 = vadd.f32 %v482, %v483
      %v485 = vsel %vm465, %v459, 0.0
      %v486 = vadd.f32 %v484, %v485
      %v487 = vsel %vm465, %v460, 0.0
      %v488 = vadd.f32 %v486, %v487
      %v489 = vsel %vm465, %v461, 0.0
      %v490 = vadd.f32 %v488, %v489
      %v491 = vsel %vm465, %v462, 0.0
      %v492 = vadd.f32 %v490, %v491
      %v493 = vsel %vm465, %v463, 0.0
      %v494 = vadd.f32 %v492, %v493
      %v495 = vsel %vm465, %v464, 0.0
      %v496 = vadd.f32 %v494, %v495
      %v497 = vrot.slane %v496, 4
      %v498 = vadd.f32 %v496, %v497
      %v499 = vrot.slane %v498, 2
      %v500 = vadd.f32 %v498, %v499
      %v501 = vrot.slane %v500, 1
      %v502 = vadd.f32 %v500, %v501
      %v503 = vmul.f32 %v427, 2.0
      %v504 = vmul.f32 %v430, 2.0
      %v505 = vsub.f32 %v502, %v503
      %v506 = vsub.f32 %v502, %v504
      %v507 = vsub.f32 0.0, %v336
      %v508 = vsub.f32 0.0, %v337
      %v509 = vmul.f32 %v507, 1.442695
      %v510 = vpow.pop %v509
      %v511 = vmul.f32 %v508, 1.442695
      %v512 = vpow.pop %v511
      %v513 = vsub.f32 0.0, %v505
      %v514 = vsub.f32 0.0, %v506
      %516 = vset.pattern.permute.xlu0 0
      %517 = vperm.xlu0 %516, %v510
      %v518 = vpop.permute.xlu0 %517
      %521 = vset.pattern.permute.xlu0 0
      %522 = vperm.xlu0 %521, %v512
      %v523 = vpop.permute.xlu0 %522
      %v525 = vmul.f32 %v513, %v518
      %v526 = vmul.f32 %v514, %v523
      %s527 = smul.u32 %s20, 16
      %v528 = vlaneseq
      %v529 = vshrl.u32 %v528, 7
      %v530 = vadd.s32 %v529, 8
      %v531 = vstv %s527
      %v532 = vadd.s32 %v531, %v529
      %v533 = vadd.s32 %v531, %v530
      %v534 = vlaneseq
      %v535 = vand.u32 %v534, 127
      %vm536 = vcmp.eq.s32.totalorder %v532, %v535
      %vm537 = vcmp.eq.s32.totalorder %v533, %v535
      %v538 = vsel %vm536, -1e+30, %v525
      %v539 = vsel %vm537, -1e+30, %v526
      %v540 = vsel %vm465, %v538, -inf
      %541 = vmax.xlane.f32.xlu0 %v540
      %v542 = vpop.xlane.xlu0 %541
      %v543 = vsel %vm465, %v539, -inf
      %544 = vmax.xlane.f32.xlu0 %v543
      %v545 = vpop.xlane.xlu0 %544
      %v546 = vsub.f32 %v538, %v542
      %v547 = vsub.f32 %v539, %v545
      %v548 = vmul.f32 %v546, 1.442695
      %v549 = vpow.pop %v548
      %v550 = vmul.f32 %v547, 1.442695
      %v551 = vpow.pop %v550
      %v552 = vsel %vm465, %v549, 0.0
      %553 = vadd.xlane.f32.xlu0 %v552
      %v554 = vpop.xlane.xlu0 %553
      %v555 = vsel %vm465, %v551, 0.0
      %556 = vadd.xlane.f32.xlu0 %v555
      %v557 = vpop.xlane.xlu0 %556
      %v558 = vrcp.pop %v554
      %v559 = vrcp.pop %v557
      %v560 = vmul.f32 %v549, %v558
      %v561 = vmul.f32 %v551, %v559
      %v562 = vpack.c.bf16 %v561, %v560
      %v565 = vunpack.c.l.b16 %v334
      %v566 = vunpack.c.l.b16 %v335
      %v567 = vpack.c.b16 %v566, %v565
      %v570 = vsel %vm465, %v562, 0
      %572 = vmatprep.subr.bf16.mxu0 0
      %573 = vmatpush1.bf16.msra.mxu0 0
      %574 = vmatprep.subr.bf16.mxu0 0
      %575 = vmatpush1.bf16.msra.mxu0 0
      %576 = vmatprep.subr.bf16.mxu0 0
      %577 = vmatpush1.bf16.msra.mxu0 0
      %578 = vmatprep.subr.bf16.mxu0 0
      %579 = vmatpush1.bf16.msra.mxu0 0
      %580 = vmatprep.subr.bf16.mxu0 0
      %581 = vmatpush1.bf16.msra.mxu0 0
      %582 = vmatprep.subr.bf16.mxu0 0
      %583 = vmatpush1.bf16.msra.mxu0 0
      %584 = vmatprep.subr.bf16.mxu0 0
      %585 = vmatpush1.bf16.msra.mxu0 0
      %586 = vmatprep.subr.bf16.mxu0 0
      %587 = vmatpush1.bf16.msra.mxu0 %v567
      %588 = vmatprep.subr.bf16.mxu0 0
      %589 = vmatpush2.bf16.msra.mxu0 0
      %590 = vmatprep.subr.bf16.mxu0 0
      %591 = vmatpush2.bf16.msra.mxu0 0
      %592 = vmatprep.subr.bf16.mxu0 0
      %593 = vmatpush2.bf16.msra.mxu0 0
      %594 = vmatprep.subr.bf16.mxu0 0
      %595 = vmatpush2.bf16.msra.mxu0 0
      %596 = vmatprep.subr.bf16.mxu0 0
      %597 = vmatpush2.bf16.msra.mxu0 0
      %598 = vmatprep.subr.bf16.mxu0 0
      %599 = vmatpush2.bf16.msra.mxu0 0
      %600 = vmatprep.subr.bf16.mxu0 0
      %601 = vmatpush2.bf16.msra.mxu0 0
      %602 = vmatprep.subr.bf16.mxu0 0
      %603 = vmatpush2.bf16.msra.mxu0 0
      %604 = vmatprep.mubr.bf16.mxu0 0
      %605 = vmatmul.mubr.bf16.gmra.mxu0 %v570
      %v606 = vpop.f32.mrf.mxu0
      %v607 = vadd.f32 0.0, %v606
      %v608 = vpop.f32.mrf.mxu0
      %v609 = vpop.f32.mrf.mxu0
      %v610 = vadd.f32 0.0, %v609
      %v611 = vpop.f32.mrf.mxu0
      %612 = vdwg.mxu0
      %v613 = vsub.f32 1.0, %v560
      %v614 = vsub.f32 1.0, %v561
      %v615 = vadd.f32 %v613, 1e-06
      %v616 = vadd.f32 %v614, 1e-06
      %v617 = vmul.f32 %v549, %v615
      %v618 = vmul.f32 %v551, %v616
      %v619 = vsel %vm465, %v617, 0.0
      %620 = vadd.xlane.f32.xlu0 %v619
      %v621 = vpop.xlane.xlu0 %620
      %v622 = vsel %vm465, %v618, 0.0
      %623 = vadd.xlane.f32.xlu0 %v622
      %v624 = vpop.xlane.xlu0 %623
      %v625 = vrcp.pop %v621
      %v626 = vrcp.pop %v624
      %v627 = vmul.f32 %v617, %v625
      %v628 = vmul.f32 %v618, %v626
      %v629 = vpack.c.bf16 %v628, %v627
      %v631 = vsel %vm465, %v629, 0
      %633 = vmatprep.subr.bf16.mxu0 0
      %634 = vmatpush1.bf16.msra.mxu0 0
      %635 = vmatprep.subr.bf16.mxu0 0
      %636 = vmatpush1.bf16.msra.mxu0 0
      %637 = vmatprep.subr.bf16.mxu0 0
      %638 = vmatpush1.bf16.msra.mxu0 0
      %639 = vmatprep.subr.bf16.mxu0 0
      %640 = vmatpush1.bf16.msra.mxu0 0
      %641 = vmatprep.subr.bf16.mxu0 0
      %642 = vmatpush1.bf16.msra.mxu0 0
      %643 = vmatprep.subr.bf16.mxu0 0
      %644 = vmatpush1.bf16.msra.mxu0 0
      %645 = vmatprep.subr.bf16.mxu0 0
      %646 = vmatpush1.bf16.msra.mxu0 0
      %647 = vmatprep.subr.bf16.mxu0 0
      %648 = vmatpush1.bf16.msra.mxu0 %v567
      %649 = vmatprep.subr.bf16.mxu0 0
      %650 = vmatpush2.bf16.msra.mxu0 0
      %651 = vmatprep.subr.bf16.mxu0 0
      %652 = vmatpush2.bf16.msra.mxu0 0
      %653 = vmatprep.subr.bf16.mxu0 0
      %654 = vmatpush2.bf16.msra.mxu0 0
      %655 = vmatprep.subr.bf16.mxu0 0
      %656 = vmatpush2.bf16.msra.mxu0 0
      %657 = vmatprep.subr.bf16.mxu0 0
      %658 = vmatpush2.bf16.msra.mxu0 0
      %659 = vmatprep.subr.bf16.mxu0 0
      %660 = vmatpush2.bf16.msra.mxu0 0
      %661 = vmatprep.subr.bf16.mxu0 0
      %662 = vmatpush2.bf16.msra.mxu0 0
      %663 = vmatprep.subr.bf16.mxu0 0
      %664 = vmatpush2.bf16.msra.mxu0 0
      %665 = vmatprep.mubr.bf16.mxu0 0
      %666 = vmatmul.mubr.bf16.gmra.mxu0 %v631
      %v667 = vpop.f32.mrf.mxu0
      %v668 = vadd.f32 0.0, %v667
      %v669 = vpop.f32.mrf.mxu0
      %v670 = vpop.f32.mrf.mxu0
      %v671 = vadd.f32 0.0, %v670
      %v672 = vpop.f32.mrf.mxu0
      %673 = vdwg.mxu0
      %v674 = vsub.f32 1.0, %v627
      %v675 = vsub.f32 1.0, %v628
      %v676 = vadd.f32 %v674, 1e-06
      %v677 = vadd.f32 %v675, 1e-06
      %v678 = vmul.f32 %v617, %v676
      %v679 = vmul.f32 %v618, %v677
      %v680 = vsel %vm465, %v678, 0.0
      %681 = vadd.xlane.f32.xlu0 %v680
      %v682 = vpop.xlane.xlu0 %681
      %v683 = vsel %vm465, %v679, 0.0
      %684 = vadd.xlane.f32.xlu0 %v683
      %v685 = vpop.xlane.xlu0 %684
      %v686 = vrcp.pop %v682
      %v687 = vrcp.pop %v685
      %v688 = vmul.f32 %v678, %v686
      %v689 = vmul.f32 %v679, %v687
      %v690 = vpack.c.bf16 %v689, %v688
      %v692 = vsel %vm465, %v690, 0
      %694 = vmatprep.subr.bf16.mxu0 0
      %695 = vmatpush1.bf16.msra.mxu0 0
      %696 = vmatprep.subr.bf16.mxu0 0
      %697 = vmatpush1.bf16.msra.mxu0 0
      %698 = vmatprep.subr.bf16.mxu0 0
      %699 = vmatpush1.bf16.msra.mxu0 0
      %700 = vmatprep.subr.bf16.mxu0 0
      %701 = vmatpush1.bf16.msra.mxu0 0
      %702 = vmatprep.subr.bf16.mxu0 0
      %703 = vmatpush1.bf16.msra.mxu0 0
      %704 = vmatprep.subr.bf16.mxu0 0
      %705 = vmatpush1.bf16.msra.mxu0 0
      %706 = vmatprep.subr.bf16.mxu0 0
      %707 = vmatpush1.bf16.msra.mxu0 0
      %708 = vmatprep.subr.bf16.mxu0 0
      %709 = vmatpush1.bf16.msra.mxu0 %v567
      %710 = vmatprep.subr.bf16.mxu0 0
      %711 = vmatpush2.bf16.msra.mxu0 0
      %712 = vmatprep.subr.bf16.mxu0 0
      %713 = vmatpush2.bf16.msra.mxu0 0
      %714 = vmatprep.subr.bf16.mxu0 0
      %715 = vmatpush2.bf16.msra.mxu0 0
      %716 = vmatprep.subr.bf16.mxu0 0
      %717 = vmatpush2.bf16.msra.mxu0 0
      %718 = vmatprep.subr.bf16.mxu0 0
      %719 = vmatpush2.bf16.msra.mxu0 0
      %720 = vmatprep.subr.bf16.mxu0 0
      %721 = vmatpush2.bf16.msra.mxu0 0
      %722 = vmatprep.subr.bf16.mxu0 0
      %723 = vmatpush2.bf16.msra.mxu0 0
      %724 = vmatprep.subr.bf16.mxu0 0
      %725 = vmatpush2.bf16.msra.mxu0 0
      %726 = vmatprep.mubr.bf16.mxu0 0
      %727 = vmatmul.mubr.bf16.gmra.mxu0 %v692
      %v728 = vpop.f32.mrf.mxu0
      %v729 = vadd.f32 0.0, %v728
      %v730 = vpop.f32.mrf.mxu0
      %v731 = vpop.f32.mrf.mxu0
      %v732 = vadd.f32 0.0, %v731
      %v733 = vpop.f32.mrf.mxu0
      %734 = vdwg.mxu0
      %v735 = vsub.f32 1.0, %v688
      %v736 = vsub.f32 1.0, %v689
      %v737 = vadd.f32 %v735, 1e-06
      %v738 = vadd.f32 %v736, 1e-06
      %v739 = vmul.f32 %v678, %v737
      %v740 = vmul.f32 %v679, %v738
      %v741 = vsel %vm465, %v739, 0.0
      %742 = vadd.xlane.f32.xlu0 %v741
      %v743 = vpop.xlane.xlu0 %742
      %v744 = vsel %vm465, %v740, 0.0
      %745 = vadd.xlane.f32.xlu0 %v744
      %v746 = vpop.xlane.xlu0 %745
      %v747 = vrcp.pop %v743
      %v748 = vrcp.pop %v746
      %v749 = vmul.f32 %v739, %v747
      %v750 = vmul.f32 %v740, %v748
      %v751 = vpack.c.bf16 %v750, %v749
      %v753 = vsel %vm465, %v751, 0
      %755 = vmatprep.subr.bf16.mxu0 0
      %756 = vmatpush1.bf16.msra.mxu0 0
      %757 = vmatprep.subr.bf16.mxu0 0
      %758 = vmatpush1.bf16.msra.mxu0 0
      %759 = vmatprep.subr.bf16.mxu0 0
      %760 = vmatpush1.bf16.msra.mxu0 0
      %761 = vmatprep.subr.bf16.mxu0 0
      %762 = vmatpush1.bf16.msra.mxu0 0
      %763 = vmatprep.subr.bf16.mxu0 0
      %764 = vmatpush1.bf16.msra.mxu0 0
      %765 = vmatprep.subr.bf16.mxu0 0
      %766 = vmatpush1.bf16.msra.mxu0 0
      %767 = vmatprep.subr.bf16.mxu0 0
      %768 = vmatpush1.bf16.msra.mxu0 0
      %769 = vmatprep.subr.bf16.mxu0 0
      %770 = vmatpush1.bf16.msra.mxu0 %v567
      %771 = vmatprep.subr.bf16.mxu0 0
      %772 = vmatpush2.bf16.msra.mxu0 0
      %773 = vmatprep.subr.bf16.mxu0 0
      %774 = vmatpush2.bf16.msra.mxu0 0
      %775 = vmatprep.subr.bf16.mxu0 0
      %776 = vmatpush2.bf16.msra.mxu0 0
      %777 = vmatprep.subr.bf16.mxu0 0
      %778 = vmatpush2.bf16.msra.mxu0 0
      %779 = vmatprep.subr.bf16.mxu0 0
      %780 = vmatpush2.bf16.msra.mxu0 0
      %781 = vmatprep.subr.bf16.mxu0 0
      %782 = vmatpush2.bf16.msra.mxu0 0
      %783 = vmatprep.subr.bf16.mxu0 0
      %784 = vmatpush2.bf16.msra.mxu0 0
      %785 = vmatprep.subr.bf16.mxu0 0
      %786 = vmatpush2.bf16.msra.mxu0 0
      %787 = vmatprep.mubr.bf16.mxu0 0
      %788 = vmatmul.mubr.bf16.gmra.mxu0 %v753
      %v789 = vpop.f32.mrf.mxu0
      %v790 = vadd.f32 0.0, %v789
      %v791 = vpop.f32.mrf.mxu0
      %v792 = vpop.f32.mrf.mxu0
      %v793 = vadd.f32 0.0, %v792
      %v794 = vpop.f32.mrf.mxu0
      %795 = vdwg.mxu0
      %798 = vrot.lane.b32.xlu0 %v668, 64
      %v799 = vpop.permute.xlu0 %798
      %800 = vrot.lane.b32.xlu0 %v671, 64
      %v801 = vpop.permute.xlu0 %800
      %806 = vrot.lane.b32.xlu0 %v790, 64
      %v807 = vpop.permute.xlu0 %806
      %808 = vrot.lane.b32.xlu0 %v793, 64
      %v809 = vpop.permute.xlu0 %808
      %vm812 = vcmask 523264
      %v813 = vsel %vm812, %v607, %v799
      %v814 = vsel %vm812, %v610, %v801
      %v815 = vsel %vm812, %v729, %v807
      %v816 = vsel %vm812, %v732, %v809
      %817 = vst [vmem:[%s313] sm:$0xff] %v813
      %818 = vst [vmem:[%s313 + $0x8] sm:$0xff] %v815
      %819 = vst [vmem:[%s313 + $0x10] sm:$0xff] %v814
      %820 = vst [vmem:[%s313 + $0x18] sm:$0xff] %v816
      %s821 = smul.u32 2, %s20
      %p822 = scmp.lt.s32.totalorder %s19, 1
      %s823 = scalar_select %p822, %s19, 1
      %p824 = scmp.lt.s32.totalorder %s821, 1
      %s825 = scalar_select %p824, %s821, 1
      %s826 = smul.addr %s825, 2
      %s827 = smul.addr %s823, 4
      %s828 = sadd.s32 %s826, %s827
      %s829 = smul.addr %s828, 8
      %s830 = scalar_lea.vmem %s4, %s829
      // Predicated region
      $region37: #{n3block_forward.5} parent=35 // pred_check
        %p831 = pneg %p155
      $region38: #{n3block_forward.5} parent=35 // pred_check_branch
        %833 = sbr.rel (%p831) target = $region40
      $region39: #{n3block_forward.5} parent=35 // pred_region
        %s834 = smul.u32 2, %s20
      $region40: #{n3block_forward.5} parent=35 // pred_fallthru
        _
    $region36: #{n3block_forward.5} parent=5 // pred_fallthru
      _
    %p835 = scmp.le.s32.totalorder 2, %s10
    // Predicated region
    $region41: #{n3block_forward.5} parent=5 // pred_check
      %p836 = pneg %p835
    $region42: #{n3block_forward.5} parent=5 // pred_check_branch
      %838 = sbr.rel (%p836) target = $region44
    $region43: #{n3block_forward.5} parent=5 // pred_region
      %s839 = ssub.s32 %s10, 2
      // Predicated region
      $region45: #{n3block_forward.5} parent=43 // pred_check
        %p840 = pneg %p161
      $region46: #{n3block_forward.5} parent=43 // pred_check_branch
        %842 = sbr.rel (%p840) target = $region48
      $region47: #{n3block_forward.5} parent=43 // pred_region
        %s843 = smul.u32 2, %s22
        %p844 = scmp.lt.s32.totalorder %s21, 1
        %s845 = scalar_select %p844, %s21, 1
        %p846 = scmp.lt.s32.totalorder %s843, 1
        %s847 = scalar_select %p846, %s843, 1
        %s848 = smul.addr %s847, 2
        %s849 = smul.addr %s845, 4
        %s850 = sadd.s32 %s848, %s849
        %s851 = smul.addr %s850, 8
        %s852 = scalar_lea.vmem %s4, %s851
      $region48: #{n3block_forward.5} parent=43 // pred_fallthru
        _
    $region44: #{n3block_forward.5} parent=5 // pred_fallthru
      _
  $region6: #{n3block_forward.5} parent=0 // loop_footer
    %s14 = sadd.s32 1, %s10
  $region7: #{n3block_forward.5} parent=0 // loop_footer_branch
    %9 = sbr.rel target = $region3
  $region8: #{n3block_forward.5} parent=0 // loop_exit
    _

</llo_original>
